<compile_context>
chip_gen: v7x
topology: tpu7x:2x2x1
jax: 0.10.0
libtpu: 0.0.40
codegen_flags: <defaults>
</compile_context>

<pallas_src>
import functools

import jax
import jax.numpy as jnp
from jax.experimental import pallas as pl
from jax.experimental.pallas import tpu as pltpu

HIDDEN_DIM = 128
N_LAYERS = 6          # => 1 input layer, 4 hidden layers, 1 output layer
N_HIDDEN = N_LAYERS - 2
OUT_DIM = 2
OUT_PAD = 128         # lane-dense padded output width


def _mlp_kernel(t_ref, w1_ref, b1_ref, wh_ref, bh_ref, wo_ref, bo_ref, out_ref):
    """Full MLP forward for one row-tile of `t`.

    t_ref : (TM, 1) f32         w1_ref : (1, H) f32      b1_ref : (1, H) f32
    wh_ref: (N_HIDDEN, H, H) bf16   bh_ref : (N_HIDDEN, 1, H) f32
    wo_ref: (H, OUT_PAD) bf16       bo_ref : (1, OUT_PAD) f32
    out_ref: (TM, OUT_PAD) f32
    """
    # t_scaled = t / 100.0
    t_scaled = t_ref[...] * jnp.float32(0.01)

    # First layer: Linear(1, H) + Tanh as a pure VPU broadcast (no K=1 MXU op).
    # (TM, 1) * (1, H) -> (TM, H)
    h = jnp.tanh(t_scaled * w1_ref[...] + b1_ref[...])

    # Hidden layers: (Linear(H, H) + Tanh) x N_HIDDEN, bf16 MXU / f32 accumulate.
    for i in range(N_HIDDEN):
        z = jnp.dot(h.astype(jnp.bfloat16), wh_ref[i],
                    preferred_element_type=jnp.float32) + bh_ref[i]
        h = jnp.tanh(z)

    # Output layer: Linear(H, OUT_PAD) (zero-padded columns), no activation.
    out_ref[...] = jnp.dot(h.astype(jnp.bfloat16), wo_ref[...],
                           preferred_element_type=jnp.float32) + bo_ref[...]


@functools.partial(jax.jit, static_argnames=("tile_m",))
def gwave_pinn_forward(t, params, *, tile_m=512):
    """Pallas implementation of GravitationalWavePINN.forward.

    t: (N, 1) float32 times.  Returns (h_plus (N,1), h_cross (N,1)).
    """
    w1, b1, wh, bh, wo, bo = (
        params["w1"], params["b1"], params["wh"], params["bh"],
        params["wo"], params["bo"],
    )
    N = t.shape[0]
    H = w1.shape[1]

    # Ragged N: zero-pad rows up to a multiple of the row tile.
    n_tiles = pl.cdiv(N, tile_m)
    n_pad = n_tiles * tile_m
    if n_pad != N:
        t = jnp.pad(t, ((0, n_pad - N), (0, 0)))

    # bf16 weights for the MXU (f32 accumulation inside the kernel).
    wh_bf = wh.astype(jnp.bfloat16)
    # Lane-dense output: pad wo/bo to OUT_PAD columns.
    wo_p = jnp.zeros((H, OUT_PAD), jnp.bfloat16).at[:, :OUT_DIM].set(
        wo.astype(jnp.bfloat16))
    bo_p = jnp.zeros((1, OUT_PAD), jnp.float32).at[:, :OUT_DIM].set(bo)

    grid = (n_tiles,)

    # Weights are small; give each grid step the full (untiled) weight blocks.
    full = lambda shape: pl.BlockSpec(shape, lambda i: tuple(0 for _ in shape))

    out = pl.pallas_call(
        _mlp_kernel,
        out_shape=jax.ShapeDtypeStruct((n_pad, OUT_PAD), jnp.float32),
        grid_spec=pltpu.PrefetchScalarGridSpec(
            num_scalar_prefetch=0,
            grid=grid,
            in_specs=[
                pl.BlockSpec((tile_m, 1), lambda i: (i, 0)),   # t
                full((1, H)),                                  # w1 (f32, VPU)
                full((1, H)),                                  # b1
                full((N_HIDDEN, H, H)),                        # wh (bf16)
                full((N_HIDDEN, 1, H)),                        # bh
                full((H, OUT_PAD)),                            # wo (bf16, padded)
                full((1, OUT_PAD)),                            # bo (padded)
            ],
            out_specs=pl.BlockSpec((tile_m, OUT_PAD), lambda i: (i, 0)),
        ),
        compiler_params=pltpu.CompilerParams(
            dimension_semantics=("parallel",),
        ),
    )(t, w1, b1, wh_bf, bh, wo_p, bo_p)

    out = out[:N]
    h_plus = out[:, 0:1]
    h_cross = out[:, 1:2]
    return h_plus, h_cross


def init_params(key, hidden_dim=HIDDEN_DIM):
    """Deterministic parameter init matching the module's layer shapes."""
    ks = jax.random.split(key, 2 + N_HIDDEN)
    k_iter = iter(ks)

    def linear(k, fan_in, fan_out):
        # PyTorch nn.Linear default: U(-1/sqrt(fan_in), 1/sqrt(fan_in))
        kw, kb = jax.random.split(k)
        bound = 1.0 / jnp.sqrt(jnp.float32(fan_in))
        w = jax.random.uniform(kw, (fan_in, fan_out), jnp.float32, -bound, bound)
        b = jax.random.uniform(kb, (1, fan_out), jnp.float32, -bound, bound)
        return w, b

    w1, b1 = linear(next(k_iter), 1, hidden_dim)
    whs, bhs = [], []
    for _ in range(N_HIDDEN):
        w, b = linear(next(k_iter), hidden_dim, hidden_dim)
        whs.append(w)
        bhs.append(b)
    wo, bo = linear(next(k_iter), hidden_dim, OUT_DIM)

    return {
        "w1": w1, "b1": b1,
        "wh": jnp.stack(whs, axis=0),                       # (N_HIDDEN, H, H)
        "bh": jnp.stack(bhs, axis=0),                       # (N_HIDDEN, 1, H)
        "wo": wo, "bo": bo,
        # Scalar physics parameters (unused in forward; used by physics_loss).
        "chirp_mass": jnp.float32(30.0),
        "eta": jnp.float32(0.25),
    }
    # TODO(synk): physics_loss requires autodiff w.r.t. t (2nd derivatives);
    # it is a training-time loss, not part of forward, and is not kernelized here.


def _reference_forward_f32(t, params):
    """Plain-JAX f32 reference (matches the PyTorch module exactly)."""
    x = t / 100.0
    h = jnp.tanh(x * params["w1"] + params["b1"])
    for i in range(N_HIDDEN):
        h = jnp.tanh(h @ params["wh"][i] + params["bh"][i])
    out = h @ params["wo"] + params["bo"]
    return out[:, 0:1], out[:, 1:2]


def _reference_forward_bf16(t, params):
    """Plain-JAX reference replicating the kernel's bf16-MXU / f32-accum math."""
    x = t / 100.0
    h = jnp.tanh(x * params["w1"] + params["b1"])
    wh_bf = params["wh"].astype(jnp.bfloat16)
    for i in range(N_HIDDEN):
        z = jnp.dot(h.astype(jnp.bfloat16), wh_bf[i],
                    preferred_element_type=jnp.float32) + params["bh"][i]
        h = jnp.tanh(z)
    out = jnp.dot(h.astype(jnp.bfloat16), params["wo"].astype(jnp.bfloat16),
                  preferred_element_type=jnp.float32) + params["bo"]
    return out[:, 0:1], out[:, 1:2]


if __name__ == "__main__":
    key = jax.random.PRNGKey(0)
    k_param, k_t = jax.random.split(key)

    params = init_params(k_param)

    # Deterministic time samples (positive, as in the inspiral regime).
    # N is deliberately not a multiple of the row tile to exercise padding;
    # with tile_m=512 this yields a 2-step "parallel" grid.
    N = 1000
    t = jax.random.uniform(k_t, (N, 1), jnp.float32, minval=1.0, maxval=200.0)

    h_plus, h_cross = gwave_pinn_forward(t, params)
    jax.block_until_ready((h_plus, h_cross))

    assert h_plus.shape == (N, 1) and h_cross.shape == (N, 1)

    # Strict check vs a matching-precision (bf16 matmul / f32 accumulate) reference.
    ref_plus_b, ref_cross_b = _reference_forward_bf16(t, params)
    assert jnp.allclose(h_plus, ref_plus_b, atol=1e-3, rtol=1e-2)
    assert jnp.allclose(h_cross, ref_cross_b, atol=1e-3, rtol=1e-2)

    # Looser check vs the exact f32 PyTorch-equivalent reference (bf16 weights).
    ref_plus_f, ref_cross_f = _reference_forward_f32(t, params)
    assert jnp.allclose(h_plus, ref_plus_f, atol=3e-2, rtol=3e-2)
    assert jnp.allclose(h_cross, ref_cross_f, atol=3e-2, rtol=3e-2)

    print("KERNEL_OK")
</pallas_src>

<mosaic_0001>
module attributes {stable_mosaic.version = 11 : i64} {
  func.func @_mlp_kernel(%arg0: i32, %arg1: memref<512x1xf32, #tpu.memory_space<vmem>>, %arg2: memref<1x128xf32, #tpu.memory_space<vmem>>, %arg3: memref<1x128xf32, #tpu.memory_space<vmem>>, %arg4: memref<4x128x128xbf16, #tpu.memory_space<vmem>>, %arg5: memref<4x1x128xf32, #tpu.memory_space<vmem>>, %arg6: memref<128x128xbf16, #tpu.memory_space<vmem>>, %arg7: memref<1x128xf32, #tpu.memory_space<vmem>>, %arg8: memref<512x128xf32, #tpu.memory_space<vmem>>) attributes {dimension_semantics = [#tpu.dimension_semantics<parallel>], iteration_bounds = array<i64: 2>, scalar_prefetch = 0 : i64, scratch_operands = 0 : i64, tpu.core_type = #tpu.core_type<tc>, window_params = [{transform_indices = @transform_0, window_bounds = array<i64: 512, 1>}, {pipeline_mode = #tpu.pipeline_mode<synchronous>, transform_indices = @transform_1, window_bounds = array<i64: 1, 128>}, {pipeline_mode = #tpu.pipeline_mode<synchronous>, transform_indices = @transform_2, window_bounds = array<i64: 1, 128>}, {pipeline_mode = #tpu.pipeline_mode<synchronous>, transform_indices = @transform_3, window_bounds = array<i64: 4, 128, 128>}, {pipeline_mode = #tpu.pipeline_mode<synchronous>, transform_indices = @transform_4, window_bounds = array<i64: 4, 1, 128>}, {pipeline_mode = #tpu.pipeline_mode<synchronous>, transform_indices = @transform_5, window_bounds = array<i64: 128, 128>}, {pipeline_mode = #tpu.pipeline_mode<synchronous>, transform_indices = @transform_6, window_bounds = array<i64: 1, 128>}, {transform_indices = @transform_7, window_bounds = array<i64: 512, 128>}]} {
    %c0 = arith.constant 0 : index
    %c0_0 = arith.constant 0 : index
    %0 = vector.load %arg1[%c0, %c0_0] : memref<512x1xf32, #tpu.memory_space<vmem>>, vector<512x1xf32>
    %cst = arith.constant 0.00999999977 : f32
    %1 = vector.broadcast %cst : f32 to vector<512x1xf32>
    %2 = arith.mulf %0, %1 : vector<512x1xf32>
    %c0_1 = arith.constant 0 : index
    %c0_2 = arith.constant 0 : index
    %3 = vector.load %arg2[%c0_1, %c0_2] : memref<1x128xf32, #tpu.memory_space<vmem>>, vector<1x128xf32>
    %4 = vector.broadcast %2 : vector<512x1xf32> to vector<512x128xf32>
    %5 = vector.broadcast %3 : vector<1x128xf32> to vector<512x128xf32>
    %6 = arith.mulf %4, %5 : vector<512x128xf32>
    %c0_3 = arith.constant 0 : index
    %c0_4 = arith.constant 0 : index
    %7 = vector.load %arg3[%c0_3, %c0_4] : memref<1x128xf32, #tpu.memory_space<vmem>>, vector<1x128xf32>
    %8 = vector.broadcast %7 : vector<1x128xf32> to vector<512x128xf32>
    %9 = arith.addf %6, %8 : vector<512x128xf32>
    %10 = math.tanh %9 : vector<512x128xf32>
    %11 = arith.truncf %10 : vector<512x128xf32> to vector<512x128xbf16>
    %c0_5 = arith.constant 0 : index
    %c0_6 = arith.constant 0 : index
    %c0_7 = arith.constant 0 : index
    %12 = vector.load %arg4[%c0_5, %c0_6, %c0_7] : memref<4x128x128xbf16, #tpu.memory_space<vmem>>, vector<1x128x128xbf16>
    %13 = vector.shape_cast %12 : vector<1x128x128xbf16> to vector<128x128xbf16>
    %cst_8 = arith.constant dense<0.000000e+00> : vector<512x128xf32>
    %14 = tpu.matmul %11, %13, %cst_8 {dimension_numbers = #tpu.dot_dimension_numbers<[1], [0], [0], [1], [0, 0, 1, 1], [], []>} : vector<512x128xbf16>, vector<128x128xbf16>, vector<512x128xf32> -> vector<512x128xf32>
    %c0_9 = arith.constant 0 : index
    %c0_10 = arith.constant 0 : index
    %c0_11 = arith.constant 0 : index
    %15 = vector.load %arg5[%c0_9, %c0_10, %c0_11] : memref<4x1x128xf32, #tpu.memory_space<vmem>>, vector<1x1x128xf32>
    %16 = vector.shape_cast %15 : vector<1x1x128xf32> to vector<1x128xf32>
    %17 = vector.broadcast %16 : vector<1x128xf32> to vector<512x128xf32>
    %18 = arith.addf %14, %17 : vector<512x128xf32>
    %19 = math.tanh %18 : vector<512x128xf32>
    %20 = arith.truncf %19 : vector<512x128xf32> to vector<512x128xbf16>
    %c1 = arith.constant 1 : index
    %c0_12 = arith.constant 0 : index
    %c0_13 = arith.constant 0 : index
    %21 = vector.load %arg4[%c1, %c0_12, %c0_13] : memref<4x128x128xbf16, #tpu.memory_space<vmem>>, vector<1x128x128xbf16>
    %22 = vector.shape_cast %21 : vector<1x128x128xbf16> to vector<128x128xbf16>
    %cst_14 = arith.constant dense<0.000000e+00> : vector<512x128xf32>
    %23 = tpu.matmul %20, %22, %cst_14 {dimension_numbers = #tpu.dot_dimension_numbers<[1], [0], [0], [1], [0, 0, 1, 1], [], []>} : vector<512x128xbf16>, vector<128x128xbf16>, vector<512x128xf32> -> vector<512x128xf32>
    %c1_15 = arith.constant 1 : index
    %c0_16 = arith.constant 0 : index
    %c0_17 = arith.constant 0 : index
    %24 = vector.load %arg5[%c1_15, %c0_16, %c0_17] : memref<4x1x128xf32, #tpu.memory_space<vmem>>, vector<1x1x128xf32>
    %25 = vector.shape_cast %24 : vector<1x1x128xf32> to vector<1x128xf32>
    %26 = vector.broadcast %25 : vector<1x128xf32> to vector<512x128xf32>
    %27 = arith.addf %23, %26 : vector<512x128xf32>
    %28 = math.tanh %27 : vector<512x128xf32>
    %29 = arith.truncf %28 : vector<512x128xf32> to vector<512x128xbf16>
    %c2 = arith.constant 2 : index
    %c0_18 = arith.constant 0 : index
    %c0_19 = arith.constant 0 : index
    %30 = vector.load %arg4[%c2, %c0_18, %c0_19] : memref<4x128x128xbf16, #tpu.memory_space<vmem>>, vector<1x128x128xbf16>
    %31 = vector.shape_cast %30 : vector<1x128x128xbf16> to vector<128x128xbf16>
    %cst_20 = arith.constant dense<0.000000e+00> : vector<512x128xf32>
    %32 = tpu.matmul %29, %31, %cst_20 {dimension_numbers = #tpu.dot_dimension_numbers<[1], [0], [0], [1], [0, 0, 1, 1], [], []>} : vector<512x128xbf16>, vector<128x128xbf16>, vector<512x128xf32> -> vector<512x128xf32>
    %c2_21 = arith.constant 2 : index
    %c0_22 = arith.constant 0 : index
    %c0_23 = arith.constant 0 : index
    %33 = vector.load %arg5[%c2_21, %c0_22, %c0_23] : memref<4x1x128xf32, #tpu.memory_space<vmem>>, vector<1x1x128xf32>
    %34 = vector.shape_cast %33 : vector<1x1x128xf32> to vector<1x128xf32>
    %35 = vector.broadcast %34 : vector<1x128xf32> to vector<512x128xf32>
    %36 = arith.addf %32, %35 : vector<512x128xf32>
    %37 = math.tanh %36 : vector<512x128xf32>
    %38 = arith.truncf %37 : vector<512x128xf32> to vector<512x128xbf16>
    %c3 = arith.constant 3 : index
    %c0_24 = arith.constant 0 : index
    %c0_25 = arith.constant 0 : index
    %39 = vector.load %arg4[%c3, %c0_24, %c0_25] : memref<4x128x128xbf16, #tpu.memory_space<vmem>>, vector<1x128x128xbf16>
    %40 = vector.shape_cast %39 : vector<1x128x128xbf16> to vector<128x128xbf16>
    %cst_26 = arith.constant dense<0.000000e+00> : vector<512x128xf32>
    %41 = tpu.matmul %38, %40, %cst_26 {dimension_numbers = #tpu.dot_dimension_numbers<[1], [0], [0], [1], [0, 0, 1, 1], [], []>} : vector<512x128xbf16>, vector<128x128xbf16>, vector<512x128xf32> -> vector<512x128xf32>
    %c3_27 = arith.constant 3 : index
    %c0_28 = arith.constant 0 : index
    %c0_29 = arith.constant 0 : index
    %42 = vector.load %arg5[%c3_27, %c0_28, %c0_29] : memref<4x1x128xf32, #tpu.memory_space<vmem>>, vector<1x1x128xf32>
    %43 = vector.shape_cast %42 : vector<1x1x128xf32> to vector<1x128xf32>
    %44 = vector.broadcast %43 : vector<1x128xf32> to vector<512x128xf32>
    %45 = arith.addf %41, %44 : vector<512x128xf32>
    %46 = math.tanh %45 : vector<512x128xf32>
    %47 = arith.truncf %46 : vector<512x128xf32> to vector<512x128xbf16>
    %c0_30 = arith.constant 0 : index
    %c0_31 = arith.constant 0 : index
    %48 = vector.load %arg6[%c0_30, %c0_31] : memref<128x128xbf16, #tpu.memory_space<vmem>>, vector<128x128xbf16>
    %cst_32 = arith.constant dense<0.000000e+00> : vector<512x128xf32>
    %49 = tpu.matmul %47, %48, %cst_32 {dimension_numbers = #tpu.dot_dimension_numbers<[1], [0], [0], [1], [0, 0, 1, 1], [], []>} : vector<512x128xbf16>, vector<128x128xbf16>, vector<512x128xf32> -> vector<512x128xf32>
    %c0_33 = arith.constant 0 : index
    %c0_34 = arith.constant 0 : index
    %50 = vector.load %arg7[%c0_33, %c0_34] : memref<1x128xf32, #tpu.memory_space<vmem>>, vector<1x128xf32>
    %51 = vector.broadcast %50 : vector<1x128xf32> to vector<512x128xf32>
    %52 = arith.addf %49, %51 : vector<512x128xf32>
    %c0_35 = arith.constant 0 : index
    %c0_36 = arith.constant 0 : index
    %53 = vector.load %arg8[%c0_35, %c0_36] : memref<512x128xf32, #tpu.memory_space<vmem>>, vector<512x128xf32>
    tpu.vector_store %arg8[%c0_35, %c0_36], %52 {strides = array<i32>} : memref<512x128xf32, #tpu.memory_space<vmem>>, vector<512x128xf32>,
    return
  }
  func.func @transform_0(%arg0: i32) -> (i32, i32) {
    %c0_i32 = arith.constant 0 : i32
    %c0_i32_0 = arith.constant 0 : i32
    return %arg0, %c0_i32 : i32, i32
  }
  func.func @transform_1(%arg0: i32) -> (i32, i32) {
    %c0_i32 = arith.constant 0 : i32
    %c0_i32_0 = arith.constant 0 : i32
    %c0_i32_1 = arith.constant 0 : i32
    return %c0_i32, %c0_i32_0 : i32, i32
  }
  func.func @transform_2(%arg0: i32) -> (i32, i32) {
    %c0_i32 = arith.constant 0 : i32
    %c0_i32_0 = arith.constant 0 : i32
    %c0_i32_1 = arith.constant 0 : i32
    return %c0_i32, %c0_i32_0 : i32, i32
  }
  func.func @transform_3(%arg0: i32) -> (i32, i32, i32) {
    %c0_i32 = arith.constant 0 : i32
    %c0_i32_0 = arith.constant 0 : i32
    %c0_i32_1 = arith.constant 0 : i32
    %c0_i32_2 = arith.constant 0 : i32
    return %c0_i32, %c0_i32_0, %c0_i32_1 : i32, i32, i32
  }
  func.func @transform_4(%arg0: i32) -> (i32, i32, i32) {
    %c0_i32 = arith.constant 0 : i32
    %c0_i32_0 = arith.constant 0 : i32
    %c0_i32_1 = arith.constant 0 : i32
    %c0_i32_2 = arith.constant 0 : i32
    return %c0_i32, %c0_i32_0, %c0_i32_1 : i32, i32, i32
  }
  func.func @transform_5(%arg0: i32) -> (i32, i32) {
    %c0_i32 = arith.constant 0 : i32
    %c0_i32_0 = arith.constant 0 : i32
    %c0_i32_1 = arith.constant 0 : i32
    return %c0_i32, %c0_i32_0 : i32, i32
  }
  func.func @transform_6(%arg0: i32) -> (i32, i32) {
    %c0_i32 = arith.constant 0 : i32
    %c0_i32_0 = arith.constant 0 : i32
    %c0_i32_1 = arith.constant 0 : i32
    return %c0_i32, %c0_i32_0 : i32, i32
  }
  func.func @transform_7(%arg0: i32) -> (i32, i32) {
    %c0_i32 = arith.constant 0 : i32
    %c0_i32_0 = arith.constant 0 : i32
    return %arg0, %c0_i32 : i32, i32
  }
}

</mosaic_0001>

<llo_original>
// kernel: gwave_pinn_forward.1
$region0: #{gwave_pinn_forward.1}
  #allocation0 [shape = 'u32[]', space=smem, size = 0x4, offset = 0x4, fixed_abs, tag = 'smem constant byte address 0x4 - core index']
  #allocation1 [shape = 'u32[144,128]{1,0:T(1,128)}', space=vmem, size = 0x12000, scoped, tag = 'internal scratch']
  %s0 = inlined_call_operand.vmem [shape: f32[1024,1], index: 0, kind: input, shape index: {}]
  %s1 = inlined_call_operand.vmem [shape: f32[1,128], index: 1, kind: input, shape index: {}]
  %s2 = inlined_call_operand.vmem [shape: f32[1,128], index: 2, kind: input, shape index: {}]
  %s3 = inlined_call_operand.vmem [shape: bf16[4,128,128], index: 3, kind: input, shape index: {}]
  %s4 = inlined_call_operand.vmem [shape: f32[4,1,128], index: 4, kind: input, shape index: {}]
  %s5 = inlined_call_operand.vmem [shape: bf16[128,128], index: 5, kind: input, shape index: {}]
  %s6 = inlined_call_operand.vmem [shape: f32[1,128], index: 6, kind: input, shape index: {}]
  %s7 = inlined_call_operand.vmem [shape: f32[1024,128], index: 7, kind: output, shape index: {}]
  %s8 = sld [smem:[#allocation0]]
  $region61: #{gwave_pinn_forward.1} parent=0
    _
  %s10 = ssub.s32 1, %s8
  %s11 = scalar_select 0, %s10, %s8
  loop: start=0, step=1, limit=4
  $region2: #{gwave_pinn_forward.1} parent=0 // loop_pre_header
    _
  $region3: #{gwave_pinn_forward.1} parent=0 // loop_header
    %s13 = sphi 0, %s17
    %p14 = scmp.ge.s32.totalorder %s13, 4
    %s23 = sphi 0, %s25
    %s26 = sphi 0, %s23
    %s27 = sphi 0, %s26
    %s43 = sphi 0, %s27
    %s47 = sphi 0, %s47
    %s49 = sphi 0, %s47
    %s50 = sphi 0, %s49
    %s64 = sphi 0, %s50
    %s68 = sphi 0, %s68
    %s70 = sphi 0, %s68
    %s71 = sphi 0, %s70
    %s85 = sphi 0, %s71
    %s89 = sphi 0, %s89
    %s91 = sphi 0, %s89
    %s92 = sphi 0, %s91
    %s106 = sphi 0, %s92
    %s110 = sphi 0, %s110
    %s112 = sphi 0, %s110
    %s113 = sphi 0, %s112
    %s127 = sphi 0, %s113
    %s131 = sphi 0, %s131
    %s133 = sphi 0, %s131
    %s134 = sphi 0, %s133
    %s148 = sphi 0, %s134
    %s152 = sphi 0, %s152
    %s154 = sphi 0, %s152
    %s155 = sphi 0, %s154
    %s169 = sphi 0, %s155
    %s175 = sphi 0, %s177
    %s178 = sphi 0, %s175
    %s179 = sphi 0, %s178
    %s195 = sphi 0, %s179
  $region4: #{gwave_pinn_forward.1} parent=0 // loop_header_branch
    %16 = sbr.rel (%p14) target = $region8
  $region5: #{gwave_pinn_forward.1} parent=0 // loop_body
    %s18 = ssub.s32 %s13, 1
    %s19 = ssub.s32 %s13, 2
    %s20 = sadd.s32 %s13, 1
    %s21 = ssub.s32 %s13, %s20
    %p22 = scmp.eq.s32.totalorder %s21, 0
    %s24 = sadd.s32 %s23, 1
    %s25 = scalar_select %p22, %s23, %s24
    %p28 = pneg %p22
    %p29 = scmp.eq.s32.totalorder %s13, 1
    %p30 = por %p28, %p29
    %p31 = scmp.ne.s32.totalorder %s23, %s26
    %p32 = scmp.eq.s32.totalorder %s13, 0
    %p33 = por %p31, %p32
    %p34 = scmp.ne.s32.totalorder %s23, %s26
    %p35 = scmp.eq.s32.totalorder %s18, 1
    %p36 = por %p34, %p35
    %p37 = scmp.ne.s32.totalorder %s26, %s27
    %p38 = scmp.eq.s32.totalorder %s18, 0
    %p39 = por %p37, %p38
    %p40 = scmp.ne.s32.totalorder %s26, %s27
    %p41 = scmp.eq.s32.totalorder %s19, 1
    %p42 = por %p40, %p41
    %p44 = scmp.ne.s32.totalorder %s27, %s43
    %p45 = scmp.eq.s32.totalorder %s19, 0
    %p46 = por %p44, %p45
    %s48 = sadd.s32 %s47, 1
    %p51 = scmp.eq.s32.totalorder %s13, 1
    %p52 = scmp.ne.s32.totalorder %s47, %s49
    %p53 = scmp.eq.s32.totalorder %s13, 0
    %p54 = por %p52, %p53
    %p55 = scmp.ne.s32.totalorder %s47, %s49
    %p56 = scmp.eq.s32.totalorder %s18, 1
    %p57 = por %p55, %p56
    %p58 = scmp.ne.s32.totalorder %s49, %s50
    %p59 = scmp.eq.s32.totalorder %s18, 0
    %p60 = por %p58, %p59
    %p61 = scmp.ne.s32.totalorder %s49, %s50
    %p62 = scmp.eq.s32.totalorder %s19, 1
    %p63 = por %p61, %p62
    %p65 = scmp.ne.s32.totalorder %s50, %s64
    %p66 = scmp.eq.s32.totalorder %s19, 0
    %p67 = por %p65, %p66
    %s69 = sadd.s32 %s68, 1
    %p72 = scmp.eq.s32.totalorder %s13, 1
    %p73 = scmp.ne.s32.totalorder %s68, %s70
    %p74 = scmp.eq.s32.totalorder %s13, 0
    %p75 = por %p73, %p74
    %p76 = scmp.ne.s32.totalorder %s68, %s70
    %p77 = scmp.eq.s32.totalorder %s18, 1
    %p78 = por %p76, %p77
    %p79 = scmp.ne.s32.totalorder %s70, %s71
    %p80 = scmp.eq.s32.totalorder %s18, 0
    %p81 = por %p79, %p80
    %p82 = scmp.ne.s32.totalorder %s70, %s71
    %p83 = scmp.eq.s32.totalorder %s19, 1
    %p84 = por %p82, %p83
    %p86 = scmp.ne.s32.totalorder %s71, %s85
    %p87 = scmp.eq.s32.totalorder %s19, 0
    %p88 = por %p86, %p87
    %s90 = sadd.s32 %s89, 1
    %p93 = scmp.eq.s32.totalorder %s13, 1
    %p94 = scmp.ne.s32.totalorder %s89, %s91
    %p95 = scmp.eq.s32.totalorder %s13, 0
    %p96 = por %p94, %p95
    %p97 = scmp.ne.s32.totalorder %s89, %s91
    %p98 = scmp.eq.s32.totalorder %s18, 1
    %p99 = por %p97, %p98
    %p100 = scmp.ne.s32.totalorder %s91, %s92
    %p101 = scmp.eq.s32.totalorder %s18, 0
    %p102 = por %p100, %p101
    %p103 = scmp.ne.s32.totalorder %s91, %s92
    %p104 = scmp.eq.s32.totalorder %s19, 1
    %p105 = por %p103, %p104
    %p107 = scmp.ne.s32.totalorder %s92, %s106
    %p108 = scmp.eq.s32.totalorder %s19, 0
    %p109 = por %p107, %p108
    %s111 = sadd.s32 %s110, 1
    %p114 = scmp.eq.s32.totalorder %s13, 1
    %p115 = scmp.ne.s32.totalorder %s110, %s112
    %p116 = scmp.eq.s32.totalorder %s13, 0
    %p117 = por %p115, %p116
    %p118 = scmp.ne.s32.totalorder %s110, %s112
    %p119 = scmp.eq.s32.totalorder %s18, 1
    %p120 = por %p118, %p119
    %p121 = scmp.ne.s32.totalorder %s112, %s113
    %p122 = scmp.eq.s32.totalorder %s18, 0
    %p123 = por %p121, %p122
    %p124 = scmp.ne.s32.totalorder %s112, %s113
    %p125 = scmp.eq.s32.totalorder %s19, 1
    %p126 = por %p124, %p125
    %p128 = scmp.ne.s32.totalorder %s113, %s127
    %p129 = scmp.eq.s32.totalorder %s19, 0
    %p130 = por %p128, %p129
    %s132 = sadd.s32 %s131, 1
    %p135 = scmp.eq.s32.totalorder %s13, 1
    %p136 = scmp.ne.s32.totalorder %s131, %s133
    %p137 = scmp.eq.s32.totalorder %s13, 0
    %p138 = por %p136, %p137
    %p139 = scmp.ne.s32.totalorder %s131, %s133
    %p140 = scmp.eq.s32.totalorder %s18, 1
    %p141 = por %p139, %p140
    %p142 = scmp.ne.s32.totalorder %s133, %s134
    %p143 = scmp.eq.s32.totalorder %s18, 0
    %p144 = por %p142, %p143
    %p145 = scmp.ne.s32.totalorder %s133, %s134
    %p146 = scmp.eq.s32.totalorder %s19, 1
    %p147 = por %p145, %p146
    %p149 = scmp.ne.s32.totalorder %s134, %s148
    %p150 = scmp.eq.s32.totalorder %s19, 0
    %p151 = por %p149, %p150
    %s153 = sadd.s32 %s152, 1
    %p156 = scmp.eq.s32.totalorder %s13, 1
    %p157 = scmp.ne.s32.totalorder %s152, %s154
    %p158 = scmp.eq.s32.totalorder %s13, 0
    %p159 = por %p157, %p158
    %p160 = scmp.ne.s32.totalorder %s152, %s154
    %p161 = scmp.eq.s32.totalorder %s18, 1
    %p162 = por %p160, %p161
    %p163 = scmp.ne.s32.totalorder %s154, %s155
    %p164 = scmp.eq.s32.totalorder %s18, 0
    %p165 = por %p163, %p164
    %p166 = scmp.ne.s32.totalorder %s154, %s155
    %p167 = scmp.eq.s32.totalorder %s19, 1
    %p168 = por %p166, %p167
    %p170 = scmp.ne.s32.totalorder %s155, %s169
    %p171 = scmp.eq.s32.totalorder %s19, 0
    %p172 = por %p170, %p171
    %s173 = ssub.s32 %s13, %s20
    %p174 = scmp.eq.s32.totalorder %s173, 0
    %s176 = sadd.s32 %s175, 1
    %s177 = scalar_select %p174, %s175, %s176
    %p180 = pneg %p174
    %p181 = scmp.eq.s32.totalorder %s13, 1
    %p182 = por %p180, %p181
    %p183 = scmp.ne.s32.totalorder %s175, %s178
    %p184 = scmp.eq.s32.totalorder %s13, 0
    %p185 = por %p183, %p184
    %p186 = scmp.ne.s32.totalorder %s175, %s178
    %p187 = scmp.eq.s32.totalorder %s18, 1
    %p188 = por %p186, %p187
    %p189 = scmp.ne.s32.totalorder %s178, %s179
    %p190 = scmp.eq.s32.totalorder %s18, 0
    %p191 = por %p189, %p190
    %p192 = scmp.ne.s32.totalorder %s178, %s179
    %p193 = scmp.eq.s32.totalorder %s19, 1
    %p194 = por %p192, %p193
    %p196 = scmp.ne.s32.totalorder %s179, %s195
    %p197 = scmp.eq.s32.totalorder %s19, 0
    %p198 = por %p196, %p197
    %p199 = scmp.le.s32.totalorder 1, %s13
    %p200 = scmp.lt.s32.totalorder %s13, 3
    %p201 = pnand %p199, %p200
    %p202 = pneg %p201
    // Predicated region
    $region9: #{gwave_pinn_forward.1} parent=5 // pred_check
      _
    $region10: #{gwave_pinn_forward.1} parent=5 // pred_check_branch
      %204 = sbr.rel (%p201) target = $region12
    $region11: #{gwave_pinn_forward.1} parent=5 // pred_region
      %s205 = ssub.s32 %s13, 1
      // Predicated region
      $region13: #{gwave_pinn_forward.1} parent=11 // pred_check
        %p206 = pneg %p60
      $region14: #{gwave_pinn_forward.1} parent=11 // pred_check_branch
        %208 = sbr.rel (%p206) target = $region16
      $region15: #{gwave_pinn_forward.1} parent=11 // pred_region
        _
      $region16: #{gwave_pinn_forward.1} parent=11 // pred_fallthru
        _
      // Predicated region
      $region17: #{gwave_pinn_forward.1} parent=11 // pred_check
        %p209 = pneg %p81
      $region18: #{gwave_pinn_forward.1} parent=11 // pred_check_branch
        %211 = sbr.rel (%p209) target = $region20
      $region19: #{gwave_pinn_forward.1} parent=11 // pred_region
        _
      $region20: #{gwave_pinn_forward.1} parent=11 // pred_fallthru
        _
      // Predicated region
      $region21: #{gwave_pinn_forward.1} parent=11 // pred_check
        %p212 = pneg %p102
      $region22: #{gwave_pinn_forward.1} parent=11 // pred_check_branch
        %214 = sbr.rel (%p212) target = $region24
      $region23: #{gwave_pinn_forward.1} parent=11 // pred_region
        _
      $region24: #{gwave_pinn_forward.1} parent=11 // pred_fallthru
        _
      // Predicated region
      $region25: #{gwave_pinn_forward.1} parent=11 // pred_check
        %p215 = pneg %p123
      $region26: #{gwave_pinn_forward.1} parent=11 // pred_check_branch
        %217 = sbr.rel (%p215) target = $region28
      $region27: #{gwave_pinn_forward.1} parent=11 // pred_region
        _
      $region28: #{gwave_pinn_forward.1} parent=11 // pred_fallthru
        _
      // Predicated region
      $region29: #{gwave_pinn_forward.1} parent=11 // pred_check
        %p218 = pneg %p144
      $region30: #{gwave_pinn_forward.1} parent=11 // pred_check_branch
        %220 = sbr.rel (%p218) target = $region32
      $region31: #{gwave_pinn_forward.1} parent=11 // pred_region
        _
      $region32: #{gwave_pinn_forward.1} parent=11 // pred_fallthru
        _
      // Predicated region
      $region33: #{gwave_pinn_forward.1} parent=11 // pred_check
        %p221 = pneg %p165
      $region34: #{gwave_pinn_forward.1} parent=11 // pred_check_branch
        %223 = sbr.rel (%p221) target = $region36
      $region35: #{gwave_pinn_forward.1} parent=11 // pred_region
        _
      $region36: #{gwave_pinn_forward.1} parent=11 // pred_fallthru
        _
    $region12: #{gwave_pinn_forward.1} parent=5 // pred_fallthru
      _
    %p224 = scmp.lt.s32.totalorder %s13, 2
    // Predicated region
    $region37: #{gwave_pinn_forward.1} parent=5 // pred_check
      %p225 = pneg %p224
    $region38: #{gwave_pinn_forward.1} parent=5 // pred_check_branch
      %227 = sbr.rel (%p225) target = $region40
    $region39: #{gwave_pinn_forward.1} parent=5 // pred_region
      // Predicated region
      $region41: #{gwave_pinn_forward.1} parent=39 // pred_check
        %p228 = pneg %p33
      $region42: #{gwave_pinn_forward.1} parent=39 // pred_check_branch
        %230 = sbr.rel (%p228) target = $region44
      $region43: #{gwave_pinn_forward.1} parent=39 // pred_region
        %s231 = smul.u32 64, %s13
        %p232 = scmp.lt.s32.totalorder %s231, 127
        %s233 = scalar_select %p232, %s231, 127
        %s234 = smul.addr %s233, 8
        %s235 = scalar_lea.vmem %s0, %s234
        %s236 = smul.u32 64, %s13
      $region44: #{gwave_pinn_forward.1} parent=39 // pred_fallthru
        _
    $region40: #{gwave_pinn_forward.1} parent=5 // pred_fallthru
      _
    %p237 = scmp.le.s32.totalorder 1, %s13
    %p238 = scmp.lt.s32.totalorder %s13, 3
    %p239 = pnand %p237, %p238
    %p240 = pneg %p239
    // Predicated region
    $region45: #{gwave_pinn_forward.1} parent=5 // pred_check
      _
    $region46: #{gwave_pinn_forward.1} parent=5 // pred_check_branch
      %242 = sbr.rel (%p239) target = $region48
    $region47: #{gwave_pinn_forward.1} parent=5 // pred_region
      %s243 = ssub.s32 %s13, 1
      %s244 = smul.u32 64, %s18
      %p245 = scmp.lt.s32.totalorder %s244, 127
      %s246 = scalar_select %p245, %s244, 127
      %s247 = smul.addr %s246, 8
      %s248 = scalar_lea.vmem %s0, %s247
      %p249 = pneg %p39
      %p250 = pneg %p36
      %p251 = pneg %p60
      %p252 = pneg %p57
      %p253 = pneg %p81
      %p254 = pneg %p78
      %p255 = pneg %p102
      %p256 = pneg %p99
      %p257 = pneg %p123
      %p258 = pneg %p120
      %p259 = pneg %p144
      %p260 = pneg %p141
      %p261 = pneg %p165
      %p262 = pneg %p162
      %p263 = pneg %p191
      %p264 = pneg %p188
      %s265 = smul.u32 64, %s18
      %p266 = scmp.lt.s32.totalorder %s265, 127
      %s267 = scalar_select %p266, %s265, 127
      %s268 = smul.addr %s267, 8
      %s269 = scalar_lea.vmem %s7, %s268
      %s270 = smul.u32 64, %s18
      %p271 = scmp.lt.s32.totalorder %s270, 127
      %s272 = scalar_select %p271, %s270, 127
      %s273 = smul.addr %s272, 8
      %s274 = scalar_lea.vmem %s0, %s273
      %s275 = smul.u32 64, %s18
      %s276 = smul.u32 64, %s18
      %p277 = scmp.lt.s32.totalorder %s276, 127
      %s278 = scalar_select %p277, %s276, 127
      %s279 = smul.addr %s278, 8
      %s280 = scalar_lea.vmem %s7, %s279
      %s281 = smul.u32 64, %s18
      %v283 = vld [vmem:[%s274] sm:$0xff]
      %v284 = vld [vmem:[%s274 + $0x8] sm:$0xff]
      %v285 = vld [vmem:[%s274 + $0x10] sm:$0xff]
      %v286 = vld [vmem:[%s274 + $0x18] sm:$0xff]
      %v287 = vld [vmem:[%s274 + $0x20] sm:$0xff]
      %v288 = vld [vmem:[%s274 + $0x28] sm:$0xff]
      %v289 = vld [vmem:[%s274 + $0x30] sm:$0xff]
      %v290 = vld [vmem:[%s274 + $0x38] sm:$0xff]
      %v291 = vld [vmem:[%s274 + $0x40] sm:$0xff]
      %v292 = vld [vmem:[%s274 + $0x48] sm:$0xff]
      %v293 = vld [vmem:[%s274 + $0x50] sm:$0xff]
      %v294 = vld [vmem:[%s274 + $0x58] sm:$0xff]
      %v295 = vld [vmem:[%s274 + $0x60] sm:$0xff]
      %v296 = vld [vmem:[%s274 + $0x68] sm:$0xff]
      %v297 = vld [vmem:[%s274 + $0x70] sm:$0xff]
      %v298 = vld [vmem:[%s274 + $0x78] sm:$0xff]
      %v299 = vld [vmem:[%s274 + $0x80] sm:$0xff]
      %v300 = vld [vmem:[%s274 + $0x88] sm:$0xff]
      %v301 = vld [vmem:[%s274 + $0x90] sm:$0xff]
      %v302 = vld [vmem:[%s274 + $0x98] sm:$0xff]
      %v303 = vld [vmem:[%s274 + $0xa0] sm:$0xff]
      %v304 = vld [vmem:[%s274 + $0xa8] sm:$0xff]
      %v305 = vld [vmem:[%s274 + $0xb0] sm:$0xff]
      %v306 = vld [vmem:[%s274 + $0xb8] sm:$0xff]
      %v307 = vld [vmem:[%s274 + $0xc0] sm:$0xff]
      %v308 = vld [vmem:[%s274 + $0xc8] sm:$0xff]
      %v309 = vld [vmem:[%s274 + $0xd0] sm:$0xff]
      %v310 = vld [vmem:[%s274 + $0xd8] sm:$0xff]
      %v311 = vld [vmem:[%s274 + $0xe0] sm:$0xff]
      %v312 = vld [vmem:[%s274 + $0xe8] sm:$0xff]
      %v313 = vld [vmem:[%s274 + $0xf0] sm:$0xff]
      %v314 = vld [vmem:[%s274 + $0xf8] sm:$0xff]
      %v315 = vld [vmem:[%s274 + $0x100] sm:$0xff]
      %v316 = vld [vmem:[%s274 + $0x108] sm:$0xff]
      %v317 = vld [vmem:[%s274 + $0x110] sm:$0xff]
      %v318 = vld [vmem:[%s274 + $0x118] sm:$0xff]
      %v319 = vld [vmem:[%s274 + $0x120] sm:$0xff]
      %v320 = vld [vmem:[%s274 + $0x128] sm:$0xff]
      %v321 = vld [vmem:[%s274 + $0x130] sm:$0xff]
      %v322 = vld [vmem:[%s274 + $0x138] sm:$0xff]
      %v323 = vld [vmem:[%s274 + $0x140] sm:$0xff]
      %v324 = vld [vmem:[%s274 + $0x148] sm:$0xff]
      %v325 = vld [vmem:[%s274 + $0x150] sm:$0xff]
      %v326 = vld [vmem:[%s274 + $0x158] sm:$0xff]
      %v327 = vld [vmem:[%s274 + $0x160] sm:$0xff]
      %v328 = vld [vmem:[%s274 + $0x168] sm:$0xff]
      %v329 = vld [vmem:[%s274 + $0x170] sm:$0xff]
      %v330 = vld [vmem:[%s274 + $0x178] sm:$0xff]
      %v331 = vld [vmem:[%s274 + $0x180] sm:$0xff]
      %v332 = vld [vmem:[%s274 + $0x188] sm:$0xff]
      %v333 = vld [vmem:[%s274 + $0x190] sm:$0xff]
      %v334 = vld [vmem:[%s274 + $0x198] sm:$0xff]
      %v335 = vld [vmem:[%s274 + $0x1a0] sm:$0xff]
      %v336 = vld [vmem:[%s274 + $0x1a8] sm:$0xff]
      %v337 = vld [vmem:[%s274 + $0x1b0] sm:$0xff]
      %v338 = vld [vmem:[%s274 + $0x1b8] sm:$0xff]
      %v339 = vld [vmem:[%s274 + $0x1c0] sm:$0xff]
      %v340 = vld [vmem:[%s274 + $0x1c8] sm:$0xff]
      %v341 = vld [vmem:[%s274 + $0x1d0] sm:$0xff]
      %v342 = vld [vmem:[%s274 + $0x1d8] sm:$0xff]
      %v343 = vld [vmem:[%s274 + $0x1e0] sm:$0xff]
      %v344 = vld [vmem:[%s274 + $0x1e8] sm:$0xff]
      %v345 = vld [vmem:[%s274 + $0x1f0] sm:$0xff]
      %v346 = vld [vmem:[%s274 + $0x1f8] sm:$0xff]
      %v347 = vmul.f32 %v283, 0.01
      %v348 = vmul.f32 %v284, 0.01
      %v349 = vmul.f32 %v285, 0.01
      %v350 = vmul.f32 %v286, 0.01
      %v351 = vmul.f32 %v287, 0.01
      %v352 = vmul.f32 %v288, 0.01
      %v353 = vmul.f32 %v289, 0.01
      %v354 = vmul.f32 %v290, 0.01
      %v355 = vmul.f32 %v291, 0.01
      %v356 = vmul.f32 %v292, 0.01
      %v357 = vmul.f32 %v293, 0.01
      %v358 = vmul.f32 %v294, 0.01
      %v359 = vmul.f32 %v295, 0.01
      %v360 = vmul.f32 %v296, 0.01
      %v361 = vmul.f32 %v297, 0.01
      %v362 = vmul.f32 %v298, 0.01
      %v363 = vmul.f32 %v299, 0.01
      %v364 = vmul.f32 %v300, 0.01
      %v365 = vmul.f32 %v301, 0.01
      %v366 = vmul.f32 %v302, 0.01
      %v367 = vmul.f32 %v303, 0.01
      %v368 = vmul.f32 %v304, 0.01
      %v369 = vmul.f32 %v305, 0.01
      %v370 = vmul.f32 %v306, 0.01
      %v371 = vmul.f32 %v307, 0.01
      %v372 = vmul.f32 %v308, 0.01
      %v373 = vmul.f32 %v309, 0.01
      %v374 = vmul.f32 %v310, 0.01
      %v375 = vmul.f32 %v311, 0.01
      %v376 = vmul.f32 %v312, 0.01
      %v377 = vmul.f32 %v313, 0.01
      %v378 = vmul.f32 %v314, 0.01
      %v379 = vmul.f32 %v315, 0.01
      %v380 = vmul.f32 %v316, 0.01
      %v381 = vmul.f32 %v317, 0.01
      %v382 = vmul.f32 %v318, 0.01
      %v383 = vmul.f32 %v319, 0.01
      %v384 = vmul.f32 %v320, 0.01
      %v385 = vmul.f32 %v321, 0.01
      %v386 = vmul.f32 %v322, 0.01
      %v387 = vmul.f32 %v323, 0.01
      %v388 = vmul.f32 %v324, 0.01
      %v389 = vmul.f32 %v325, 0.01
      %v390 = vmul.f32 %v326, 0.01
      %v391 = vmul.f32 %v327, 0.01
      %v392 = vmul.f32 %v328, 0.01
      %v393 = vmul.f32 %v329, 0.01
      %v394 = vmul.f32 %v330, 0.01
      %v395 = vmul.f32 %v331, 0.01
      %v396 = vmul.f32 %v332, 0.01
      %v397 = vmul.f32 %v333, 0.01
      %v398 = vmul.f32 %v334, 0.01
      %v399 = vmul.f32 %v335, 0.01
      %v400 = vmul.f32 %v336, 0.01
      %v401 = vmul.f32 %v337, 0.01
      %v402 = vmul.f32 %v338, 0.01
      %v403 = vmul.f32 %v339, 0.01
      %v404 = vmul.f32 %v340, 0.01
      %v405 = vmul.f32 %v341, 0.01
      %v406 = vmul.f32 %v342, 0.01
      %v407 = vmul.f32 %v343, 0.01
      %v408 = vmul.f32 %v344, 0.01
      %v409 = vmul.f32 %v345, 0.01
      %v410 = vmul.f32 %v346, 0.01
      %v411 = vld [vmem:[%s1] sm:$0x1]
      %413 = vset.pattern.permute.xlu0 0
      %414 = vperm.xlu0 %413, %v347
      %v415 = vpop.permute.xlu0 %414
      %418 = vset.pattern.permute.xlu0 0
      %419 = vperm.xlu0 %418, %v348
      %v420 = vpop.permute.xlu0 %419
      %423 = vset.pattern.permute.xlu0 0
      %424 = vperm.xlu0 %423, %v349
      %v425 = vpop.permute.xlu0 %424
      %428 = vset.pattern.permute.xlu0 0
      %429 = vperm.xlu0 %428, %v350
      %v430 = vpop.permute.xlu0 %429
      %433 = vset.pattern.permute.xlu0 0
      %434 = vperm.xlu0 %433, %v351
      %v435 = vpop.permute.xlu0 %434
      %438 = vset.pattern.permute.xlu0 0
      %439 = vperm.xlu0 %438, %v352
      %v440 = vpop.permute.xlu0 %439
      %443 = vset.pattern.permute.xlu0 0
      %444 = vperm.xlu0 %443, %v353
      %v445 = vpop.permute.xlu0 %444
      %448 = vset.pattern.permute.xlu0 0
      %449 = vperm.xlu0 %448, %v354
      %v450 = vpop.permute.xlu0 %449
      %453 = vset.pattern.permute.xlu0 0
      %454 = vperm.xlu0 %453, %v355
      %v455 = vpop.permute.xlu0 %454
      %458 = vset.pattern.permute.xlu0 0
      %459 = vperm.xlu0 %458, %v356
      %v460 = vpop.permute.xlu0 %459
      %463 = vset.pattern.permute.xlu0 0
      %464 = vperm.xlu0 %463, %v357
      %v465 = vpop.permute.xlu0 %464
      %468 = vset.pattern.permute.xlu0 0
      %469 = vperm.xlu0 %468, %v358
      %v470 = vpop.permute.xlu0 %469
      %473 = vset.pattern.permute.xlu0 0
      %474 = vperm.xlu0 %473, %v359
      %v475 = vpop.permute.xlu0 %474
      %478 = vset.pattern.permute.xlu0 0
      %479 = vperm.xlu0 %478, %v360
      %v480 = vpop.permute.xlu0 %479
      %483 = vset.pattern.permute.xlu0 0
      %484 = vperm.xlu0 %483, %v361
      %v485 = vpop.permute.xlu0 %484
      %488 = vset.pattern.permute.xlu0 0
      %489 = vperm.xlu0 %488, %v362
      %v490 = vpop.permute.xlu0 %489
      %493 = vset.pattern.permute.xlu0 0
      %494 = vperm.xlu0 %493, %v363
      %v495 = vpop.permute.xlu0 %494
      %498 = vset.pattern.permute.xlu0 0
      %499 = vperm.xlu0 %498, %v364
      %v500 = vpop.permute.xlu0 %499
      %503 = vset.pattern.permute.xlu0 0
      %504 = vperm.xlu0 %503, %v365
      %v505 = vpop.permute.xlu0 %504
      %508 = vset.pattern.permute.xlu0 0
      %509 = vperm.xlu0 %508, %v366
      %v510 = vpop.permute.xlu0 %509
      %513 = vset.pattern.permute.xlu0 0
      %514 = vperm.xlu0 %513, %v367
      %v515 = vpop.permute.xlu0 %514
      %518 = vset.pattern.permute.xlu0 0
      %519 = vperm.xlu0 %518, %v368
      %v520 = vpop.permute.xlu0 %519
      %523 = vset.pattern.permute.xlu0 0
      %524 = vperm.xlu0 %523, %v369
      %v525 = vpop.permute.xlu0 %524
      %528 = vset.pattern.permute.xlu0 0
      %529 = vperm.xlu0 %528, %v370
      %v530 = vpop.permute.xlu0 %529
      %533 = vset.pattern.permute.xlu0 0
      %534 = vperm.xlu0 %533, %v371
      %v535 = vpop.permute.xlu0 %534
      %538 = vset.pattern.permute.xlu0 0
      %539 = vperm.xlu0 %538, %v372
      %v540 = vpop.permute.xlu0 %539
      %543 = vset.pattern.permute.xlu0 0
      %544 = vperm.xlu0 %543, %v373
      %v545 = vpop.permute.xlu0 %544
      %548 = vset.pattern.permute.xlu0 0
      %549 = vperm.xlu0 %548, %v374
      %v550 = vpop.permute.xlu0 %549
      %553 = vset.pattern.permute.xlu0 0
      %554 = vperm.xlu0 %553, %v375
      %v555 = vpop.permute.xlu0 %554
      %558 = vset.pattern.permute.xlu0 0
      %559 = vperm.xlu0 %558, %v376
      %v560 = vpop.permute.xlu0 %559
      %563 = vset.pattern.permute.xlu0 0
      %564 = vperm.xlu0 %563, %v377
      %v565 = vpop.permute.xlu0 %564
      %568 = vset.pattern.permute.xlu0 0
      %569 = vperm.xlu0 %568, %v378
      %v570 = vpop.permute.xlu0 %569
      %573 = vset.pattern.permute.xlu0 0
      %574 = vperm.xlu0 %573, %v379
      %v575 = vpop.permute.xlu0 %574
      %578 = vset.pattern.permute.xlu0 0
      %579 = vperm.xlu0 %578, %v380
      %v580 = vpop.permute.xlu0 %579
      %583 = vset.pattern.permute.xlu0 0
      %584 = vperm.xlu0 %583, %v381
      %v585 = vpop.permute.xlu0 %584
      %588 = vset.pattern.permute.xlu0 0
      %589 = vperm.xlu0 %588, %v382
      %v590 = vpop.permute.xlu0 %589
      %593 = vset.pattern.permute.xlu0 0
      %594 = vperm.xlu0 %593, %v383
      %v595 = vpop.permute.xlu0 %594
      %598 = vset.pattern.permute.xlu0 0
      %599 = vperm.xlu0 %598, %v384
      %v600 = vpop.permute.xlu0 %599
      %603 = vset.pattern.permute.xlu0 0
      %604 = vperm.xlu0 %603, %v385
      %v605 = vpop.permute.xlu0 %604
      %608 = vset.pattern.permute.xlu0 0
      %609 = vperm.xlu0 %608, %v386
      %v610 = vpop.permute.xlu0 %609
      %613 = vset.pattern.permute.xlu0 0
      %614 = vperm.xlu0 %613, %v387
      %v615 = vpop.permute.xlu0 %614
      %618 = vset.pattern.permute.xlu0 0
      %619 = vperm.xlu0 %618, %v388
      %v620 = vpop.permute.xlu0 %619
      %623 = vset.pattern.permute.xlu0 0
      %624 = vperm.xlu0 %623, %v389
      %v625 = vpop.permute.xlu0 %624
      %628 = vset.pattern.permute.xlu0 0
      %629 = vperm.xlu0 %628, %v390
      %v630 = vpop.permute.xlu0 %629
      %633 = vset.pattern.permute.xlu0 0
      %634 = vperm.xlu0 %633, %v391
      %v635 = vpop.permute.xlu0 %634
      %638 = vset.pattern.permute.xlu0 0
      %639 = vperm.xlu0 %638, %v392
      %v640 = vpop.permute.xlu0 %639
      %643 = vset.pattern.permute.xlu0 0
      %644 = vperm.xlu0 %643, %v393
      %v645 = vpop.permute.xlu0 %644
      %648 = vset.pattern.permute.xlu0 0
      %649 = vperm.xlu0 %648, %v394
      %v650 = vpop.permute.xlu0 %649
      %653 = vset.pattern.permute.xlu0 0
      %654 = vperm.xlu0 %653, %v395
      %v655 = vpop.permute.xlu0 %654
      %658 = vset.pattern.permute.xlu0 0
      %659 = vperm.xlu0 %658, %v396
      %v660 = vpop.permute.xlu0 %659
      %663 = vset.pattern.permute.xlu0 0
      %664 = vperm.xlu0 %663, %v397
      %v665 = vpop.permute.xlu0 %664
      %668 = vset.pattern.permute.xlu0 0
      %669 = vperm.xlu0 %668, %v398
      %v670 = vpop.permute.xlu0 %669
      %673 = vset.pattern.permute.xlu0 0
      %674 = vperm.xlu0 %673, %v399
      %v675 = vpop.permute.xlu0 %674
      %678 = vset.pattern.permute.xlu0 0
      %679 = vperm.xlu0 %678, %v400
      %v680 = vpop.permute.xlu0 %679
      %683 = vset.pattern.permute.xlu0 0
      %684 = vperm.xlu0 %683, %v401
      %v685 = vpop.permute.xlu0 %684
      %688 = vset.pattern.permute.xlu0 0
      %689 = vperm.xlu0 %688, %v402
      %v690 = vpop.permute.xlu0 %689
      %693 = vset.pattern.permute.xlu0 0
      %694 = vperm.xlu0 %693, %v403
      %v695 = vpop.permute.xlu0 %694
      %698 = vset.pattern.permute.xlu0 0
      %699 = vperm.xlu0 %698, %v404
      %v700 = vpop.permute.xlu0 %699
      %703 = vset.pattern.permute.xlu0 0
      %704 = vperm.xlu0 %703, %v405
      %v705 = vpop.permute.xlu0 %704
      %708 = vset.pattern.permute.xlu0 0
      %709 = vperm.xlu0 %708, %v406
      %v710 = vpop.permute.xlu0 %709
      %713 = vset.pattern.permute.xlu0 0
      %714 = vperm.xlu0 %713, %v407
      %v715 = vpop.permute.xlu0 %714
      %718 = vset.pattern.permute.xlu0 0
      %719 = vperm.xlu0 %718, %v408
      %v720 = vpop.permute.xlu0 %719
      %723 = vset.pattern.permute.xlu0 0
      %724 = vperm.xlu0 %723, %v409
      %v725 = vpop.permute.xlu0 %724
      %728 = vset.pattern.permute.xlu0 0
      %729 = vperm.xlu0 %728, %v410
      %v730 = vpop.permute.xlu0 %729
      %v733 = vlaneseq
      %v734 = vshrl.u32 %v733, 7
      %v735 = vsub.s32 0, %v734
      %v736 = vrot.slane %v411, %v735
      %v738 = vmul.f32 %v415, %v736
      %v739 = vmul.f32 %v420, %v736
      %v740 = vmul.f32 %v425, %v736
      %v741 = vmul.f32 %v430, %v736
      %v742 = vmul.f32 %v435, %v736
      %v743 = vmul.f32 %v440, %v736
      %v744 = vmul.f32 %v445, %v736
      %v745 = vmul.f32 %v450, %v736
      %v746 = vmul.f32 %v455, %v736
      %v747 = vmul.f32 %v460, %v736
      %v748 = vmul.f32 %v465, %v736
      %v749 = vmul.f32 %v470, %v736
      %v750 = vmul.f32 %v475, %v736
      %v751 = vmul.f32 %v480, %v736
      %v752 = vmul.f32 %v485, %v736
      %v753 = vmul.f32 %v490, %v736
      %v754 = vmul.f32 %v495, %v736
      %v755 = vmul.f32 %v500, %v736
      %v756 = vmul.f32 %v505, %v736
      %v757 = vmul.f32 %v510, %v736
      %v758 = vmul.f32 %v515, %v736
      %v759 = vmul.f32 %v520, %v736
      %v760 = vmul.f32 %v525, %v736
      %v761 = vmul.f32 %v530, %v736
      %v762 = vmul.f32 %v535, %v736
      %v763 = vmul.f32 %v540, %v736
      %v764 = vmul.f32 %v545, %v736
      %v765 = vmul.f32 %v550, %v736
      %v766 = vmul.f32 %v555, %v736
      %v767 = vmul.f32 %v560, %v736
      %v768 = vmul.f32 %v565, %v736
      %v769 = vmul.f32 %v570, %v736
      %v770 = vmul.f32 %v575, %v736
      %v771 = vmul.f32 %v580, %v736
      %v772 = vmul.f32 %v585, %v736
      %v773 = vmul.f32 %v590, %v736
      %v774 = vmul.f32 %v595, %v736
      %v775 = vmul.f32 %v600, %v736
      %v776 = vmul.f32 %v605, %v736
      %v777 = vmul.f32 %v610, %v736
      %v778 = vmul.f32 %v615, %v736
      %v779 = vmul.f32 %v620, %v736
      %v780 = vmul.f32 %v625, %v736
      %v781 = vmul.f32 %v630, %v736
      %v782 = vmul.f32 %v635, %v736
      %v783 = vmul.f32 %v640, %v736
      %v784 = vmul.f32 %v645, %v736
      %v785 = vmul.f32 %v650, %v736
      %v786 = vmul.f32 %v655, %v736
      %v787 = vmul.f32 %v660, %v736
      %v788 = vmul.f32 %v665, %v736
      %v789 = vmul.f32 %v670, %v736
      %v790 = vmul.f32 %v675, %v736
      %v791 = vmul.f32 %v680, %v736
      %v792 = vmul.f32 %v685, %v736
      %v793 = vmul.f32 %v690, %v736
      %v794 = vmul.f32 %v695, %v736
      %v795 = vmul.f32 %v700, %v736
      %v796 = vmul.f32 %v705, %v736
      %v797 = vmul.f32 %v710, %v736
      %v798 = vmul.f32 %v715, %v736
      %v799 = vmul.f32 %v720, %v736
      %v800 = vmul.f32 %v725, %v736
      %v801 = vmul.f32 %v730, %v736
      %v802 = vld [vmem:[%s2] sm:$0x1]
      %v804 = vlaneseq
      %v805 = vshrl.u32 %v804, 7
      %v806 = vsub.s32 0, %v805
      %v807 = vrot.slane %v802, %v806
      %v809 = vadd.f32 %v738, %v807
      %v810 = vadd.f32 %v739, %v807
      %v811 = vadd.f32 %v740, %v807
      %v812 = vadd.f32 %v741, %v807
      %v813 = vadd.f32 %v742, %v807
      %v814 = vadd.f32 %v743, %v807
      %v815 = vadd.f32 %v744, %v807
      %v816 = vadd.f32 %v745, %v807
      %v817 = vadd.f32 %v746, %v807
      %v818 = vadd.f32 %v747, %v807
      %v819 = vadd.f32 %v748, %v807
      %v820 = vadd.f32 %v749, %v807
      %v821 = vadd.f32 %v750, %v807
      %v822 = vadd.f32 %v751, %v807
      %v823 = vadd.f32 %v752, %v807
      %v824 = vadd.f32 %v753, %v807
      %v825 = vadd.f32 %v754, %v807
      %v826 = vadd.f32 %v755, %v807
      %v827 = vadd.f32 %v756, %v807
      %v828 = vadd.f32 %v757, %v807
      %v829 = vadd.f32 %v758, %v807
      %v830 = vadd.f32 %v759, %v807
      %v831 = vadd.f32 %v760, %v807
      %v832 = vadd.f32 %v761, %v807
      %v833 = vadd.f32 %v762, %v807
      %v834 = vadd.f32 %v763, %v807
      %v835 = vadd.f32 %v764, %v807
      %v836 = vadd.f32 %v765, %v807
      %v837 = vadd.f32 %v766, %v807
      %v838 = vadd.f32 %v767, %v807
      %v839 = vadd.f32 %v768, %v807
      %v840 = vadd.f32 %v769, %v807
      %v841 = vadd.f32 %v770, %v807
      %v842 = vadd.f32 %v771, %v807
      %v843 = vadd.f32 %v772, %v807
      %v844 = vadd.f32 %v773, %v807
      %v845 = vadd.f32 %v774, %v807
      %v846 = vadd.f32 %v775, %v807
      %v847 = vadd.f32 %v776, %v807
      %v848 = vadd.f32 %v777, %v807
      %v849 = vadd.f32 %v778, %v807
      %v850 = vadd.f32 %v779, %v807
      %v851 = vadd.f32 %v780, %v807
      %v852 = vadd.f32 %v781, %v807
      %v853 = vadd.f32 %v782, %v807
      %v854 = vadd.f32 %v783, %v807
      %v855 = vadd.f32 %v784, %v807
      %v856 = vadd.f32 %v785, %v807
      %v857 = vadd.f32 %v786, %v807
      %v858 = vadd.f32 %v787, %v807
      %v859 = vadd.f32 %v788, %v807
      %v860 = vadd.f32 %v789, %v807
      %v861 = vadd.f32 %v790, %v807
      %v862 = vadd.f32 %v791, %v807
      %v863 = vadd.f32 %v792, %v807
      %v864 = vadd.f32 %v793, %v807
      %v865 = vadd.f32 %v794, %v807
      %v866 = vadd.f32 %v795, %v807
      %v867 = vadd.f32 %v796, %v807
      %v868 = vadd.f32 %v797, %v807
      %v869 = vadd.f32 %v798, %v807
      %v870 = vadd.f32 %v799, %v807
      %v871 = vadd.f32 %v800, %v807
      %v872 = vadd.f32 %v801, %v807
      %v873 = vtanh.pop %v809
      %v874 = vtanh.pop %v810
      %v875 = vtanh.pop %v811
      %v876 = vtanh.pop %v812
      %v877 = vtanh.pop %v813
      %v878 = vtanh.pop %v814
      %v879 = vtanh.pop %v815
      %v880 = vtanh.pop %v816
      %v881 = vtanh.pop %v817
      %v882 = vtanh.pop %v818
      %v883 = vtanh.pop %v819
      %v884 = vtanh.pop %v820
      %v885 = vtanh.pop %v821
      %v886 = vtanh.pop %v822
      %v887 = vtanh.pop %v823
      %v888 = vtanh.pop %v824
      %v889 = vtanh.pop %v825
      %v890 = vtanh.pop %v826
      %v891 = vtanh.pop %v827
      %v892 = vtanh.pop %v828
      %v893 = vtanh.pop %v829
      %v894 = vtanh.pop %v830
      %v895 = vtanh.pop %v831
      %v896 = vtanh.pop %v832
      %v897 = vtanh.pop %v833
      %v898 = vtanh.pop %v834
      %v899 = vtanh.pop %v835
      %v900 = vtanh.pop %v836
      %v901 = vtanh.pop %v837
      %v902 = vtanh.pop %v838
      %v903 = vtanh.pop %v839
      %v904 = vtanh.pop %v840
      %v905 = vtanh.pop %v841
      %v906 = vtanh.pop %v842
      %v907 = vtanh.pop %v843
      %v908 = vtanh.pop %v844
      %v909 = vtanh.pop %v845
      %v910 = vtanh.pop %v846
      %v911 = vtanh.pop %v847
      %v912 = vtanh.pop %v848
      %v913 = vtanh.pop %v849
      %v914 = vtanh.pop %v850
      %v915 = vtanh.pop %v851
      %v916 = vtanh.pop %v852
      %v917 = vtanh.pop %v853
      %v918 = vtanh.pop %v854
      %v919 = vtanh.pop %v855
      %v920 = vtanh.pop %v856
      %v921 = vtanh.pop %v857
      %v922 = vtanh.pop %v858
      %v923 = vtanh.pop %v859
      %v924 = vtanh.pop %v860
      %v925 = vtanh.pop %v861
      %v926 = vtanh.pop %v862
      %v927 = vtanh.pop %v863
      %v928 = vtanh.pop %v864
      %v929 = vtanh.pop %v865
      %v930 = vtanh.pop %v866
      %v931 = vtanh.pop %v867
      %v932 = vtanh.pop %v868
      %v933 = vtanh.pop %v869
      %v934 = vtanh.pop %v870
      %v935 = vtanh.pop %v871
      %v936 = vtanh.pop %v872
      %v937 = vpack.c.bf16 %v874, %v873
      %v938 = vpack.c.bf16 %v876, %v875
      %v939 = vpack.c.bf16 %v878, %v877
      %v940 = vpack.c.bf16 %v880, %v879
      %v941 = vpack.c.bf16 %v882, %v881
      %v942 = vpack.c.bf16 %v884, %v883
      %v943 = vpack.c.bf16 %v886, %v885
      %v944 = vpack.c.bf16 %v888, %v887
      %v945 = vpack.c.bf16 %v890, %v889
      %v946 = vpack.c.bf16 %v892, %v891
      %v947 = vpack.c.bf16 %v894, %v893
      %v948 = vpack.c.bf16 %v896, %v895
      %v949 = vpack.c.bf16 %v898, %v897
      %v950 = vpack.c.bf16 %v900, %v899
      %v951 = vpack.c.bf16 %v902, %v901
      %v952 = vpack.c.bf16 %v904, %v903
      %v953 = vpack.c.bf16 %v906, %v905
      %v954 = vpack.c.bf16 %v908, %v907
      %v955 = vpack.c.bf16 %v910, %v909
      %v956 = vpack.c.bf16 %v912, %v911
      %v957 = vpack.c.bf16 %v914, %v913
      %v958 = vpack.c.bf16 %v916, %v915
      %v959 = vpack.c.bf16 %v918, %v917
      %v960 = vpack.c.bf16 %v920, %v919
      %v961 = vpack.c.bf16 %v922, %v921
      %v962 = vpack.c.bf16 %v924, %v923
      %v963 = vpack.c.bf16 %v926, %v925
      %v964 = vpack.c.bf16 %v928, %v927
      %v965 = vpack.c.bf16 %v930, %v929
      %v966 = vpack.c.bf16 %v932, %v931
      %v967 = vpack.c.bf16 %v934, %v933
      %v968 = vpack.c.bf16 %v936, %v935
      %v969 = vld [vmem:[%s3] sm:$0xf]
      %v970 = vld [vmem:[%s3 + $0x4] sm:$0xf]
      %v971 = vld [vmem:[%s3 + $0x8] sm:$0xf]
      %v972 = vld [vmem:[%s3 + $0xc] sm:$0xf]
      %v973 = vld [vmem:[%s3 + $0x10] sm:$0xf]
      %v974 = vld [vmem:[%s3 + $0x14] sm:$0xf]
      %v975 = vld [vmem:[%s3 + $0x18] sm:$0xf]
      %v976 = vld [vmem:[%s3 + $0x1c] sm:$0xf]
      %v977 = vld [vmem:[%s3 + $0x20] sm:$0xf]
      %v978 = vld [vmem:[%s3 + $0x24] sm:$0xf]
      %v979 = vld [vmem:[%s3 + $0x28] sm:$0xf]
      %v980 = vld [vmem:[%s3 + $0x2c] sm:$0xf]
      %v981 = vld [vmem:[%s3 + $0x30] sm:$0xf]
      %v982 = vld [vmem:[%s3 + $0x34] sm:$0xf]
      %v983 = vld [vmem:[%s3 + $0x38] sm:$0xf]
      %v984 = vld [vmem:[%s3 + $0x3c] sm:$0xf]
      %v985 = vld [vmem:[%s4] sm:$0x1]
      %v987 = vlaneseq
      %v988 = vshrl.u32 %v987, 7
      %v989 = vsub.s32 0, %v988
      %v990 = vrot.slane %v985, %v989
      %v1008 = vunpack.c.l.b16 %v969
      %v1009 = vunpack.c.l.b16 %v970
      %v1010 = vunpack.c.l.b16 %v971
      %v1011 = vunpack.c.l.b16 %v972
      %v1012 = vunpack.c.l.b16 %v973
      %v1013 = vunpack.c.l.b16 %v974
      %v1014 = vunpack.c.l.b16 %v975
      %v1015 = vunpack.c.l.b16 %v976
      %v1016 = vunpack.c.l.b16 %v977
      %v1017 = vunpack.c.l.b16 %v978
      %v1018 = vunpack.c.l.b16 %v979
      %v1019 = vunpack.c.l.b16 %v980
      %v1020 = vunpack.c.l.b16 %v981
      %v1021 = vunpack.c.l.b16 %v982
      %v1022 = vunpack.c.l.b16 %v983
      %v1023 = vunpack.c.l.b16 %v984
      %v1024 = vpack.c.b16 %v1009, %v1008
      %v1025 = vpack.c.b16 %v1011, %v1010
      %v1026 = vpack.c.b16 %v1013, %v1012
      %v1027 = vpack.c.b16 %v1015, %v1014
      %v1028 = vpack.c.b16 %v1017, %v1016
      %v1029 = vpack.c.b16 %v1019, %v1018
      %v1030 = vpack.c.b16 %v1021, %v1020
      %v1031 = vpack.c.b16 %v1023, %v1022
      %1040 = vmatprep.subr.bf16.mxu0 0
      %1041 = vmatpush1.bf16.msra.mxu0 %v1024
      %1042 = vmatprep.subr.bf16.mxu0 0
      %1043 = vmatpush1.bf16.msra.mxu0 %v1025
      %1044 = vmatprep.subr.bf16.mxu0 0
      %1045 = vmatpush1.bf16.msra.mxu0 %v1026
      %1046 = vmatprep.subr.bf16.mxu0 0
      %1047 = vmatpush1.bf16.msra.mxu0 %v1027
      %1048 = vmatprep.subr.bf16.mxu0 0
      %1049 = vmatpush1.bf16.msra.mxu0 %v1028
      %1050 = vmatprep.subr.bf16.mxu0 0
      %1051 = vmatpush1.bf16.msra.mxu0 %v1029
      %1052 = vmatprep.subr.bf16.mxu0 0
      %1053 = vmatpush1.bf16.msra.mxu0 %v1030
      %1054 = vmatprep.subr.bf16.mxu0 0
      %1055 = vmatpush1.bf16.msra.mxu0 %v1031
      %1056 = vmatprep.subr.bf16.mxu0 0
      %1057 = vmatpush1.bf16.msra.mxu0 0
      %1058 = vmatprep.subr.bf16.mxu0 0
      %1059 = vmatpush1.bf16.msra.mxu0 0
      %1060 = vmatprep.subr.bf16.mxu0 0
      %1061 = vmatpush1.bf16.msra.mxu0 0
      %1062 = vmatprep.subr.bf16.mxu0 0
      %1063 = vmatpush1.bf16.msra.mxu0 0
      %1064 = vmatprep.subr.bf16.mxu0 0
      %1065 = vmatpush1.bf16.msra.mxu0 0
      %1066 = vmatprep.subr.bf16.mxu0 0
      %1067 = vmatpush1.bf16.msra.mxu0 0
      %1068 = vmatprep.subr.bf16.mxu0 0
      %1069 = vmatpush1.bf16.msra.mxu0 0
      %1070 = vmatprep.subr.bf16.mxu0 0
      %1071 = vmatpush1.bf16.msra.mxu0 0
      %1072 = vmatprep.mubr.bf16.mxu0 0
      %1073 = vmatmul.mubr.bf16.gmra.mrb[0].mxu0 %v937
      %v1074 = vpop.f32.mrb[0].mxu0
      %v1075 = vadd.f32 %v990, %v1074
      %v1076 = vpop.f32.mrb[0].mxu0
      %v1077 = vpop.f32.mrb[0].mxu0
      %v1078 = vadd.f32 %v990, %v1077
      %v1079 = vpop.f32.mrb[0].mxu0
      %1080 = vmatprep.mubr.bf16.mxu0 0
      %1081 = vmatmul.mubr.bf16.gmra.mrb[0].mxu0 %v938
      %v1082 = vpop.f32.mrb[0].mxu0
      %v1083 = vadd.f32 %v990, %v1082
      %v1084 = vpop.f32.mrb[0].mxu0
      %v1085 = vpop.f32.mrb[0].mxu0
      %v1086 = vadd.f32 %v990, %v1085
      %v1087 = vpop.f32.mrb[0].mxu0
      %1088 = vmatprep.mubr.bf16.mxu0 0
      %1089 = vmatmul.mubr.bf16.gmra.mrb[0].mxu0 %v939
      %v1090 = vpop.f32.mrb[0].mxu0
      %v1091 = vadd.f32 %v990, %v1090
      %v1092 = vpop.f32.mrb[0].mxu0
      %v1093 = vpop.f32.mrb[0].mxu0
      %v1094 = vadd.f32 %v990, %v1093
      %v1095 = vpop.f32.mrb[0].mxu0
      %1096 = vmatprep.mubr.bf16.mxu0 0
      %1097 = vmatmul.mubr.bf16.gmra.mrb[0].mxu0 %v940
      %v1098 = vpop.f32.mrb[0].mxu0
      %v1099 = vadd.f32 %v990, %v1098
      %v1100 = vpop.f32.mrb[0].mxu0
      %v1101 = vpop.f32.mrb[0].mxu0
      %v1102 = vadd.f32 %v990, %v1101
      %v1103 = vpop.f32.mrb[0].mxu0
      %1104 = vmatprep.mubr.bf16.mxu0 0
      %1105 = vmatmul.mubr.bf16.gmra.mrb[0].mxu0 %v941
      %v1106 = vpop.f32.mrb[0].mxu0
      %v1107 = vadd.f32 %v990, %v1106
      %v1108 = vpop.f32.mrb[0].mxu0
      %v1109 = vpop.f32.mrb[0].mxu0
      %v1110 = vadd.f32 %v990, %v1109
      %v1111 = vpop.f32.mrb[0].mxu0
      %1112 = vmatprep.mubr.bf16.mxu0 0
      %1113 = vmatmul.mubr.bf16.gmra.mrb[0].mxu0 %v942
      %v1114 = vpop.f32.mrb[0].mxu0
      %v1115 = vadd.f32 %v990, %v1114
      %v1116 = vpop.f32.mrb[0].mxu0
      %v1117 = vpop.f32.mrb[0].mxu0
      %v1118 = vadd.f32 %v990, %v1117
      %v1119 = vpop.f32.mrb[0].mxu0
      %1120 = vmatprep.mubr.bf16.mxu0 0
      %1121 = vmatmul.mubr.bf16.gmra.mrb[0].mxu0 %v943
      %v1122 = vpop.f32.mrb[0].mxu0
      %v1123 = vadd.f32 %v990, %v1122
      %v1124 = vpop.f32.mrb[0].mxu0
      %v1125 = vpop.f32.mrb[0].mxu0
      %v1126 = vadd.f32 %v990, %v1125
      %v1127 = vpop.f32.mrb[0].mxu0
      %1128 = vmatprep.mubr.bf16.mxu0 0
      %1129 = vmatmul.mubr.bf16.gmra.mrb[0].mxu0 %v944
      %v1130 = vpop.f32.mrb[0].mxu0
      %v1131 = vadd.f32 %v990, %v1130
      %v1132 = vpop.f32.mrb[0].mxu0
      %v1133 = vpop.f32.mrb[0].mxu0
      %v1134 = vadd.f32 %v990, %v1133
      %v1135 = vpop.f32.mrb[0].mxu0
      %1136 = vmatprep.mubr.bf16.mxu0 0
      %1137 = vmatmul.mubr.bf16.gmra.mrb[0].mxu0 %v945
      %v1138 = vpop.f32.mrb[0].mxu0
      %v1139 = vadd.f32 %v990, %v1138
      %v1140 = vpop.f32.mrb[0].mxu0
      %v1141 = vpop.f32.mrb[0].mxu0
      %v1142 = vadd.f32 %v990, %v1141
      %v1143 = vpop.f32.mrb[0].mxu0
      %1144 = vmatprep.mubr.bf16.mxu0 0
      %1145 = vmatmul.mubr.bf16.gmra.mrb[0].mxu0 %v946
      %v1146 = vpop.f32.mrb[0].mxu0
      %v1147 = vadd.f32 %v990, %v1146
      %v1148 = vpop.f32.mrb[0].mxu0
      %v1149 = vpop.f32.mrb[0].mxu0
      %v1150 = vadd.f32 %v990, %v1149
      %v1151 = vpop.f32.mrb[0].mxu0
      %1152 = vmatprep.mubr.bf16.mxu0 0
      %1153 = vmatmul.mubr.bf16.gmra.mrb[0].mxu0 %v947
      %v1154 = vpop.f32.mrb[0].mxu0
      %v1155 = vadd.f32 %v990, %v1154
      %v1156 = vpop.f32.mrb[0].mxu0
      %v1157 = vpop.f32.mrb[0].mxu0
      %v1158 = vadd.f32 %v990, %v1157
      %v1159 = vpop.f32.mrb[0].mxu0
      %1160 = vmatprep.mubr.bf16.mxu0 0
      %1161 = vmatmul.mubr.bf16.gmra.mrb[0].mxu0 %v948
      %v1162 = vpop.f32.mrb[0].mxu0
      %v1163 = vadd.f32 %v990, %v1162
      %v1164 = vpop.f32.mrb[0].mxu0
      %v1165 = vpop.f32.mrb[0].mxu0
      %v1166 = vadd.f32 %v990, %v1165
      %v1167 = vpop.f32.mrb[0].mxu0
      %1168 = vmatprep.mubr.bf16.mxu0 0
      %1169 = vmatmul.mubr.bf16.gmra.mrb[0].mxu0 %v949
      %v1170 = vpop.f32.mrb[0].mxu0
      %v1171 = vadd.f32 %v990, %v1170
      %v1172 = vpop.f32.mrb[0].mxu0
      %v1173 = vpop.f32.mrb[0].mxu0
      %v1174 = vadd.f32 %v990, %v1173
      %v1175 = vpop.f32.mrb[0].mxu0
      %1176 = vmatprep.mubr.bf16.mxu0 0
      %1177 = vmatmul.mubr.bf16.gmra.mrb[0].mxu0 %v950
      %v1178 = vpop.f32.mrb[0].mxu0
      %v1179 = vadd.f32 %v990, %v1178
      %v1180 = vpop.f32.mrb[0].mxu0
      %v1181 = vpop.f32.mrb[0].mxu0
      %v1182 = vadd.f32 %v990, %v1181
      %v1183 = vpop.f32.mrb[0].mxu0
      %1184 = vmatprep.mubr.bf16.mxu0 0
      %1185 = vmatmul.mubr.bf16.gmra.mrb[0].mxu0 %v951
      %v1186 = vpop.f32.mrb[0].mxu0
      %v1187 = vadd.f32 %v990, %v1186
      %v1188 = vpop.f32.mrb[0].mxu0
      %v1189 = vpop.f32.mrb[0].mxu0
      %v1190 = vadd.f32 %v990, %v1189
      %v1191 = vpop.f32.mrb[0].mxu0
      %1192 = vmatprep.mubr.bf16.mxu0 0
      %1193 = vmatmul.mubr.bf16.gmra.mrb[0].mxu0 %v952
      %v1194 = vpop.f32.mrb[0].mxu0
      %v1195 = vadd.f32 %v990, %v1194
      %v1196 = vpop.f32.mrb[0].mxu0
      %v1197 = vpop.f32.mrb[0].mxu0
      %v1198 = vadd.f32 %v990, %v1197
      %v1199 = vpop.f32.mrb[0].mxu0
      %1200 = vmatprep.mubr.bf16.mxu0 0
      %1201 = vmatmul.mubr.bf16.gmra.mrb[0].mxu0 %v953
      %v1202 = vpop.f32.mrb[0].mxu0
      %v1203 = vadd.f32 %v990, %v1202
      %v1204 = vpop.f32.mrb[0].mxu0
      %v1205 = vpop.f32.mrb[0].mxu0
      %v1206 = vadd.f32 %v990, %v1205
      %v1207 = vpop.f32.mrb[0].mxu0
      %1208 = vmatprep.mubr.bf16.mxu0 0
      %1209 = vmatmul.mubr.bf16.gmra.mrb[0].mxu0 %v954
      %v1210 = vpop.f32.mrb[0].mxu0
      %v1211 = vadd.f32 %v990, %v1210
      %v1212 = vpop.f32.mrb[0].mxu0
      %v1213 = vpop.f32.mrb[0].mxu0
      %v1214 = vadd.f32 %v990, %v1213
      %v1215 = vpop.f32.mrb[0].mxu0
      %1216 = vmatprep.mubr.bf16.mxu0 0
      %1217 = vmatmul.mubr.bf16.gmra.mrb[0].mxu0 %v955
      %v1218 = vpop.f32.mrb[0].mxu0
      %v1219 = vadd.f32 %v990, %v1218
      %v1220 = vpop.f32.mrb[0].mxu0
      %v1221 = vpop.f32.mrb[0].mxu0
      %v1222 = vadd.f32 %v990, %v1221
      %v1223 = vpop.f32.mrb[0].mxu0
      %1224 = vmatprep.mubr.bf16.mxu0 0
      %1225 = vmatmul.mubr.bf16.gmra.mrb[0].mxu0 %v956
      %v1226 = vpop.f32.mrb[0].mxu0
      %v1227 = vadd.f32 %v990, %v1226
      %v1228 = vpop.f32.mrb[0].mxu0
      %v1229 = vpop.f32.mrb[0].mxu0
      %v1230 = vadd.f32 %v990, %v1229
      %v1231 = vpop.f32.mrb[0].mxu0
      %1232 = vmatprep.mubr.bf16.mxu0 0
      %1233 = vmatmul.mubr.bf16.gmra.mrb[0].mxu0 %v957
      %v1234 = vpop.f32.mrb[0].mxu0
      %v1235 = vadd.f32 %v990, %v1234
      %v1236 = vpop.f32.mrb[0].mxu0
      %v1237 = vpop.f32.mrb[0].mxu0
      %v1238 = vadd.f32 %v990, %v1237
      %v1239 = vpop.f32.mrb[0].mxu0
      %1240 = vmatprep.mubr.bf16.mxu0 0
      %1241 = vmatmul.mubr.bf16.gmra.mrb[0].mxu0 %v958
      %v1242 = vpop.f32.mrb[0].mxu0
      %v1243 = vadd.f32 %v990, %v1242
      %v1244 = vpop.f32.mrb[0].mxu0
      %v1245 = vpop.f32.mrb[0].mxu0
      %v1246 = vadd.f32 %v990, %v1245
      %v1247 = vpop.f32.mrb[0].mxu0
      %1248 = vmatprep.mubr.bf16.mxu0 0
      %1249 = vmatmul.mubr.bf16.gmra.mrb[0].mxu0 %v959
      %v1250 = vpop.f32.mrb[0].mxu0
      %v1251 = vadd.f32 %v990, %v1250
      %v1252 = vpop.f32.mrb[0].mxu0
      %v1253 = vpop.f32.mrb[0].mxu0
      %v1254 = vadd.f32 %v990, %v1253
      %v1255 = vpop.f32.mrb[0].mxu0
      %1256 = vmatprep.mubr.bf16.mxu0 0
      %1257 = vmatmul.mubr.bf16.gmra.mrb[0].mxu0 %v960
      %v1258 = vpop.f32.mrb[0].mxu0
      %v1259 = vadd.f32 %v990, %v1258
      %v1260 = vpop.f32.mrb[0].mxu0
      %v1261 = vpop.f32.mrb[0].mxu0
      %v1262 = vadd.f32 %v990, %v1261
      %v1263 = vpop.f32.mrb[0].mxu0
      %1264 = vmatprep.mubr.bf16.mxu0 0
      %1265 = vmatmul.mubr.bf16.gmra.mrb[0].mxu0 %v961
      %v1266 = vpop.f32.mrb[0].mxu0
      %v1267 = vadd.f32 %v990, %v1266
      %v1268 = vpop.f32.mrb[0].mxu0
      %v1269 = vpop.f32.mrb[0].mxu0
      %v1270 = vadd.f32 %v990, %v1269
      %v1271 = vpop.f32.mrb[0].mxu0
      %1272 = vmatprep.mubr.bf16.mxu0 0
      %1273 = vmatmul.mubr.bf16.gmra.mrb[0].mxu0 %v962
      %v1274 = vpop.f32.mrb[0].mxu0
      %v1275 = vadd.f32 %v990, %v1274
      %v1276 = vpop.f32.mrb[0].mxu0
      %v1277 = vpop.f32.mrb[0].mxu0
      %v1278 = vadd.f32 %v990, %v1277
      %v1279 = vpop.f32.mrb[0].mxu0
      %1280 = vmatprep.mubr.bf16.mxu0 0
      %1281 = vmatmul.mubr.bf16.gmra.mrb[0].mxu0 %v963
      %v1282 = vpop.f32.mrb[0].mxu0
      %v1283 = vadd.f32 %v990, %v1282
      %v1284 = vpop.f32.mrb[0].mxu0
      %v1285 = vpop.f32.mrb[0].mxu0
      %v1286 = vadd.f32 %v990, %v1285
      %v1287 = vpop.f32.mrb[0].mxu0
      %1288 = vmatprep.mubr.bf16.mxu0 0
      %1289 = vmatmul.mubr.bf16.gmra.mrb[0].mxu0 %v964
      %v1290 = vpop.f32.mrb[0].mxu0
      %v1291 = vadd.f32 %v990, %v1290
      %v1292 = vpop.f32.mrb[0].mxu0
      %v1293 = vpop.f32.mrb[0].mxu0
      %v1294 = vadd.f32 %v990, %v1293
      %v1295 = vpop.f32.mrb[0].mxu0
      %1296 = vmatprep.mubr.bf16.mxu0 0
      %1297 = vmatmul.mubr.bf16.gmra.mrb[0].mxu0 %v965
      %v1298 = vpop.f32.mrb[0].mxu0
      %v1299 = vadd.f32 %v990, %v1298
      %v1300 = vpop.f32.mrb[0].mxu0
      %v1301 = vpop.f32.mrb[0].mxu0
      %v1302 = vadd.f32 %v990, %v1301
      %v1303 = vpop.f32.mrb[0].mxu0
      %1304 = vmatprep.mubr.bf16.mxu0 0
      %1305 = vmatmul.mubr.bf16.gmra.mrb[0].mxu0 %v966
      %v1306 = vpop.f32.mrb[0].mxu0
      %v1307 = vadd.f32 %v990, %v1306
      %v1308 = vpop.f32.mrb[0].mxu0
      %v1309 = vpop.f32.mrb[0].mxu0
      %v1310 = vadd.f32 %v990, %v1309
      %v1311 = vpop.f32.mrb[0].mxu0
      %1312 = vmatprep.mubr.bf16.mxu0 0
      %1313 = vmatmul.mubr.bf16.gmra.mrb[0].mxu0 %v967
      %v1314 = vpop.f32.mrb[0].mxu0
      %v1315 = vadd.f32 %v990, %v1314
      %v1316 = vpop.f32.mrb[0].mxu0
      %v1317 = vpop.f32.mrb[0].mxu0
      %v1318 = vadd.f32 %v990, %v1317
      %v1319 = vpop.f32.mrb[0].mxu0
      %1320 = vmatprep.mubr.bf16.mxu0 0
      %1321 = vmatmul.mubr.bf16.gmra.mrb[0].mxu0 %v968
      %v1322 = vpop.f32.mrb[0].mxu0
      %v1323 = vadd.f32 %v990, %v1322
      %v1324 = vpop.f32.mrb[0].mxu0
      %v1325 = vpop.f32.mrb[0].mxu0
      %v1326 = vadd.f32 %v990, %v1325
      %v1327 = vpop.f32.mrb[0].mxu0
      %1328 = vdwg.mxu0
      %v1329 = vtanh.pop %v1075
      %v1330 = vtanh.pop %v1078
      %v1331 = vtanh.pop %v1083
      %v1332 = vtanh.pop %v1086
      %v1333 = vtanh.pop %v1091
      %v1334 = vtanh.pop %v1094
      %v1335 = vtanh.pop %v1099
      %v1336 = vtanh.pop %v1102
      %v1337 = vtanh.pop %v1107
      %v1338 = vtanh.pop %v1110
      %v1339 = vtanh.pop %v1115
      %v1340 = vtanh.pop %v1118
      %v1341 = vtanh.pop %v1123
      %v1342 = vtanh.pop %v1126
      %v1343 = vtanh.pop %v1131
      %v1344 = vtanh.pop %v1134
      %v1345 = vtanh.pop %v1139
      %v1346 = vtanh.pop %v1142
      %v1347 = vtanh.pop %v1147
      %v1348 = vtanh.pop %v1150
      %v1349 = vtanh.pop %v1155
      %v1350 = vtanh.pop %v1158
      %v1351 = vtanh.pop %v1163
      %v1352 = vtanh.pop %v1166
      %v1353 = vtanh.pop %v1171
      %v1354 = vtanh.pop %v1174
      %v1355 = vtanh.pop %v1179
      %v1356 = vtanh.pop %v1182
      %v1357 = vtanh.pop %v1187
      %v1358 = vtanh.pop %v1190
      %v1359 = vtanh.pop %v1195
      %v1360 = vtanh.pop %v1198
      %v1361 = vtanh.pop %v1203
      %v1362 = vtanh.pop %v1206
      %v1363 = vtanh.pop %v1211
      %v1364 = vtanh.pop %v1214
      %v1365 = vtanh.pop %v1219
      %v1366 = vtanh.pop %v1222
      %v1367 = vtanh.pop %v1227
      %v1368 = vtanh.pop %v1230
      %v1369 = vtanh.pop %v1235
      %v1370 = vtanh.pop %v1238
      %v1371 = vtanh.pop %v1243
      %v1372 = vtanh.pop %v1246
      %v1373 = vtanh.pop %v1251
      %v1374 = vtanh.pop %v1254
      %v1375 = vtanh.pop %v1259
      %v1376 = vtanh.pop %v1262
      %v1377 = vtanh.pop %v1267
      %v1378 = vtanh.pop %v1270
      %v1379 = vtanh.pop %v1275
      %v1380 = vtanh.pop %v1278
      %v1381 = vtanh.pop %v1283
      %v1382 = vtanh.pop %v1286
      %v1383 = vtanh.pop %v1291
      %v1384 = vtanh.pop %v1294
      %v1385 = vtanh.pop %v1299
      %v1386 = vtanh.pop %v1302
      %v1387 = vtanh.pop %v1307
      %v1388 = vtanh.pop %v1310
      %v1389 = vtanh.pop %v1315
      %v1390 = vtanh.pop %v1318
      %v1391 = vtanh.pop %v1323
      %v1392 = vtanh.pop %v1326
      %v1393 = vpack.c.bf16 %v1330, %v1329
      %v1394 = vpack.c.bf16 %v1332, %v1331
      %v1395 = vpack.c.bf16 %v1334, %v1333
      %v1396 = vpack.c.bf16 %v1336, %v1335
      %v1397 = vpack.c.bf16 %v1338, %v1337
      %v1398 = vpack.c.bf16 %v1340, %v1339
      %v1399 = vpack.c.bf16 %v1342, %v1341
      %v1400 = vpack.c.bf16 %v1344, %v1343
      %v1401 = vpack.c.bf16 %v1346, %v1345
      %v1402 = vpack.c.bf16 %v1348, %v1347
      %v1403 = vpack.c.bf16 %v1350, %v1349
      %v1404 = vpack.c.bf16 %v1352, %v1351
      %v1405 = vpack.c.bf16 %v1354, %v1353
      %v1406 = vpack.c.bf16 %v1356, %v1355
      %v1407 = vpack.c.bf16 %v1358, %v1357
      %v1408 = vpack.c.bf16 %v1360, %v1359
      %v1409 = vpack.c.bf16 %v1362, %v1361
      %v1410 = vpack.c.bf16 %v1364, %v1363
      %v1411 = vpack.c.bf16 %v1366, %v1365
      %v1412 = vpack.c.bf16 %v1368, %v1367
      %v1413 = vpack.c.bf16 %v1370, %v1369
      %v1414 = vpack.c.bf16 %v1372, %v1371
      %v1415 = vpack.c.bf16 %v1374, %v1373
      %v1416 = vpack.c.bf16 %v1376, %v1375
      %v1417 = vpack.c.bf16 %v1378, %v1377
      %v1418 = vpack.c.bf16 %v1380, %v1379
      %v1419 = vpack.c.bf16 %v1382, %v1381
      %v1420 = vpack.c.bf16 %v1384, %v1383
      %v1421 = vpack.c.bf16 %v1386, %v1385
      %v1422 = vpack.c.bf16 %v1388, %v1387
      %v1423 = vpack.c.bf16 %v1390, %v1389
      %v1424 = vpack.c.bf16 %v1392, %v1391
      %s1425 = scalar_lea.vmem %s3, 64
      %v1426 = vld [vmem:[%s1425] sm:$0xf]
      %v1427 = vld [vmem:[%s1425 + $0x4] sm:$0xf]
      %v1428 = vld [vmem:[%s1425 + $0x8] sm:$0xf]
      %v1429 = vld [vmem:[%s1425 + $0xc] sm:$0xf]
      %v1430 = vld [vmem:[%s1425 + $0x10] sm:$0xf]
      %v1431 = vld [vmem:[%s1425 + $0x14] sm:$0xf]
      %v1432 = vld [vmem:[%s1425 + $0x18] sm:$0xf]
      %v1433 = vld [vmem:[%s1425 + $0x1c] sm:$0xf]
      %v1434 = vld [vmem:[%s1425 + $0x20] sm:$0xf]
      %v1435 = vld [vmem:[%s1425 + $0x24] sm:$0xf]
      %v1436 = vld [vmem:[%s1425 + $0x28] sm:$0xf]
      %v1437 = vld [vmem:[%s1425 + $0x2c] sm:$0xf]
      %v1438 = vld [vmem:[%s1425 + $0x30] sm:$0xf]
      %v1439 = vld [vmem:[%s1425 + $0x34] sm:$0xf]
      %v1440 = vld [vmem:[%s1425 + $0x38] sm:$0xf]
      %v1441 = vld [vmem:[%s1425 + $0x3c] sm:$0xf]
      %s1442 = scalar_lea.vmem %s4, 1
      %v1443 = vld [vmem:[%s1442] sm:$0x1]
      %v1445 = vlaneseq
      %v1446 = vshrl.u32 %v1445, 7
      %v1447 = vsub.s32 0, %v1446
      %v1448 = vrot.slane %v1443, %v1447
      %v1466 = vunpack.c.l.b16 %v1426
      %v1467 = vunpack.c.l.b16 %v1427
      %v1468 = vunpack.c.l.b16 %v1428
      %v1469 = vunpack.c.l.b16 %v1429
      %v1470 = vunpack.c.l.b16 %v1430
      %v1471 = vunpack.c.l.b16 %v1431
      %v1472 = vunpack.c.l.b16 %v1432
      %v1473 = vunpack.c.l.b16 %v1433
      %v1474 = vunpack.c.l.b16 %v1434
      %v1475 = vunpack.c.l.b16 %v1435
      %v1476 = vunpack.c.l.b16 %v1436
      %v1477 = vunpack.c.l.b16 %v1437
      %v1478 = vunpack.c.l.b16 %v1438
      %v1479 = vunpack.c.l.b16 %v1439
      %v1480 = vunpack.c.l.b16 %v1440
      %v1481 = vunpack.c.l.b16 %v1441
      %v1482 = vpack.c.b16 %v1467, %v1466
      %v1483 = vpack.c.b16 %v1469, %v1468
      %v1484 = vpack.c.b16 %v1471, %v1470
      %v1485 = vpack.c.b16 %v1473, %v1472
      %v1486 = vpack.c.b16 %v1475, %v1474
      %v1487 = vpack.c.b16 %v1477, %v1476
      %v1488 = vpack.c.b16 %v1479, %v1478
      %v1489 = vpack.c.b16 %v1481, %v1480
      %1498 = vmatprep.subr.bf16.mxu0 0
      %1499 = vmatpush1.bf16.msra.mxu0 %v1482
      %1500 = vmatprep.subr.bf16.mxu0 0
      %1501 = vmatpush1.bf16.msra.mxu0 %v1483
      %1502 = vmatprep.subr.bf16.mxu0 0
      %1503 = vmatpush1.bf16.msra.mxu0 %v1484
      %1504 = vmatprep.subr.bf16.mxu0 0
      %1505 = vmatpush1.bf16.msra.mxu0 %v1485
      %1506 = vmatprep.subr.bf16.mxu0 0
      %1507 = vmatpush1.bf16.msra.mxu0 %v1486
      %1508 = vmatprep.subr.bf16.mxu0 0
      %1509 = vmatpush1.bf16.msra.mxu0 %v1487
      %1510 = vmatprep.subr.bf16.mxu0 0
      %1511 = vmatpush1.bf16.msra.mxu0 %v1488
      %1512 = vmatprep.subr.bf16.mxu0 0
      %1513 = vmatpush1.bf16.msra.mxu0 %v1489
      %1514 = vmatprep.subr.bf16.mxu0 0
      %1515 = vmatpush1.bf16.msra.mxu0 0
      %1516 = vmatprep.subr.bf16.mxu0 0
      %1517 = vmatpush1.bf16.msra.mxu0 0
      %1518 = vmatprep.subr.bf16.mxu0 0
      %1519 = vmatpush1.bf16.msra.mxu0 0
      %1520 = vmatprep.subr.bf16.mxu0 0
      %1521 = vmatpush1.bf16.msra.mxu0 0
      %1522 = vmatprep.subr.bf16.mxu0 0
      %1523 = vmatpush1.bf16.msra.mxu0 0
      %1524 = vmatprep.subr.bf16.mxu0 0
      %1525 = vmatpush1.bf16.msra.mxu0 0
      %1526 = vmatprep.subr.bf16.mxu0 0
      %1527 = vmatpush1.bf16.msra.mxu0 0
      %1528 = vmatprep.subr.bf16.mxu0 0
      %1529 = vmatpush1.bf16.msra.mxu0 0
      %1530 = vmatprep.mubr.bf16.mxu0 0
      %1531 = vmatmul.mubr.bf16.gmra.mrb[0].mxu0 %v1393
      %v1532 = vpop.f32.mrb[0].mxu0
      %v1533 = vadd.f32 %v1448, %v1532
      %v1534 = vpop.f32.mrb[0].mxu0
      %v1535 = vpop.f32.mrb[0].mxu0
      %v1536 = vadd.f32 %v1448, %v1535
      %v1537 = vpop.f32.mrb[0].mxu0
      %1538 = vmatprep.mubr.bf16.mxu0 0
      %1539 = vmatmul.mubr.bf16.gmra.mrb[0].mxu0 %v1394
      %v1540 = vpop.f32.mrb[0].mxu0
      %v1541 = vadd.f32 %v1448, %v1540
      %v1542 = vpop.f32.mrb[0].mxu0
      %v1543 = vpop.f32.mrb[0].mxu0
      %v1544 = vadd.f32 %v1448, %v1543
      %v1545 = vpop.f32.mrb[0].mxu0
      %1546 = vmatprep.mubr.bf16.mxu0 0
      %1547 = vmatmul.mubr.bf16.gmra.mrb[0].mxu0 %v1395
      %v1548 = vpop.f32.mrb[0].mxu0
      %v1549 = vadd.f32 %v1448, %v1548
      %v1550 = vpop.f32.mrb[0].mxu0
      %v1551 = vpop.f32.mrb[0].mxu0
      %v1552 = vadd.f32 %v1448, %v1551
      %v1553 = vpop.f32.mrb[0].mxu0
      %1554 = vmatprep.mubr.bf16.mxu0 0
      %1555 = vmatmul.mubr.bf16.gmra.mrb[0].mxu0 %v1396
      %v1556 = vpop.f32.mrb[0].mxu0
      %v1557 = vadd.f32 %v1448, %v1556
      %v1558 = vpop.f32.mrb[0].mxu0
      %v1559 = vpop.f32.mrb[0].mxu0
      %v1560 = vadd.f32 %v1448, %v1559
      %v1561 = vpop.f32.mrb[0].mxu0
      %1562 = vmatprep.mubr.bf16.mxu0 0
      %1563 = vmatmul.mubr.bf16.gmra.mrb[0].mxu0 %v1397
      %v1564 = vpop.f32.mrb[0].mxu0
      %v1565 = vadd.f32 %v1448, %v1564
      %v1566 = vpop.f32.mrb[0].mxu0
      %v1567 = vpop.f32.mrb[0].mxu0
      %v1568 = vadd.f32 %v1448, %v1567
      %v1569 = vpop.f32.mrb[0].mxu0
      %1570 = vmatprep.mubr.bf16.mxu0 0
      %1571 = vmatmul.mubr.bf16.gmra.mrb[0].mxu0 %v1398
      %v1572 = vpop.f32.mrb[0].mxu0
      %v1573 = vadd.f32 %v1448, %v1572
      %v1574 = vpop.f32.mrb[0].mxu0
      %v1575 = vpop.f32.mrb[0].mxu0
      %v1576 = vadd.f32 %v1448, %v1575
      %v1577 = vpop.f32.mrb[0].mxu0
      %1578 = vmatprep.mubr.bf16.mxu0 0
      %1579 = vmatmul.mubr.bf16.gmra.mrb[0].mxu0 %v1399
      %v1580 = vpop.f32.mrb[0].mxu0
      %v1581 = vadd.f32 %v1448, %v1580
      %v1582 = vpop.f32.mrb[0].mxu0
      %v1583 = vpop.f32.mrb[0].mxu0
      %v1584 = vadd.f32 %v1448, %v1583
      %v1585 = vpop.f32.mrb[0].mxu0
      %1586 = vmatprep.mubr.bf16.mxu0 0
      %1587 = vmatmul.mubr.bf16.gmra.mrb[0].mxu0 %v1400
      %v1588 = vpop.f32.mrb[0].mxu0
      %v1589 = vadd.f32 %v1448, %v1588
      %v1590 = vpop.f32.mrb[0].mxu0
      %v1591 = vpop.f32.mrb[0].mxu0
      %v1592 = vadd.f32 %v1448, %v1591
      %v1593 = vpop.f32.mrb[0].mxu0
      %1594 = vmatprep.mubr.bf16.mxu0 0
      %1595 = vmatmul.mubr.bf16.gmra.mrb[0].mxu0 %v1401
      %v1596 = vpop.f32.mrb[0].mxu0
      %v1597 = vadd.f32 %v1448, %v1596
      %v1598 = vpop.f32.mrb[0].mxu0
      %v1599 = vpop.f32.mrb[0].mxu0
      %v1600 = vadd.f32 %v1448, %v1599
      %v1601 = vpop.f32.mrb[0].mxu0
      %1602 = vmatprep.mubr.bf16.mxu0 0
      %1603 = vmatmul.mubr.bf16.gmra.mrb[0].mxu0 %v1402
      %v1604 = vpop.f32.mrb[0].mxu0
      %v1605 = vadd.f32 %v1448, %v1604
      %v1606 = vpop.f32.mrb[0].mxu0
      %v1607 = vpop.f32.mrb[0].mxu0
      %v1608 = vadd.f32 %v1448, %v1607
      %v1609 = vpop.f32.mrb[0].mxu0
      %1610 = vmatprep.mubr.bf16.mxu0 0
      %1611 = vmatmul.mubr.bf16.gmra.mrb[0].mxu0 %v1403
      %v1612 = vpop.f32.mrb[0].mxu0
      %v1613 = vadd.f32 %v1448, %v1612
      %v1614 = vpop.f32.mrb[0].mxu0
      %v1615 = vpop.f32.mrb[0].mxu0
      %v1616 = vadd.f32 %v1448, %v1615
      %v1617 = vpop.f32.mrb[0].mxu0
      %1618 = vmatprep.mubr.bf16.mxu0 0
      %1619 = vmatmul.mubr.bf16.gmra.mrb[0].mxu0 %v1404
      %v1620 = vpop.f32.mrb[0].mxu0
      %v1621 = vadd.f32 %v1448, %v1620
      %v1622 = vpop.f32.mrb[0].mxu0
      %v1623 = vpop.f32.mrb[0].mxu0
      %v1624 = vadd.f32 %v1448, %v1623
      %v1625 = vpop.f32.mrb[0].mxu0
      %1626 = vmatprep.mubr.bf16.mxu0 0
      %1627 = vmatmul.mubr.bf16.gmra.mrb[0].mxu0 %v1405
      %v1628 = vpop.f32.mrb[0].mxu0
      %v1629 = vadd.f32 %v1448, %v1628
      %v1630 = vpop.f32.mrb[0].mxu0
      %v1631 = vpop.f32.mrb[0].mxu0
      %v1632 = vadd.f32 %v1448, %v1631
      %v1633 = vpop.f32.mrb[0].mxu0
      %1634 = vmatprep.mubr.bf16.mxu0 0
      %1635 = vmatmul.mubr.bf16.gmra.mrb[0].mxu0 %v1406
      %v1636 = vpop.f32.mrb[0].mxu0
      %v1637 = vadd.f32 %v1448, %v1636
      %v1638 = vpop.f32.mrb[0].mxu0
      %v1639 = vpop.f32.mrb[0].mxu0
      %v1640 = vadd.f32 %v1448, %v1639
      %v1641 = vpop.f32.mrb[0].mxu0
      %1642 = vmatprep.mubr.bf16.mxu0 0
      %1643 = vmatmul.mubr.bf16.gmra.mrb[0].mxu0 %v1407
      %v1644 = vpop.f32.mrb[0].mxu0
      %v1645 = vadd.f32 %v1448, %v1644
      %v1646 = vpop.f32.mrb[0].mxu0
      %v1647 = vpop.f32.mrb[0].mxu0
      %v1648 = vadd.f32 %v1448, %v1647
      %v1649 = vpop.f32.mrb[0].mxu0
      %1650 = vmatprep.mubr.bf16.mxu0 0
      %1651 = vmatmul.mubr.bf16.gmra.mrb[0].mxu0 %v1408
      %v1652 = vpop.f32.mrb[0].mxu0
      %v1653 = vadd.f32 %v1448, %v1652
      %v1654 = vpop.f32.mrb[0].mxu0
      %v1655 = vpop.f32.mrb[0].mxu0
      %v1656 = vadd.f32 %v1448, %v1655
      %v1657 = vpop.f32.mrb[0].mxu0
      %1658 = vmatprep.mubr.bf16.mxu0 0
      %1659 = vmatmul.mubr.bf16.gmra.mrb[0].mxu0 %v1409
      %v1660 = vpop.f32.mrb[0].mxu0
      %v1661 = vadd.f32 %v1448, %v1660
      %v1662 = vpop.f32.mrb[0].mxu0
      %v1663 = vpop.f32.mrb[0].mxu0
      %v1664 = vadd.f32 %v1448, %v1663
      %v1665 = vpop.f32.mrb[0].mxu0
      %1666 = vmatprep.mubr.bf16.mxu0 0
      %1667 = vmatmul.mubr.bf16.gmra.mrb[0].mxu0 %v1410
      %v1668 = vpop.f32.mrb[0].mxu0
      %v1669 = vadd.f32 %v1448, %v1668
      %v1670 = vpop.f32.mrb[0].mxu0
      %v1671 = vpop.f32.mrb[0].mxu0
      %v1672 = vadd.f32 %v1448, %v1671
      %v1673 = vpop.f32.mrb[0].mxu0
      %1674 = vmatprep.mubr.bf16.mxu0 0
      %1675 = vmatmul.mubr.bf16.gmra.mrb[0].mxu0 %v1411
      %v1676 = vpop.f32.mrb[0].mxu0
      %v1677 = vadd.f32 %v1448, %v1676
      %v1678 = vpop.f32.mrb[0].mxu0
      %v1679 = vpop.f32.mrb[0].mxu0
      %v1680 = vadd.f32 %v1448, %v1679
      %v1681 = vpop.f32.mrb[0].mxu0
      %1682 = vmatprep.mubr.bf16.mxu0 0
      %1683 = vmatmul.mubr.bf16.gmra.mrb[0].mxu0 %v1412
      %v1684 = vpop.f32.mrb[0].mxu0
      %v1685 = vadd.f32 %v1448, %v1684
      %v1686 = vpop.f32.mrb[0].mxu0
      %v1687 = vpop.f32.mrb[0].mxu0
      %v1688 = vadd.f32 %v1448, %v1687
      %v1689 = vpop.f32.mrb[0].mxu0
      %1690 = vmatprep.mubr.bf16.mxu0 0
      %1691 = vmatmul.mubr.bf16.gmra.mrb[0].mxu0 %v1413
      %v1692 = vpop.f32.mrb[0].mxu0
      %v1693 = vadd.f32 %v1448, %v1692
      %v1694 = vpop.f32.mrb[0].mxu0
      %v1695 = vpop.f32.mrb[0].mxu0
      %v1696 = vadd.f32 %v1448, %v1695
      %v1697 = vpop.f32.mrb[0].mxu0
      %1698 = vmatprep.mubr.bf16.mxu0 0
      %1699 = vmatmul.mubr.bf16.gmra.mrb[0].mxu0 %v1414
      %v1700 = vpop.f32.mrb[0].mxu0
      %v1701 = vadd.f32 %v1448, %v1700
      %v1702 = vpop.f32.mrb[0].mxu0
      %v1703 = vpop.f32.mrb[0].mxu0
      %v1704 = vadd.f32 %v1448, %v1703
      %v1705 = vpop.f32.mrb[0].mxu0
      %1706 = vmatprep.mubr.bf16.mxu0 0
      %1707 = vmatmul.mubr.bf16.gmra.mrb[0].mxu0 %v1415
      %v1708 = vpop.f32.mrb[0].mxu0
      %v1709 = vadd.f32 %v1448, %v1708
      %v1710 = vpop.f32.mrb[0].mxu0
      %v1711 = vpop.f32.mrb[0].mxu0
      %v1712 = vadd.f32 %v1448, %v1711
      %v1713 = vpop.f32.mrb[0].mxu0
      %1714 = vmatprep.mubr.bf16.mxu0 0
      %1715 = vmatmul.mubr.bf16.gmra.mrb[0].mxu0 %v1416
      %v1716 = vpop.f32.mrb[0].mxu0
      %v1717 = vadd.f32 %v1448, %v1716
      %v1718 = vpop.f32.mrb[0].mxu0
      %v1719 = vpop.f32.mrb[0].mxu0
      %v1720 = vadd.f32 %v1448, %v1719
      %v1721 = vpop.f32.mrb[0].mxu0
      %1722 = vmatprep.mubr.bf16.mxu0 0
      %1723 = vmatmul.mubr.bf16.gmra.mrb[0].mxu0 %v1417
      %v1724 = vpop.f32.mrb[0].mxu0
      %v1725 = vadd.f32 %v1448, %v1724
      %v1726 = vpop.f32.mrb[0].mxu0
      %v1727 = vpop.f32.mrb[0].mxu0
      %v1728 = vadd.f32 %v1448, %v1727
      %v1729 = vpop.f32.mrb[0].mxu0
      %1730 = vmatprep.mubr.bf16.mxu0 0
      %1731 = vmatmul.mubr.bf16.gmra.mrb[0].mxu0 %v1418
      %v1732 = vpop.f32.mrb[0].mxu0
      %v1733 = vadd.f32 %v1448, %v1732
      %v1734 = vpop.f32.mrb[0].mxu0
      %v1735 = vpop.f32.mrb[0].mxu0
      %v1736 = vadd.f32 %v1448, %v1735
      %v1737 = vpop.f32.mrb[0].mxu0
      %1738 = vmatprep.mubr.bf16.mxu0 0
      %1739 = vmatmul.mubr.bf16.gmra.mrb[0].mxu0 %v1419
      %v1740 = vpop.f32.mrb[0].mxu0
      %v1741 = vadd.f32 %v1448, %v1740
      %v1742 = vpop.f32.mrb[0].mxu0
      %v1743 = vpop.f32.mrb[0].mxu0
      %v1744 = vadd.f32 %v1448, %v1743
      %v1745 = vpop.f32.mrb[0].mxu0
      %1746 = vmatprep.mubr.bf16.mxu0 0
      %1747 = vmatmul.mubr.bf16.gmra.mrb[0].mxu0 %v1420
      %v1748 = vpop.f32.mrb[0].mxu0
      %v1749 = vadd.f32 %v1448, %v1748
      %v1750 = vpop.f32.mrb[0].mxu0
      %v1751 = vpop.f32.mrb[0].mxu0
      %v1752 = vadd.f32 %v1448, %v1751
      %v1753 = vpop.f32.mrb[0].mxu0
      %1754 = vmatprep.mubr.bf16.mxu0 0
      %1755 = vmatmul.mubr.bf16.gmra.mrb[0].mxu0 %v1421
      %v1756 = vpop.f32.mrb[0].mxu0
      %v1757 = vadd.f32 %v1448, %v1756
      %v1758 = vpop.f32.mrb[0].mxu0
      %v1759 = vpop.f32.mrb[0].mxu0
      %v1760 = vadd.f32 %v1448, %v1759
      %v1761 = vpop.f32.mrb[0].mxu0
      %1762 = vmatprep.mubr.bf16.mxu0 0
      %1763 = vmatmul.mubr.bf16.gmra.mrb[0].mxu0 %v1422
      %v1764 = vpop.f32.mrb[0].mxu0
      %v1765 = vadd.f32 %v1448, %v1764
      %v1766 = vpop.f32.mrb[0].mxu0
      %v1767 = vpop.f32.mrb[0].mxu0
      %v1768 = vadd.f32 %v1448, %v1767
      %v1769 = vpop.f32.mrb[0].mxu0
      %1770 = vmatprep.mubr.bf16.mxu0 0
      %1771 = vmatmul.mubr.bf16.gmra.mrb[0].mxu0 %v1423
      %v1772 = vpop.f32.mrb[0].mxu0
      %v1773 = vadd.f32 %v1448, %v1772
      %v1774 = vpop.f32.mrb[0].mxu0
      %v1775 = vpop.f32.mrb[0].mxu0
      %v1776 = vadd.f32 %v1448, %v1775
      %v1777 = vpop.f32.mrb[0].mxu0
      %1778 = vmatprep.mubr.bf16.mxu0 0
      %1779 = vmatmul.mubr.bf16.gmra.mrb[0].mxu0 %v1424
      %v1780 = vpop.f32.mrb[0].mxu0
      %v1781 = vadd.f32 %v1448, %v1780
      %v1782 = vpop.f32.mrb[0].mxu0
      %v1783 = vpop.f32.mrb[0].mxu0
      %v1784 = vadd.f32 %v1448, %v1783
      %v1785 = vpop.f32.mrb[0].mxu0
      %1786 = vdwg.mxu0
      %v1787 = vtanh.pop %v1533
      %v1788 = vtanh.pop %v1536
      %v1789 = vtanh.pop %v1541
      %v1790 = vtanh.pop %v1544
      %v1791 = vtanh.pop %v1549
      %v1792 = vtanh.pop %v1552
      %v1793 = vtanh.pop %v1557
      %v1794 = vtanh.pop %v1560
      %v1795 = vtanh.pop %v1565
      %v1796 = vtanh.pop %v1568
      %v1797 = vtanh.pop %v1573
      %v1798 = vtanh.pop %v1576
      %v1799 = vtanh.pop %v1581
      %v1800 = vtanh.pop %v1584
      %v1801 = vtanh.pop %v1589
      %v1802 = vtanh.pop %v1592
      %v1803 = vtanh.pop %v1597
      %v1804 = vtanh.pop %v1600
      %v1805 = vtanh.pop %v1605
      %v1806 = vtanh.pop %v1608
      %v1807 = vtanh.pop %v1613
      %v1808 = vtanh.pop %v1616
      %v1809 = vtanh.pop %v1621
      %v1810 = vtanh.pop %v1624
      %v1811 = vtanh.pop %v1629
      %v1812 = vtanh.pop %v1632
      %v1813 = vtanh.pop %v1637
      %v1814 = vtanh.pop %v1640
      %v1815 = vtanh.pop %v1645
      %v1816 = vtanh.pop %v1648
      %v1817 = vtanh.pop %v1653
      %v1818 = vtanh.pop %v1656
      %v1819 = vtanh.pop %v1661
      %v1820 = vtanh.pop %v1664
      %v1821 = vtanh.pop %v1669
      %v1822 = vtanh.pop %v1672
      %v1823 = vtanh.pop %v1677
      %v1824 = vtanh.pop %v1680
      %v1825 = vtanh.pop %v1685
      %v1826 = vtanh.pop %v1688
      %v1827 = vtanh.pop %v1693
      %v1828 = vtanh.pop %v1696
      %v1829 = vtanh.pop %v1701
      %v1830 = vtanh.pop %v1704
      %v1831 = vtanh.pop %v1709
      %v1832 = vtanh.pop %v1712
      %v1833 = vtanh.pop %v1717
      %v1834 = vtanh.pop %v1720
      %v1835 = vtanh.pop %v1725
      %v1836 = vtanh.pop %v1728
      %v1837 = vtanh.pop %v1733
      %v1838 = vtanh.pop %v1736
      %v1839 = vtanh.pop %v1741
      %v1840 = vtanh.pop %v1744
      %v1841 = vtanh.pop %v1749
      %v1842 = vtanh.pop %v1752
      %v1843 = vtanh.pop %v1757
      %v1844 = vtanh.pop %v1760
      %v1845 = vtanh.pop %v1765
      %v1846 = vtanh.pop %v1768
      %v1847 = vtanh.pop %v1773
      %v1848 = vtanh.pop %v1776
      %v1849 = vtanh.pop %v1781
      %v1850 = vtanh.pop %v1784
      %v1851 = vpack.c.bf16 %v1788, %v1787
      %v1852 = vpack.c.bf16 %v1790, %v1789
      %v1853 = vpack.c.bf16 %v1792, %v1791
      %v1854 = vpack.c.bf16 %v1794, %v1793
      %v1855 = vpack.c.bf16 %v1796, %v1795
      %v1856 = vpack.c.bf16 %v1798, %v1797
      %v1857 = vpack.c.bf16 %v1800, %v1799
      %v1858 = vpack.c.bf16 %v1802, %v1801
      %v1859 = vpack.c.bf16 %v1804, %v1803
      %v1860 = vpack.c.bf16 %v1806, %v1805
      %v1861 = vpack.c.bf16 %v1808, %v1807
      %v1862 = vpack.c.bf16 %v1810, %v1809
      %v1863 = vpack.c.bf16 %v1812, %v1811
      %v1864 = vpack.c.bf16 %v1814, %v1813
      %v1865 = vpack.c.bf16 %v1816, %v1815
      %v1866 = vpack.c.bf16 %v1818, %v1817
      %v1867 = vpack.c.bf16 %v1820, %v1819
      %v1868 = vpack.c.bf16 %v1822, %v1821
      %v1869 = vpack.c.bf16 %v1824, %v1823
      %v1870 = vpack.c.bf16 %v1826, %v1825
      %v1871 = vpack.c.bf16 %v1828, %v1827
      %v1872 = vpack.c.bf16 %v1830, %v1829
      %v1873 = vpack.c.bf16 %v1832, %v1831
      %v1874 = vpack.c.bf16 %v1834, %v1833
      %v1875 = vpack.c.bf16 %v1836, %v1835
      %v1876 = vpack.c.bf16 %v1838, %v1837
      %v1877 = vpack.c.bf16 %v1840, %v1839
      %v1878 = vpack.c.bf16 %v1842, %v1841
      %v1879 = vpack.c.bf16 %v1844, %v1843
      %v1880 = vpack.c.bf16 %v1846, %v1845
      %v1881 = vpack.c.bf16 %v1848, %v1847
      %v1882 = vpack.c.bf16 %v1850, %v1849
      %s1883 = scalar_lea.vmem %s3, 128
      %v1884 = vld [vmem:[%s1883] sm:$0xf]
      %v1885 = vld [vmem:[%s1883 + $0x4] sm:$0xf]
      %v1886 = vld [vmem:[%s1883 + $0x8] sm:$0xf]
      %v1887 = vld [vmem:[%s1883 + $0xc] sm:$0xf]
      %v1888 = vld [vmem:[%s1883 + $0x10] sm:$0xf]
      %v1889 = vld [vmem:[%s1883 + $0x14] sm:$0xf]
      %v1890 = vld [vmem:[%s1883 + $0x18] sm:$0xf]
      %v1891 = vld [vmem:[%s1883 + $0x1c] sm:$0xf]
      %v1892 = vld [vmem:[%s1883 + $0x20] sm:$0xf]
      %v1893 = vld [vmem:[%s1883 + $0x24] sm:$0xf]
      %v1894 = vld [vmem:[%s1883 + $0x28] sm:$0xf]
      %v1895 = vld [vmem:[%s1883 + $0x2c] sm:$0xf]
      %v1896 = vld [vmem:[%s1883 + $0x30] sm:$0xf]
      %v1897 = vld [vmem:[%s1883 + $0x34] sm:$0xf]
      %v1898 = vld [vmem:[%s1883 + $0x38] sm:$0xf]
      %v1899 = vld [vmem:[%s1883 + $0x3c] sm:$0xf]
      %s1900 = scalar_lea.vmem %s4, 2
      %v1901 = vld [vmem:[%s1900] sm:$0x1]
      %v1903 = vlaneseq
      %v1904 = vshrl.u32 %v1903, 7
      %v1905 = vsub.s32 0, %v1904
      %v1906 = vrot.slane %v1901, %v1905
      %v1924 = vunpack.c.l.b16 %v1884
      %v1925 = vunpack.c.l.b16 %v1885
      %v1926 = vunpack.c.l.b16 %v1886
      %v1927 = vunpack.c.l.b16 %v1887
      %v1928 = vunpack.c.l.b16 %v1888
      %v1929 = vunpack.c.l.b16 %v1889
      %v1930 = vunpack.c.l.b16 %v1890
      %v1931 = vunpack.c.l.b16 %v1891
      %v1932 = vunpack.c.l.b16 %v1892
      %v1933 = vunpack.c.l.b16 %v1893
      %v1934 = vunpack.c.l.b16 %v1894
      %v1935 = vunpack.c.l.b16 %v1895
      %v1936 = vunpack.c.l.b16 %v1896
      %v1937 = vunpack.c.l.b16 %v1897
      %v1938 = vunpack.c.l.b16 %v1898
      %v1939 = vunpack.c.l.b16 %v1899
      %v1940 = vpack.c.b16 %v1925, %v1924
      %v1941 = vpack.c.b16 %v1927, %v1926
      %v1942 = vpack.c.b16 %v1929, %v1928
      %v1943 = vpack.c.b16 %v1931, %v1930
      %v1944 = vpack.c.b16 %v1933, %v1932
      %v1945 = vpack.c.b16 %v1935, %v1934
      %v1946 = vpack.c.b16 %v1937, %v1936
      %v1947 = vpack.c.b16 %v1939, %v1938
      %1956 = vmatprep.subr.bf16.mxu0 0
      %1957 = vmatpush1.bf16.msra.mxu0 %v1940
      %1958 = vmatprep.subr.bf16.mxu0 0
      %1959 = vmatpush1.bf16.msra.mxu0 %v1941
      %1960 = vmatprep.subr.bf16.mxu0 0
      %1961 = vmatpush1.bf16.msra.mxu0 %v1942
      %1962 = vmatprep.subr.bf16.mxu0 0
      %1963 = vmatpush1.bf16.msra.mxu0 %v1943
      %1964 = vmatprep.subr.bf16.mxu0 0
      %1965 = vmatpush1.bf16.msra.mxu0 %v1944
      %1966 = vmatprep.subr.bf16.mxu0 0
      %1967 = vmatpush1.bf16.msra.mxu0 %v1945
      %1968 = vmatprep.subr.bf16.mxu0 0
      %1969 = vmatpush1.bf16.msra.mxu0 %v1946
      %1970 = vmatprep.subr.bf16.mxu0 0
      %1971 = vmatpush1.bf16.msra.mxu0 %v1947
      %1972 = vmatprep.subr.bf16.mxu0 0
      %1973 = vmatpush1.bf16.msra.mxu0 0
      %1974 = vmatprep.subr.bf16.mxu0 0
      %1975 = vmatpush1.bf16.msra.mxu0 0
      %1976 = vmatprep.subr.bf16.mxu0 0
      %1977 = vmatpush1.bf16.msra.mxu0 0
      %1978 = vmatprep.subr.bf16.mxu0 0
      %1979 = vmatpush1.bf16.msra.mxu0 0
      %1980 = vmatprep.subr.bf16.mxu0 0
      %1981 = vmatpush1.bf16.msra.mxu0 0
      %1982 = vmatprep.subr.bf16.mxu0 0
      %1983 = vmatpush1.bf16.msra.mxu0 0
      %1984 = vmatprep.subr.bf16.mxu0 0
      %1985 = vmatpush1.bf16.msra.mxu0 0
      %1986 = vmatprep.subr.bf16.mxu0 0
      %1987 = vmatpush1.bf16.msra.mxu0 0
      %1988 = vmatprep.mubr.bf16.mxu0 0
      %1989 = vmatmul.mubr.bf16.gmra.mrb[0].mxu0 %v1851
      %v1990 = vpop.f32.mrb[0].mxu0
      %v1991 = vadd.f32 %v1906, %v1990
      %v1992 = vpop.f32.mrb[0].mxu0
      %v1993 = vpop.f32.mrb[0].mxu0
      %v1994 = vadd.f32 %v1906, %v1993
      %v1995 = vpop.f32.mrb[0].mxu0
      %1996 = vmatprep.mubr.bf16.mxu0 0
      %1997 = vmatmul.mubr.bf16.gmra.mrb[0].mxu0 %v1852
      %v1998 = vpop.f32.mrb[0].mxu0
      %v1999 = vadd.f32 %v1906, %v1998
      %v2000 = vpop.f32.mrb[0].mxu0
      %v2001 = vpop.f32.mrb[0].mxu0
      %v2002 = vadd.f32 %v1906, %v2001
      %v2003 = vpop.f32.mrb[0].mxu0
      %2004 = vmatprep.mubr.bf16.mxu0 0
      %2005 = vmatmul.mubr.bf16.gmra.mrb[0].mxu0 %v1853
      %v2006 = vpop.f32.mrb[0].mxu0
      %v2007 = vadd.f32 %v1906, %v2006
      %v2008 = vpop.f32.mrb[0].mxu0
      %v2009 = vpop.f32.mrb[0].mxu0
      %v2010 = vadd.f32 %v1906, %v2009
      %v2011 = vpop.f32.mrb[0].mxu0
      %2012 = vmatprep.mubr.bf16.mxu0 0
      %2013 = vmatmul.mubr.bf16.gmra.mrb[0].mxu0 %v1854
      %v2014 = vpop.f32.mrb[0].mxu0
      %v2015 = vadd.f32 %v1906, %v2014
      %v2016 = vpop.f32.mrb[0].mxu0
      %v2017 = vpop.f32.mrb[0].mxu0
      %v2018 = vadd.f32 %v1906, %v2017
      %v2019 = vpop.f32.mrb[0].mxu0
      %2020 = vmatprep.mubr.bf16.mxu0 0
      %2021 = vmatmul.mubr.bf16.gmra.mrb[0].mxu0 %v1855
      %v2022 = vpop.f32.mrb[0].mxu0
      %v2023 = vadd.f32 %v1906, %v2022
      %v2024 = vpop.f32.mrb[0].mxu0
      %v2025 = vpop.f32.mrb[0].mxu0
      %v2026 = vadd.f32 %v1906, %v2025
      %v2027 = vpop.f32.mrb[0].mxu0
      %2028 = vmatprep.mubr.bf16.mxu0 0
      %2029 = vmatmul.mubr.bf16.gmra.mrb[0].mxu0 %v1856
      %v2030 = vpop.f32.mrb[0].mxu0
      %v2031 = vadd.f32 %v1906, %v2030
      %v2032 = vpop.f32.mrb[0].mxu0
      %v2033 = vpop.f32.mrb[0].mxu0
      %v2034 = vadd.f32 %v1906, %v2033
      %v2035 = vpop.f32.mrb[0].mxu0
      %2036 = vmatprep.mubr.bf16.mxu0 0
      %2037 = vmatmul.mubr.bf16.gmra.mrb[0].mxu0 %v1857
      %v2038 = vpop.f32.mrb[0].mxu0
      %v2039 = vadd.f32 %v1906, %v2038
      %v2040 = vpop.f32.mrb[0].mxu0
      %v2041 = vpop.f32.mrb[0].mxu0
      %v2042 = vadd.f32 %v1906, %v2041
      %v2043 = vpop.f32.mrb[0].mxu0
      %2044 = vmatprep.mubr.bf16.mxu0 0
      %2045 = vmatmul.mubr.bf16.gmra.mrb[0].mxu0 %v1858
      %v2046 = vpop.f32.mrb[0].mxu0
      %v2047 = vadd.f32 %v1906, %v2046
      %v2048 = vpop.f32.mrb[0].mxu0
      %v2049 = vpop.f32.mrb[0].mxu0
      %v2050 = vadd.f32 %v1906, %v2049
      %v2051 = vpop.f32.mrb[0].mxu0
      %2052 = vmatprep.mubr.bf16.mxu0 0
      %2053 = vmatmul.mubr.bf16.gmra.mrb[0].mxu0 %v1859
      %v2054 = vpop.f32.mrb[0].mxu0
      %v2055 = vadd.f32 %v1906, %v2054
      %v2056 = vpop.f32.mrb[0].mxu0
      %v2057 = vpop.f32.mrb[0].mxu0
      %v2058 = vadd.f32 %v1906, %v2057
      %v2059 = vpop.f32.mrb[0].mxu0
      %2060 = vmatprep.mubr.bf16.mxu0 0
      %2061 = vmatmul.mubr.bf16.gmra.mrb[0].mxu0 %v1860
      %v2062 = vpop.f32.mrb[0].mxu0
      %v2063 = vadd.f32 %v1906, %v2062
      %v2064 = vpop.f32.mrb[0].mxu0
      %v2065 = vpop.f32.mrb[0].mxu0
      %v2066 = vadd.f32 %v1906, %v2065
      %v2067 = vpop.f32.mrb[0].mxu0
      %2068 = vmatprep.mubr.bf16.mxu0 0
      %2069 = vmatmul.mubr.bf16.gmra.mrb[0].mxu0 %v1861
      %v2070 = vpop.f32.mrb[0].mxu0
      %v2071 = vadd.f32 %v1906, %v2070
      %v2072 = vpop.f32.mrb[0].mxu0
      %v2073 = vpop.f32.mrb[0].mxu0
      %v2074 = vadd.f32 %v1906, %v2073
      %v2075 = vpop.f32.mrb[0].mxu0
      %2076 = vmatprep.mubr.bf16.mxu0 0
      %2077 = vmatmul.mubr.bf16.gmra.mrb[0].mxu0 %v1862
      %v2078 = vpop.f32.mrb[0].mxu0
      %v2079 = vadd.f32 %v1906, %v2078
      %v2080 = vpop.f32.mrb[0].mxu0
      %v2081 = vpop.f32.mrb[0].mxu0
      %v2082 = vadd.f32 %v1906, %v2081
      %v2083 = vpop.f32.mrb[0].mxu0
      %2084 = vmatprep.mubr.bf16.mxu0 0
      %2085 = vmatmul.mubr.bf16.gmra.mrb[0].mxu0 %v1863
      %v2086 = vpop.f32.mrb[0].mxu0
      %v2087 = vadd.f32 %v1906, %v2086
      %v2088 = vpop.f32.mrb[0].mxu0
      %v2089 = vpop.f32.mrb[0].mxu0
      %v2090 = vadd.f32 %v1906, %v2089
      %v2091 = vpop.f32.mrb[0].mxu0
      %2092 = vmatprep.mubr.bf16.mxu0 0
      %2093 = vmatmul.mubr.bf16.gmra.mrb[0].mxu0 %v1864
      %v2094 = vpop.f32.mrb[0].mxu0
      %v2095 = vadd.f32 %v1906, %v2094
      %v2096 = vpop.f32.mrb[0].mxu0
      %v2097 = vpop.f32.mrb[0].mxu0
      %v2098 = vadd.f32 %v1906, %v2097
      %v2099 = vpop.f32.mrb[0].mxu0
      %2100 = vmatprep.mubr.bf16.mxu0 0
      %2101 = vmatmul.mubr.bf16.gmra.mrb[0].mxu0 %v1865
      %v2102 = vpop.f32.mrb[0].mxu0
      %v2103 = vadd.f32 %v1906, %v2102
      %v2104 = vpop.f32.mrb[0].mxu0
      %v2105 = vpop.f32.mrb[0].mxu0
      %v2106 = vadd.f32 %v1906, %v2105
      %v2107 = vpop.f32.mrb[0].mxu0
      %2108 = vmatprep.mubr.bf16.mxu0 0
      %2109 = vmatmul.mubr.bf16.gmra.mrb[0].mxu0 %v1866
      %v2110 = vpop.f32.mrb[0].mxu0
      %v2111 = vadd.f32 %v1906, %v2110
      %v2112 = vpop.f32.mrb[0].mxu0
      %v2113 = vpop.f32.mrb[0].mxu0
      %v2114 = vadd.f32 %v1906, %v2113
      %v2115 = vpop.f32.mrb[0].mxu0
      %2116 = vmatprep.mubr.bf16.mxu0 0
      %2117 = vmatmul.mubr.bf16.gmra.mrb[0].mxu0 %v1867
      %v2118 = vpop.f32.mrb[0].mxu0
      %v2119 = vadd.f32 %v1906, %v2118
      %v2120 = vpop.f32.mrb[0].mxu0
      %v2121 = vpop.f32.mrb[0].mxu0
      %v2122 = vadd.f32 %v1906, %v2121
      %v2123 = vpop.f32.mrb[0].mxu0
      %2124 = vmatprep.mubr.bf16.mxu0 0
      %2125 = vmatmul.mubr.bf16.gmra.mrb[0].mxu0 %v1868
      %v2126 = vpop.f32.mrb[0].mxu0
      %v2127 = vadd.f32 %v1906, %v2126
      %v2128 = vpop.f32.mrb[0].mxu0
      %v2129 = vpop.f32.mrb[0].mxu0
      %v2130 = vadd.f32 %v1906, %v2129
      %v2131 = vpop.f32.mrb[0].mxu0
      %2132 = vmatprep.mubr.bf16.mxu0 0
      %2133 = vmatmul.mubr.bf16.gmra.mrb[0].mxu0 %v1869
      %v2134 = vpop.f32.mrb[0].mxu0
      %v2135 = vadd.f32 %v1906, %v2134
      %v2136 = vpop.f32.mrb[0].mxu0
      %v2137 = vpop.f32.mrb[0].mxu0
      %v2138 = vadd.f32 %v1906, %v2137
      %v2139 = vpop.f32.mrb[0].mxu0
      %2140 = vmatprep.mubr.bf16.mxu0 0
      %2141 = vmatmul.mubr.bf16.gmra.mrb[0].mxu0 %v1870
      %v2142 = vpop.f32.mrb[0].mxu0
      %v2143 = vadd.f32 %v1906, %v2142
      %v2144 = vpop.f32.mrb[0].mxu0
      %v2145 = vpop.f32.mrb[0].mxu0
      %v2146 = vadd.f32 %v1906, %v2145
      %v2147 = vpop.f32.mrb[0].mxu0
      %2148 = vmatprep.mubr.bf16.mxu0 0
      %2149 = vmatmul.mubr.bf16.gmra.mrb[0].mxu0 %v1871
      %v2150 = vpop.f32.mrb[0].mxu0
      %v2151 = vadd.f32 %v1906, %v2150
      %v2152 = vpop.f32.mrb[0].mxu0
      %v2153 = vpop.f32.mrb[0].mxu0
      %v2154 = vadd.f32 %v1906, %v2153
      %v2155 = vpop.f32.mrb[0].mxu0
      %2156 = vmatprep.mubr.bf16.mxu0 0
      %2157 = vmatmul.mubr.bf16.gmra.mrb[0].mxu0 %v1872
      %v2158 = vpop.f32.mrb[0].mxu0
      %v2159 = vadd.f32 %v1906, %v2158
      %v2160 = vpop.f32.mrb[0].mxu0
      %v2161 = vpop.f32.mrb[0].mxu0
      %v2162 = vadd.f32 %v1906, %v2161
      %v2163 = vpop.f32.mrb[0].mxu0
      %2164 = vmatprep.mubr.bf16.mxu0 0
      %2165 = vmatmul.mubr.bf16.gmra.mrb[0].mxu0 %v1873
      %v2166 = vpop.f32.mrb[0].mxu0
      %v2167 = vadd.f32 %v1906, %v2166
      %v2168 = vpop.f32.mrb[0].mxu0
      %v2169 = vpop.f32.mrb[0].mxu0
      %v2170 = vadd.f32 %v1906, %v2169
      %v2171 = vpop.f32.mrb[0].mxu0
      %2172 = vmatprep.mubr.bf16.mxu0 0
      %2173 = vmatmul.mubr.bf16.gmra.mrb[0].mxu0 %v1874
      %v2174 = vpop.f32.mrb[0].mxu0
      %v2175 = vadd.f32 %v1906, %v2174
      %v2176 = vpop.f32.mrb[0].mxu0
      %v2177 = vpop.f32.mrb[0].mxu0
      %v2178 = vadd.f32 %v1906, %v2177
      %v2179 = vpop.f32.mrb[0].mxu0
      %2180 = vmatprep.mubr.bf16.mxu0 0
      %2181 = vmatmul.mubr.bf16.gmra.mrb[0].mxu0 %v1875
      %v2182 = vpop.f32.mrb[0].mxu0
      %v2183 = vadd.f32 %v1906, %v2182
      %v2184 = vpop.f32.mrb[0].mxu0
      %v2185 = vpop.f32.mrb[0].mxu0
      %v2186 = vadd.f32 %v1906, %v2185
      %v2187 = vpop.f32.mrb[0].mxu0
      %2188 = vmatprep.mubr.bf16.mxu0 0
      %2189 = vmatmul.mubr.bf16.gmra.mrb[0].mxu0 %v1876
      %v2190 = vpop.f32.mrb[0].mxu0
      %v2191 = vadd.f32 %v1906, %v2190
      %v2192 = vpop.f32.mrb[0].mxu0
      %v2193 = vpop.f32.mrb[0].mxu0
      %v2194 = vadd.f32 %v1906, %v2193
      %v2195 = vpop.f32.mrb[0].mxu0
      %2196 = vmatprep.mubr.bf16.mxu0 0
      %2197 = vmatmul.mubr.bf16.gmra.mrb[0].mxu0 %v1877
      %v2198 = vpop.f32.mrb[0].mxu0
      %v2199 = vadd.f32 %v1906, %v2198
      %v2200 = vpop.f32.mrb[0].mxu0
      %v2201 = vpop.f32.mrb[0].mxu0
      %v2202 = vadd.f32 %v1906, %v2201
      %v2203 = vpop.f32.mrb[0].mxu0
      %2204 = vmatprep.mubr.bf16.mxu0 0
      %2205 = vmatmul.mubr.bf16.gmra.mrb[0].mxu0 %v1878
      %v2206 = vpop.f32.mrb[0].mxu0
      %v2207 = vadd.f32 %v1906, %v2206
      %v2208 = vpop.f32.mrb[0].mxu0
      %v2209 = vpop.f32.mrb[0].mxu0
      %v2210 = vadd.f32 %v1906, %v2209
      %v2211 = vpop.f32.mrb[0].mxu0
      %2212 = vmatprep.mubr.bf16.mxu0 0
      %2213 = vmatmul.mubr.bf16.gmra.mrb[0].mxu0 %v1879
      %v2214 = vpop.f32.mrb[0].mxu0
      %v2215 = vadd.f32 %v1906, %v2214
      %v2216 = vpop.f32.mrb[0].mxu0
      %v2217 = vpop.f32.mrb[0].mxu0
      %v2218 = vadd.f32 %v1906, %v2217
      %v2219 = vpop.f32.mrb[0].mxu0
      %2220 = vmatprep.mubr.bf16.mxu0 0
      %2221 = vmatmul.mubr.bf16.gmra.mrb[0].mxu0 %v1880
      %v2222 = vpop.f32.mrb[0].mxu0
      %v2223 = vadd.f32 %v1906, %v2222
      %v2224 = vpop.f32.mrb[0].mxu0
      %v2225 = vpop.f32.mrb[0].mxu0
      %v2226 = vadd.f32 %v1906, %v2225
      %v2227 = vpop.f32.mrb[0].mxu0
      %2228 = vmatprep.mubr.bf16.mxu0 0
      %2229 = vmatmul.mubr.bf16.gmra.mrb[0].mxu0 %v1881
      %v2230 = vpop.f32.mrb[0].mxu0
      %v2231 = vadd.f32 %v1906, %v2230
      %v2232 = vpop.f32.mrb[0].mxu0
      %v2233 = vpop.f32.mrb[0].mxu0
      %v2234 = vadd.f32 %v1906, %v2233
      %v2235 = vpop.f32.mrb[0].mxu0
      %2236 = vmatprep.mubr.bf16.mxu0 0
      %2237 = vmatmul.mubr.bf16.gmra.mrb[0].mxu0 %v1882
      %v2238 = vpop.f32.mrb[0].mxu0
      %v2239 = vadd.f32 %v1906, %v2238
      %v2240 = vpop.f32.mrb[0].mxu0
      %v2241 = vpop.f32.mrb[0].mxu0
      %v2242 = vadd.f32 %v1906, %v2241
      %v2243 = vpop.f32.mrb[0].mxu0
      %2244 = vdwg.mxu0
      %v2245 = vtanh.pop %v1991
      %v2246 = vtanh.pop %v1994
      %v2247 = vtanh.pop %v1999
      %v2248 = vtanh.pop %v2002
      %v2249 = vtanh.pop %v2007
      %v2250 = vtanh.pop %v2010
      %v2251 = vtanh.pop %v2015
      %v2252 = vtanh.pop %v2018
      %v2253 = vtanh.pop %v2023
      %v2254 = vtanh.pop %v2026
      %v2255 = vtanh.pop %v2031
      %v2256 = vtanh.pop %v2034
      %v2257 = vtanh.pop %v2039
      %v2258 = vtanh.pop %v2042
      %v2259 = vtanh.pop %v2047
      %v2260 = vtanh.pop %v2050
      %v2261 = vtanh.pop %v2055
      %v2262 = vtanh.pop %v2058
      %v2263 = vtanh.pop %v2063
      %v2264 = vtanh.pop %v2066
      %v2265 = vtanh.pop %v2071
      %v2266 = vtanh.pop %v2074
      %v2267 = vtanh.pop %v2079
      %v2268 = vtanh.pop %v2082
      %v2269 = vtanh.pop %v2087
      %v2270 = vtanh.pop %v2090
      %v2271 = vtanh.pop %v2095
      %v2272 = vtanh.pop %v2098
      %v2273 = vtanh.pop %v2103
      %v2274 = vtanh.pop %v2106
      %v2275 = vtanh.pop %v2111
      %v2276 = vtanh.pop %v2114
      %v2277 = vtanh.pop %v2119
      %v2278 = vtanh.pop %v2122
      %v2279 = vtanh.pop %v2127
      %v2280 = vtanh.pop %v2130
      %v2281 = vtanh.pop %v2135
      %v2282 = vtanh.pop %v2138
      %v2283 = vtanh.pop %v2143
      %v2284 = vtanh.pop %v2146
      %v2285 = vtanh.pop %v2151
      %v2286 = vtanh.pop %v2154
      %v2287 = vtanh.pop %v2159
      %v2288 = vtanh.pop %v2162
      %v2289 = vtanh.pop %v2167
      %v2290 = vtanh.pop %v2170
      %v2291 = vtanh.pop %v2175
      %v2292 = vtanh.pop %v2178
      %v2293 = vtanh.pop %v2183
      %v2294 = vtanh.pop %v2186
      %v2295 = vtanh.pop %v2191
      %v2296 = vtanh.pop %v2194
      %v2297 = vtanh.pop %v2199
      %v2298 = vtanh.pop %v2202
      %v2299 = vtanh.pop %v2207
      %v2300 = vtanh.pop %v2210
      %v2301 = vtanh.pop %v2215
      %v2302 = vtanh.pop %v2218
      %v2303 = vtanh.pop %v2223
      %v2304 = vtanh.pop %v2226
      %v2305 = vtanh.pop %v2231
      %v2306 = vtanh.pop %v2234
      %v2307 = vtanh.pop %v2239
      %v2308 = vtanh.pop %v2242
      %v2309 = vpack.c.bf16 %v2246, %v2245
      %v2310 = vpack.c.bf16 %v2248, %v2247
      %v2311 = vpack.c.bf16 %v2250, %v2249
      %v2312 = vpack.c.bf16 %v2252, %v2251
      %v2313 = vpack.c.bf16 %v2254, %v2253
      %v2314 = vpack.c.bf16 %v2256, %v2255
      %v2315 = vpack.c.bf16 %v2258, %v2257
      %v2316 = vpack.c.bf16 %v2260, %v2259
      %v2317 = vpack.c.bf16 %v2262, %v2261
      %v2318 = vpack.c.bf16 %v2264, %v2263
      %v2319 = vpack.c.bf16 %v2266, %v2265
      %v2320 = vpack.c.bf16 %v2268, %v2267
      %v2321 = vpack.c.bf16 %v2270, %v2269
      %v2322 = vpack.c.bf16 %v2272, %v2271
      %v2323 = vpack.c.bf16 %v2274, %v2273
      %v2324 = vpack.c.bf16 %v2276, %v2275
      %v2325 = vpack.c.bf16 %v2278, %v2277
      %v2326 = vpack.c.bf16 %v2280, %v2279
      %v2327 = vpack.c.bf16 %v2282, %v2281
      %v2328 = vpack.c.bf16 %v2284, %v2283
      %v2329 = vpack.c.bf16 %v2286, %v2285
      %v2330 = vpack.c.bf16 %v2288, %v2287
      %v2331 = vpack.c.bf16 %v2290, %v2289
      %v2332 = vpack.c.bf16 %v2292, %v2291
      %v2333 = vpack.c.bf16 %v2294, %v2293
      %v2334 = vpack.c.bf16 %v2296, %v2295
      %v2335 = vpack.c.bf16 %v2298, %v2297
      %v2336 = vpack.c.bf16 %v2300, %v2299
      %v2337 = vpack.c.bf16 %v2302, %v2301
      %v2338 = vpack.c.bf16 %v2304, %v2303
      %v2339 = vpack.c.bf16 %v2306, %v2305
      %v2340 = vpack.c.bf16 %v2308, %v2307
      %s2341 = scalar_lea.vmem %s3, 192
      %v2342 = vld [vmem:[%s2341] sm:$0xf]
      %v2343 = vld [vmem:[%s2341 + $0x4] sm:$0xf]
      %v2344 = vld [vmem:[%s2341 + $0x8] sm:$0xf]
      %v2345 = vld [vmem:[%s2341 + $0xc] sm:$0xf]
      %v2346 = vld [vmem:[%s2341 + $0x10] sm:$0xf]
      %v2347 = vld [vmem:[%s2341 + $0x14] sm:$0xf]
      %v2348 = vld [vmem:[%s2341 + $0x18] sm:$0xf]
      %v2349 = vld [vmem:[%s2341 + $0x1c] sm:$0xf]
      %v2350 = vld [vmem:[%s2341 + $0x20] sm:$0xf]
      %v2351 = vld [vmem:[%s2341 + $0x24] sm:$0xf]
      %v2352 = vld [vmem:[%s2341 + $0x28] sm:$0xf]
      %v2353 = vld [vmem:[%s2341 + $0x2c] sm:$0xf]
      %v2354 = vld [vmem:[%s2341 + $0x30] sm:$0xf]
      %v2355 = vld [vmem:[%s2341 + $0x34] sm:$0xf]
      %v2356 = vld [vmem:[%s2341 + $0x38] sm:$0xf]
      %v2357 = vld [vmem:[%s2341 + $0x3c] sm:$0xf]
      %s2358 = scalar_lea.vmem %s4, 3
      %v2359 = vld [vmem:[%s2358] sm:$0x1]
      %v2361 = vlaneseq
      %v2362 = vshrl.u32 %v2361, 7
      %v2363 = vsub.s32 0, %v2362
      %v2364 = vrot.slane %v2359, %v2363
      %v2382 = vunpack.c.l.b16 %v2342
      %v2383 = vunpack.c.l.b16 %v2343
      %v2384 = vunpack.c.l.b16 %v2344
      %v2385 = vunpack.c.l.b16 %v2345
      %v2386 = vunpack.c.l.b16 %v2346
      %v2387 = vunpack.c.l.b16 %v2347
      %v2388 = vunpack.c.l.b16 %v2348
      %v2389 = vunpack.c.l.b16 %v2349
      %v2390 = vunpack.c.l.b16 %v2350
      %v2391 = vunpack.c.l.b16 %v2351
      %v2392 = vunpack.c.l.b16 %v2352
      %v2393 = vunpack.c.l.b16 %v2353
      %v2394 = vunpack.c.l.b16 %v2354
      %v2395 = vunpack.c.l.b16 %v2355
      %v2396 = vunpack.c.l.b16 %v2356
      %v2397 = vunpack.c.l.b16 %v2357
      %v2398 = vpack.c.b16 %v2383, %v2382
      %v2399 = vpack.c.b16 %v2385, %v2384
      %v2400 = vpack.c.b16 %v2387, %v2386
      %v2401 = vpack.c.b16 %v2389, %v2388
      %v2402 = vpack.c.b16 %v2391, %v2390
      %v2403 = vpack.c.b16 %v2393, %v2392
      %v2404 = vpack.c.b16 %v2395, %v2394
      %v2405 = vpack.c.b16 %v2397, %v2396
      %2414 = vmatprep.subr.bf16.mxu0 0
      %2415 = vmatpush1.bf16.msra.mxu0 %v2398
      %2416 = vmatprep.subr.bf16.mxu0 0
      %2417 = vmatpush1.bf16.msra.mxu0 %v2399
      %2418 = vmatprep.subr.bf16.mxu0 0
      %2419 = vmatpush1.bf16.msra.mxu0 %v2400
      %2420 = vmatprep.subr.bf16.mxu0 0
      %2421 = vmatpush1.bf16.msra.mxu0 %v2401
      %2422 = vmatprep.subr.bf16.mxu0 0
      %2423 = vmatpush1.bf16.msra.mxu0 %v2402
      %2424 = vmatprep.subr.bf16.mxu0 0
      %2425 = vmatpush1.bf16.msra.mxu0 %v2403
      %2426 = vmatprep.subr.bf16.mxu0 0
      %2427 = vmatpush1.bf16.msra.mxu0 %v2404
      %2428 = vmatprep.subr.bf16.mxu0 0
      %2429 = vmatpush1.bf16.msra.mxu0 %v2405
      %2430 = vmatprep.subr.bf16.mxu0 0
      %2431 = vmatpush1.bf16.msra.mxu0 0
      %2432 = vmatprep.subr.bf16.mxu0 0
      %2433 = vmatpush1.bf16.msra.mxu0 0
      %2434 = vmatprep.subr.bf16.mxu0 0
      %2435 = vmatpush1.bf16.msra.mxu0 0
      %2436 = vmatprep.subr.bf16.mxu0 0
      %2437 = vmatpush1.bf16.msra.mxu0 0
      %2438 = vmatprep.subr.bf16.mxu0 0
      %2439 = vmatpush1.bf16.msra.mxu0 0
      %2440 = vmatprep.subr.bf16.mxu0 0
      %2441 = vmatpush1.bf16.msra.mxu0 0
      %2442 = vmatprep.subr.bf16.mxu0 0
      %2443 = vmatpush1.bf16.msra.mxu0 0
      %2444 = vmatprep.subr.bf16.mxu0 0
      %2445 = vmatpush1.bf16.msra.mxu0 0
      %2446 = vmatprep.mubr.bf16.mxu0 0
      %2447 = vmatmul.mubr.bf16.gmra.mrb[0].mxu0 %v2309
      %v2448 = vpop.f32.mrb[0].mxu0
      %v2449 = vadd.f32 %v2364, %v2448
      %v2450 = vpop.f32.mrb[0].mxu0
      %v2451 = vpop.f32.mrb[0].mxu0
      %v2452 = vadd.f32 %v2364, %v2451
      %v2453 = vpop.f32.mrb[0].mxu0
      %2454 = vmatprep.mubr.bf16.mxu0 0
      %2455 = vmatmul.mubr.bf16.gmra.mrb[0].mxu0 %v2310
      %v2456 = vpop.f32.mrb[0].mxu0
      %v2457 = vadd.f32 %v2364, %v2456
      %v2458 = vpop.f32.mrb[0].mxu0
      %v2459 = vpop.f32.mrb[0].mxu0
      %v2460 = vadd.f32 %v2364, %v2459
      %v2461 = vpop.f32.mrb[0].mxu0
      %2462 = vmatprep.mubr.bf16.mxu0 0
      %2463 = vmatmul.mubr.bf16.gmra.mrb[0].mxu0 %v2311
      %v2464 = vpop.f32.mrb[0].mxu0
      %v2465 = vadd.f32 %v2364, %v2464
      %v2466 = vpop.f32.mrb[0].mxu0
      %v2467 = vpop.f32.mrb[0].mxu0
      %v2468 = vadd.f32 %v2364, %v2467
      %v2469 = vpop.f32.mrb[0].mxu0
      %2470 = vmatprep.mubr.bf16.mxu0 0
      %2471 = vmatmul.mubr.bf16.gmra.mrb[0].mxu0 %v2312
      %v2472 = vpop.f32.mrb[0].mxu0
      %v2473 = vadd.f32 %v2364, %v2472
      %v2474 = vpop.f32.mrb[0].mxu0
      %v2475 = vpop.f32.mrb[0].mxu0
      %v2476 = vadd.f32 %v2364, %v2475
      %v2477 = vpop.f32.mrb[0].mxu0
      %2478 = vmatprep.mubr.bf16.mxu0 0
      %2479 = vmatmul.mubr.bf16.gmra.mrb[0].mxu0 %v2313
      %v2480 = vpop.f32.mrb[0].mxu0
      %v2481 = vadd.f32 %v2364, %v2480
      %v2482 = vpop.f32.mrb[0].mxu0
      %v2483 = vpop.f32.mrb[0].mxu0
      %v2484 = vadd.f32 %v2364, %v2483
      %v2485 = vpop.f32.mrb[0].mxu0
      %2486 = vmatprep.mubr.bf16.mxu0 0
      %2487 = vmatmul.mubr.bf16.gmra.mrb[0].mxu0 %v2314
      %v2488 = vpop.f32.mrb[0].mxu0
      %v2489 = vadd.f32 %v2364, %v2488
      %v2490 = vpop.f32.mrb[0].mxu0
      %v2491 = vpop.f32.mrb[0].mxu0
      %v2492 = vadd.f32 %v2364, %v2491
      %v2493 = vpop.f32.mrb[0].mxu0
      %2494 = vmatprep.mubr.bf16.mxu0 0
      %2495 = vmatmul.mubr.bf16.gmra.mrb[0].mxu0 %v2315
      %v2496 = vpop.f32.mrb[0].mxu0
      %v2497 = vadd.f32 %v2364, %v2496
      %v2498 = vpop.f32.mrb[0].mxu0
      %v2499 = vpop.f32.mrb[0].mxu0
      %v2500 = vadd.f32 %v2364, %v2499
      %v2501 = vpop.f32.mrb[0].mxu0
      %2502 = vmatprep.mubr.bf16.mxu0 0
      %2503 = vmatmul.mubr.bf16.gmra.mrb[0].mxu0 %v2316
      %v2504 = vpop.f32.mrb[0].mxu0
      %v2505 = vadd.f32 %v2364, %v2504
      %v2506 = vpop.f32.mrb[0].mxu0
      %v2507 = vpop.f32.mrb[0].mxu0
      %v2508 = vadd.f32 %v2364, %v2507
      %v2509 = vpop.f32.mrb[0].mxu0
      %2510 = vmatprep.mubr.bf16.mxu0 0
      %2511 = vmatmul.mubr.bf16.gmra.mrb[0].mxu0 %v2317
      %v2512 = vpop.f32.mrb[0].mxu0
      %v2513 = vadd.f32 %v2364, %v2512
      %v2514 = vpop.f32.mrb[0].mxu0
      %v2515 = vpop.f32.mrb[0].mxu0
      %v2516 = vadd.f32 %v2364, %v2515
      %v2517 = vpop.f32.mrb[0].mxu0
      %2518 = vmatprep.mubr.bf16.mxu0 0
      %2519 = vmatmul.mubr.bf16.gmra.mrb[0].mxu0 %v2318
      %v2520 = vpop.f32.mrb[0].mxu0
      %v2521 = vadd.f32 %v2364, %v2520
      %v2522 = vpop.f32.mrb[0].mxu0
      %v2523 = vpop.f32.mrb[0].mxu0
      %v2524 = vadd.f32 %v2364, %v2523
      %v2525 = vpop.f32.mrb[0].mxu0
      %2526 = vmatprep.mubr.bf16.mxu0 0
      %2527 = vmatmul.mubr.bf16.gmra.mrb[0].mxu0 %v2319
      %v2528 = vpop.f32.mrb[0].mxu0
      %v2529 = vadd.f32 %v2364, %v2528
      %v2530 = vpop.f32.mrb[0].mxu0
      %v2531 = vpop.f32.mrb[0].mxu0
      %v2532 = vadd.f32 %v2364, %v2531
      %v2533 = vpop.f32.mrb[0].mxu0
      %2534 = vmatprep.mubr.bf16.mxu0 0
      %2535 = vmatmul.mubr.bf16.gmra.mrb[0].mxu0 %v2320
      %v2536 = vpop.f32.mrb[0].mxu0
      %v2537 = vadd.f32 %v2364, %v2536
      %v2538 = vpop.f32.mrb[0].mxu0
      %v2539 = vpop.f32.mrb[0].mxu0
      %v2540 = vadd.f32 %v2364, %v2539
      %v2541 = vpop.f32.mrb[0].mxu0
      %2542 = vmatprep.mubr.bf16.mxu0 0
      %2543 = vmatmul.mubr.bf16.gmra.mrb[0].mxu0 %v2321
      %v2544 = vpop.f32.mrb[0].mxu0
      %v2545 = vadd.f32 %v2364, %v2544
      %v2546 = vpop.f32.mrb[0].mxu0
      %v2547 = vpop.f32.mrb[0].mxu0
      %v2548 = vadd.f32 %v2364, %v2547
      %v2549 = vpop.f32.mrb[0].mxu0
      %2550 = vmatprep.mubr.bf16.mxu0 0
      %2551 = vmatmul.mubr.bf16.gmra.mrb[0].mxu0 %v2322
      %v2552 = vpop.f32.mrb[0].mxu0
      %v2553 = vadd.f32 %v2364, %v2552
      %v2554 = vpop.f32.mrb[0].mxu0
      %v2555 = vpop.f32.mrb[0].mxu0
      %v2556 = vadd.f32 %v2364, %v2555
      %v2557 = vpop.f32.mrb[0].mxu0
      %2558 = vmatprep.mubr.bf16.mxu0 0
      %2559 = vmatmul.mubr.bf16.gmra.mrb[0].mxu0 %v2323
      %v2560 = vpop.f32.mrb[0].mxu0
      %v2561 = vadd.f32 %v2364, %v2560
      %v2562 = vpop.f32.mrb[0].mxu0
      %v2563 = vpop.f32.mrb[0].mxu0
      %v2564 = vadd.f32 %v2364, %v2563
      %v2565 = vpop.f32.mrb[0].mxu0
      %2566 = vmatprep.mubr.bf16.mxu0 0
      %2567 = vmatmul.mubr.bf16.gmra.mrb[0].mxu0 %v2324
      %v2568 = vpop.f32.mrb[0].mxu0
      %v2569 = vadd.f32 %v2364, %v2568
      %v2570 = vpop.f32.mrb[0].mxu0
      %v2571 = vpop.f32.mrb[0].mxu0
      %v2572 = vadd.f32 %v2364, %v2571
      %v2573 = vpop.f32.mrb[0].mxu0
      %2574 = vmatprep.mubr.bf16.mxu0 0
      %2575 = vmatmul.mubr.bf16.gmra.mrb[0].mxu0 %v2325
      %v2576 = vpop.f32.mrb[0].mxu0
      %v2577 = vadd.f32 %v2364, %v2576
      %v2578 = vpop.f32.mrb[0].mxu0
      %v2579 = vpop.f32.mrb[0].mxu0
      %v2580 = vadd.f32 %v2364, %v2579
      %v2581 = vpop.f32.mrb[0].mxu0
      %2582 = vmatprep.mubr.bf16.mxu0 0
      %2583 = vmatmul.mubr.bf16.gmra.mrb[0].mxu0 %v2326
      %v2584 = vpop.f32.mrb[0].mxu0
      %v2585 = vadd.f32 %v2364, %v2584
      %v2586 = vpop.f32.mrb[0].mxu0
      %v2587 = vpop.f32.mrb[0].mxu0
      %v2588 = vadd.f32 %v2364, %v2587
      %v2589 = vpop.f32.mrb[0].mxu0
      %2590 = vmatprep.mubr.bf16.mxu0 0
      %2591 = vmatmul.mubr.bf16.gmra.mrb[0].mxu0 %v2327
      %v2592 = vpop.f32.mrb[0].mxu0
      %v2593 = vadd.f32 %v2364, %v2592
      %v2594 = vpop.f32.mrb[0].mxu0
      %v2595 = vpop.f32.mrb[0].mxu0
      %v2596 = vadd.f32 %v2364, %v2595
      %v2597 = vpop.f32.mrb[0].mxu0
      %2598 = vmatprep.mubr.bf16.mxu0 0
      %2599 = vmatmul.mubr.bf16.gmra.mrb[0].mxu0 %v2328
      %v2600 = vpop.f32.mrb[0].mxu0
      %v2601 = vadd.f32 %v2364, %v2600
      %v2602 = vpop.f32.mrb[0].mxu0
      %v2603 = vpop.f32.mrb[0].mxu0
      %v2604 = vadd.f32 %v2364, %v2603
      %v2605 = vpop.f32.mrb[0].mxu0
      %2606 = vmatprep.mubr.bf16.mxu0 0
      %2607 = vmatmul.mubr.bf16.gmra.mrb[0].mxu0 %v2329
      %v2608 = vpop.f32.mrb[0].mxu0
      %v2609 = vadd.f32 %v2364, %v2608
      %v2610 = vpop.f32.mrb[0].mxu0
      %v2611 = vpop.f32.mrb[0].mxu0
      %v2612 = vadd.f32 %v2364, %v2611
      %v2613 = vpop.f32.mrb[0].mxu0
      %2614 = vmatprep.mubr.bf16.mxu0 0
      %2615 = vmatmul.mubr.bf16.gmra.mrb[0].mxu0 %v2330
      %v2616 = vpop.f32.mrb[0].mxu0
      %v2617 = vadd.f32 %v2364, %v2616
      %v2618 = vpop.f32.mrb[0].mxu0
      %v2619 = vpop.f32.mrb[0].mxu0
      %v2620 = vadd.f32 %v2364, %v2619
      %v2621 = vpop.f32.mrb[0].mxu0
      %2622 = vmatprep.mubr.bf16.mxu0 0
      %2623 = vmatmul.mubr.bf16.gmra.mrb[0].mxu0 %v2331
      %v2624 = vpop.f32.mrb[0].mxu0
      %v2625 = vadd.f32 %v2364, %v2624
      %v2626 = vpop.f32.mrb[0].mxu0
      %v2627 = vpop.f32.mrb[0].mxu0
      %v2628 = vadd.f32 %v2364, %v2627
      %v2629 = vpop.f32.mrb[0].mxu0
      %2630 = vmatprep.mubr.bf16.mxu0 0
      %2631 = vmatmul.mubr.bf16.gmra.mrb[0].mxu0 %v2332
      %v2632 = vpop.f32.mrb[0].mxu0
      %v2633 = vadd.f32 %v2364, %v2632
      %v2634 = vpop.f32.mrb[0].mxu0
      %v2635 = vpop.f32.mrb[0].mxu0
      %v2636 = vadd.f32 %v2364, %v2635
      %v2637 = vpop.f32.mrb[0].mxu0
      %2638 = vmatprep.mubr.bf16.mxu0 0
      %2639 = vmatmul.mubr.bf16.gmra.mrb[0].mxu0 %v2333
      %v2640 = vpop.f32.mrb[0].mxu0
      %v2641 = vadd.f32 %v2364, %v2640
      %v2642 = vpop.f32.mrb[0].mxu0
      %v2643 = vpop.f32.mrb[0].mxu0
      %v2644 = vadd.f32 %v2364, %v2643
      %v2645 = vpop.f32.mrb[0].mxu0
      %2646 = vmatprep.mubr.bf16.mxu0 0
      %2647 = vmatmul.mubr.bf16.gmra.mrb[0].mxu0 %v2334
      %v2648 = vpop.f32.mrb[0].mxu0
      %v2649 = vadd.f32 %v2364, %v2648
      %v2650 = vpop.f32.mrb[0].mxu0
      %v2651 = vpop.f32.mrb[0].mxu0
      %v2652 = vadd.f32 %v2364, %v2651
      %v2653 = vpop.f32.mrb[0].mxu0
      %2654 = vmatprep.mubr.bf16.mxu0 0
      %2655 = vmatmul.mubr.bf16.gmra.mrb[0].mxu0 %v2335
      %v2656 = vpop.f32.mrb[0].mxu0
      %v2657 = vadd.f32 %v2364, %v2656
      %v2658 = vpop.f32.mrb[0].mxu0
      %v2659 = vpop.f32.mrb[0].mxu0
      %v2660 = vadd.f32 %v2364, %v2659
      %v2661 = vpop.f32.mrb[0].mxu0
      %2662 = vmatprep.mubr.bf16.mxu0 0
      %2663 = vmatmul.mubr.bf16.gmra.mrb[0].mxu0 %v2336
      %v2664 = vpop.f32.mrb[0].mxu0
      %v2665 = vadd.f32 %v2364, %v2664
      %v2666 = vpop.f32.mrb[0].mxu0
      %v2667 = vpop.f32.mrb[0].mxu0
      %v2668 = vadd.f32 %v2364, %v2667
      %v2669 = vpop.f32.mrb[0].mxu0
      %2670 = vmatprep.mubr.bf16.mxu0 0
      %2671 = vmatmul.mubr.bf16.gmra.mrb[0].mxu0 %v2337
      %v2672 = vpop.f32.mrb[0].mxu0
      %v2673 = vadd.f32 %v2364, %v2672
      %v2674 = vpop.f32.mrb[0].mxu0
      %v2675 = vpop.f32.mrb[0].mxu0
      %v2676 = vadd.f32 %v2364, %v2675
      %v2677 = vpop.f32.mrb[0].mxu0
      %2678 = vmatprep.mubr.bf16.mxu0 0
      %2679 = vmatmul.mubr.bf16.gmra.mrb[0].mxu0 %v2338
      %v2680 = vpop.f32.mrb[0].mxu0
      %v2681 = vadd.f32 %v2364, %v2680
      %v2682 = vpop.f32.mrb[0].mxu0
      %v2683 = vpop.f32.mrb[0].mxu0
      %v2684 = vadd.f32 %v2364, %v2683
      %v2685 = vpop.f32.mrb[0].mxu0
      %2686 = vmatprep.mubr.bf16.mxu0 0
      %2687 = vmatmul.mubr.bf16.gmra.mrb[0].mxu0 %v2339
      %v2688 = vpop.f32.mrb[0].mxu0
      %v2689 = vadd.f32 %v2364, %v2688
      %v2690 = vpop.f32.mrb[0].mxu0
      %v2691 = vpop.f32.mrb[0].mxu0
      %v2692 = vadd.f32 %v2364, %v2691
      %v2693 = vpop.f32.mrb[0].mxu0
      %2694 = vmatprep.mubr.bf16.mxu0 0
      %2695 = vmatmul.mubr.bf16.gmra.mrb[0].mxu0 %v2340
      %v2696 = vpop.f32.mrb[0].mxu0
      %v2697 = vadd.f32 %v2364, %v2696
      %v2698 = vpop.f32.mrb[0].mxu0
      %v2699 = vpop.f32.mrb[0].mxu0
      %v2700 = vadd.f32 %v2364, %v2699
      %v2701 = vpop.f32.mrb[0].mxu0
      %2702 = vdwg.mxu0
      %v2703 = vtanh.pop %v2449
      %v2704 = vtanh.pop %v2452
      %v2705 = vtanh.pop %v2457
      %v2706 = vtanh.pop %v2460
      %v2707 = vtanh.pop %v2465
      %v2708 = vtanh.pop %v2468
      %v2709 = vtanh.pop %v2473
      %v2710 = vtanh.pop %v2476
      %v2711 = vtanh.pop %v2481
      %v2712 = vtanh.pop %v2484
      %v2713 = vtanh.pop %v2489
      %v2714 = vtanh.pop %v2492
      %v2715 = vtanh.pop %v2497
      %v2716 = vtanh.pop %v2500
      %v2717 = vtanh.pop %v2505
      %v2718 = vtanh.pop %v2508
      %v2719 = vtanh.pop %v2513
      %v2720 = vtanh.pop %v2516
      %v2721 = vtanh.pop %v2521
      %v2722 = vtanh.pop %v2524
      %v2723 = vtanh.pop %v2529
      %v2724 = vtanh.pop %v2532
      %v2725 = vtanh.pop %v2537
      %v2726 = vtanh.pop %v2540
      %v2727 = vtanh.pop %v2545
      %v2728 = vtanh.pop %v2548
      %v2729 = vtanh.pop %v2553
      %v2730 = vtanh.pop %v2556
      %v2731 = vtanh.pop %v2561
      %v2732 = vtanh.pop %v2564
      %v2733 = vtanh.pop %v2569
      %v2734 = vtanh.pop %v2572
      %v2735 = vtanh.pop %v2577
      %v2736 = vtanh.pop %v2580
      %v2737 = vtanh.pop %v2585
      %v2738 = vtanh.pop %v2588
      %v2739 = vtanh.pop %v2593
      %v2740 = vtanh.pop %v2596
      %v2741 = vtanh.pop %v2601
      %v2742 = vtanh.pop %v2604
      %v2743 = vtanh.pop %v2609
      %v2744 = vtanh.pop %v2612
      %v2745 = vtanh.pop %v2617
      %v2746 = vtanh.pop %v2620
      %v2747 = vtanh.pop %v2625
      %v2748 = vtanh.pop %v2628
      %v2749 = vtanh.pop %v2633
      %v2750 = vtanh.pop %v2636
      %v2751 = vtanh.pop %v2641
      %v2752 = vtanh.pop %v2644
      %v2753 = vtanh.pop %v2649
      %v2754 = vtanh.pop %v2652
      %v2755 = vtanh.pop %v2657
      %v2756 = vtanh.pop %v2660
      %v2757 = vtanh.pop %v2665
      %v2758 = vtanh.pop %v2668
      %v2759 = vtanh.pop %v2673
      %v2760 = vtanh.pop %v2676
      %v2761 = vtanh.pop %v2681
      %v2762 = vtanh.pop %v2684
      %v2763 = vtanh.pop %v2689
      %v2764 = vtanh.pop %v2692
      %v2765 = vtanh.pop %v2697
      %v2766 = vtanh.pop %v2700
      %v2767 = vpack.c.bf16 %v2704, %v2703
      %v2768 = vpack.c.bf16 %v2706, %v2705
      %v2769 = vpack.c.bf16 %v2708, %v2707
      %v2770 = vpack.c.bf16 %v2710, %v2709
      %v2771 = vpack.c.bf16 %v2712, %v2711
      %v2772 = vpack.c.bf16 %v2714, %v2713
      %v2773 = vpack.c.bf16 %v2716, %v2715
      %v2774 = vpack.c.bf16 %v2718, %v2717
      %v2775 = vpack.c.bf16 %v2720, %v2719
      %v2776 = vpack.c.bf16 %v2722, %v2721
      %v2777 = vpack.c.bf16 %v2724, %v2723
      %v2778 = vpack.c.bf16 %v2726, %v2725
      %v2779 = vpack.c.bf16 %v2728, %v2727
      %v2780 = vpack.c.bf16 %v2730, %v2729
      %v2781 = vpack.c.bf16 %v2732, %v2731
      %v2782 = vpack.c.bf16 %v2734, %v2733
      %v2783 = vpack.c.bf16 %v2736, %v2735
      %v2784 = vpack.c.bf16 %v2738, %v2737
      %v2785 = vpack.c.bf16 %v2740, %v2739
      %v2786 = vpack.c.bf16 %v2742, %v2741
      %v2787 = vpack.c.bf16 %v2744, %v2743
      %v2788 = vpack.c.bf16 %v2746, %v2745
      %v2789 = vpack.c.bf16 %v2748, %v2747
      %v2790 = vpack.c.bf16 %v2750, %v2749
      %v2791 = vpack.c.bf16 %v2752, %v2751
      %v2792 = vpack.c.bf16 %v2754, %v2753
      %v2793 = vpack.c.bf16 %v2756, %v2755
      %v2794 = vpack.c.bf16 %v2758, %v2757
      %v2795 = vpack.c.bf16 %v2760, %v2759
      %v2796 = vpack.c.bf16 %v2762, %v2761
      %v2797 = vpack.c.bf16 %v2764, %v2763
      %v2798 = vpack.c.bf16 %v2766, %v2765
      %v2799 = vld [vmem:[%s5] sm:$0xf]
      %v2800 = vld [vmem:[%s5 + $0x4] sm:$0xf]
      %v2801 = vld [vmem:[%s5 + $0x8] sm:$0xf]
      %v2802 = vld [vmem:[%s5 + $0xc] sm:$0xf]
      %v2803 = vld [vmem:[%s5 + $0x10] sm:$0xf]
      %v2804 = vld [vmem:[%s5 + $0x14] sm:$0xf]
      %v2805 = vld [vmem:[%s5 + $0x18] sm:$0xf]
      %v2806 = vld [vmem:[%s5 + $0x1c] sm:$0xf]
      %v2807 = vld [vmem:[%s5 + $0x20] sm:$0xf]
      %v2808 = vld [vmem:[%s5 + $0x24] sm:$0xf]
      %v2809 = vld [vmem:[%s5 + $0x28] sm:$0xf]
      %v2810 = vld [vmem:[%s5 + $0x2c] sm:$0xf]
      %v2811 = vld [vmem:[%s5 + $0x30] sm:$0xf]
      %v2812 = vld [vmem:[%s5 + $0x34] sm:$0xf]
      %v2813 = vld [vmem:[%s5 + $0x38] sm:$0xf]
      %v2814 = vld [vmem:[%s5 + $0x3c] sm:$0xf]
      %v2815 = vld [vmem:[%s6] sm:$0x1]
      %v2817 = vlaneseq
      %v2818 = vshrl.u32 %v2817, 7
      %v2819 = vsub.s32 0, %v2818
      %v2820 = vrot.slane %v2815, %v2819
      %v2838 = vunpack.c.l.b16 %v2799
      %v2839 = vunpack.c.l.b16 %v2800
      %v2840 = vunpack.c.l.b16 %v2801
      %v2841 = vunpack.c.l.b16 %v2802
      %v2842 = vunpack.c.l.b16 %v2803
      %v2843 = vunpack.c.l.b16 %v2804
      %v2844 = vunpack.c.l.b16 %v2805
      %v2845 = vunpack.c.l.b16 %v2806
      %v2846 = vunpack.c.l.b16 %v2807
      %v2847 = vunpack.c.l.b16 %v2808
      %v2848 = vunpack.c.l.b16 %v2809
      %v2849 = vunpack.c.l.b16 %v2810
      %v2850 = vunpack.c.l.b16 %v2811
      %v2851 = vunpack.c.l.b16 %v2812
      %v2852 = vunpack.c.l.b16 %v2813
      %v2853 = vunpack.c.l.b16 %v2814
      %v2854 = vpack.c.b16 %v2839, %v2838
      %v2855 = vpack.c.b16 %v2841, %v2840
      %v2856 = vpack.c.b16 %v2843, %v2842
      %v2857 = vpack.c.b16 %v2845, %v2844
      %v2858 = vpack.c.b16 %v2847, %v2846
      %v2859 = vpack.c.b16 %v2849, %v2848
      %v2860 = vpack.c.b16 %v2851, %v2850
      %v2861 = vpack.c.b16 %v2853, %v2852
      %2870 = vmatprep.subr.bf16.mxu0 0
      %2871 = vmatpush1.bf16.msra.mxu0 %v2854
      %2872 = vmatprep.subr.bf16.mxu0 0
      %2873 = vmatpush1.bf16.msra.mxu0 %v2855
      %2874 = vmatprep.subr.bf16.mxu0 0
      %2875 = vmatpush1.bf16.msra.mxu0 %v2856
      %2876 = vmatprep.subr.bf16.mxu0 0
      %2877 = vmatpush1.bf16.msra.mxu0 %v2857
      %2878 = vmatprep.subr.bf16.mxu0 0
      %2879 = vmatpush1.bf16.msra.mxu0 %v2858
      %2880 = vmatprep.subr.bf16.mxu0 0
      %2881 = vmatpush1.bf16.msra.mxu0 %v2859
      %2882 = vmatprep.subr.bf16.mxu0 0
      %2883 = vmatpush1.bf16.msra.mxu0 %v2860
      %2884 = vmatprep.subr.bf16.mxu0 0
      %2885 = vmatpush1.bf16.msra.mxu0 %v2861
      %2886 = vmatprep.subr.bf16.mxu0 0
      %2887 = vmatpush1.bf16.msra.mxu0 0
      %2888 = vmatprep.subr.bf16.mxu0 0
      %2889 = vmatpush1.bf16.msra.mxu0 0
      %2890 = vmatprep.subr.bf16.mxu0 0
      %2891 = vmatpush1.bf16.msra.mxu0 0
      %2892 = vmatprep.subr.bf16.mxu0 0
      %2893 = vmatpush1.bf16.msra.mxu0 0
      %2894 = vmatprep.subr.bf16.mxu0 0
      %2895 = vmatpush1.bf16.msra.mxu0 0
      %2896 = vmatprep.subr.bf16.mxu0 0
      %2897 = vmatpush1.bf16.msra.mxu0 0
      %2898 = vmatprep.subr.bf16.mxu0 0
      %2899 = vmatpush1.bf16.msra.mxu0 0
      %2900 = vmatprep.subr.bf16.mxu0 0
      %2901 = vmatpush1.bf16.msra.mxu0 0
      %2902 = vmatprep.mubr.bf16.mxu0 0
      %2903 = vmatmul.mubr.bf16.gmra.mrb[0].mxu0 %v2767
      %v2904 = vpop.f32.mrb[0].mxu0
      %v2905 = vadd.f32 %v2820, %v2904
      %v2906 = vpop.f32.mrb[0].mxu0
      %v2907 = vpop.f32.mrb[0].mxu0
      %v2908 = vadd.f32 %v2820, %v2907
      %v2909 = vpop.f32.mrb[0].mxu0
      %2910 = vmatprep.mubr.bf16.mxu0 0
      %2911 = vmatmul.mubr.bf16.gmra.mrb[0].mxu0 %v2768
      %v2912 = vpop.f32.mrb[0].mxu0
      %v2913 = vadd.f32 %v2820, %v2912
      %v2914 = vpop.f32.mrb[0].mxu0
      %v2915 = vpop.f32.mrb[0].mxu0
      %v2916 = vadd.f32 %v2820, %v2915
      %v2917 = vpop.f32.mrb[0].mxu0
      %2918 = vmatprep.mubr.bf16.mxu0 0
      %2919 = vmatmul.mubr.bf16.gmra.mrb[0].mxu0 %v2769
      %v2920 = vpop.f32.mrb[0].mxu0
      %v2921 = vadd.f32 %v2820, %v2920
      %v2922 = vpop.f32.mrb[0].mxu0
      %v2923 = vpop.f32.mrb[0].mxu0
      %v2924 = vadd.f32 %v2820, %v2923
      %v2925 = vpop.f32.mrb[0].mxu0
      %2926 = vmatprep.mubr.bf16.mxu0 0
      %2927 = vmatmul.mubr.bf16.gmra.mrb[0].mxu0 %v2770
      %v2928 = vpop.f32.mrb[0].mxu0
      %v2929 = vadd.f32 %v2820, %v2928
      %v2930 = vpop.f32.mrb[0].mxu0
      %v2931 = vpop.f32.mrb[0].mxu0
      %v2932 = vadd.f32 %v2820, %v2931
      %v2933 = vpop.f32.mrb[0].mxu0
      %2934 = vmatprep.mubr.bf16.mxu0 0
      %2935 = vmatmul.mubr.bf16.gmra.mrb[0].mxu0 %v2771
      %v2936 = vpop.f32.mrb[0].mxu0
      %v2937 = vadd.f32 %v2820, %v2936
      %v2938 = vpop.f32.mrb[0].mxu0
      %v2939 = vpop.f32.mrb[0].mxu0
      %v2940 = vadd.f32 %v2820, %v2939
      %v2941 = vpop.f32.mrb[0].mxu0
      %2942 = vmatprep.mubr.bf16.mxu0 0
      %2943 = vmatmul.mubr.bf16.gmra.mrb[0].mxu0 %v2772
      %v2944 = vpop.f32.mrb[0].mxu0
      %v2945 = vadd.f32 %v2820, %v2944
      %v2946 = vpop.f32.mrb[0].mxu0
      %v2947 = vpop.f32.mrb[0].mxu0
      %v2948 = vadd.f32 %v2820, %v2947
      %v2949 = vpop.f32.mrb[0].mxu0
      %2950 = vmatprep.mubr.bf16.mxu0 0
      %2951 = vmatmul.mubr.bf16.gmra.mrb[0].mxu0 %v2773
      %v2952 = vpop.f32.mrb[0].mxu0
      %v2953 = vadd.f32 %v2820, %v2952
      %v2954 = vpop.f32.mrb[0].mxu0
      %v2955 = vpop.f32.mrb[0].mxu0
      %v2956 = vadd.f32 %v2820, %v2955
      %v2957 = vpop.f32.mrb[0].mxu0
      %2958 = vmatprep.mubr.bf16.mxu0 0
      %2959 = vmatmul.mubr.bf16.gmra.mrb[0].mxu0 %v2774
      %v2960 = vpop.f32.mrb[0].mxu0
      %v2961 = vadd.f32 %v2820, %v2960
      %v2962 = vpop.f32.mrb[0].mxu0
      %v2963 = vpop.f32.mrb[0].mxu0
      %v2964 = vadd.f32 %v2820, %v2963
      %v2965 = vpop.f32.mrb[0].mxu0
      %2966 = vmatprep.mubr.bf16.mxu0 0
      %2967 = vmatmul.mubr.bf16.gmra.mrb[0].mxu0 %v2775
      %v2968 = vpop.f32.mrb[0].mxu0
      %v2969 = vadd.f32 %v2820, %v2968
      %v2970 = vpop.f32.mrb[0].mxu0
      %v2971 = vpop.f32.mrb[0].mxu0
      %v2972 = vadd.f32 %v2820, %v2971
      %v2973 = vpop.f32.mrb[0].mxu0
      %2974 = vmatprep.mubr.bf16.mxu0 0
      %2975 = vmatmul.mubr.bf16.gmra.mrb[0].mxu0 %v2776
      %v2976 = vpop.f32.mrb[0].mxu0
      %v2977 = vadd.f32 %v2820, %v2976
      %v2978 = vpop.f32.mrb[0].mxu0
      %v2979 = vpop.f32.mrb[0].mxu0
      %v2980 = vadd.f32 %v2820, %v2979
      %v2981 = vpop.f32.mrb[0].mxu0
      %2982 = vmatprep.mubr.bf16.mxu0 0
      %2983 = vmatmul.mubr.bf16.gmra.mrb[0].mxu0 %v2777
      %v2984 = vpop.f32.mrb[0].mxu0
      %v2985 = vadd.f32 %v2820, %v2984
      %v2986 = vpop.f32.mrb[0].mxu0
      %v2987 = vpop.f32.mrb[0].mxu0
      %v2988 = vadd.f32 %v2820, %v2987
      %v2989 = vpop.f32.mrb[0].mxu0
      %2990 = vmatprep.mubr.bf16.mxu0 0
      %2991 = vmatmul.mubr.bf16.gmra.mrb[0].mxu0 %v2778
      %v2992 = vpop.f32.mrb[0].mxu0
      %v2993 = vadd.f32 %v2820, %v2992
      %v2994 = vpop.f32.mrb[0].mxu0
      %v2995 = vpop.f32.mrb[0].mxu0
      %v2996 = vadd.f32 %v2820, %v2995
      %v2997 = vpop.f32.mrb[0].mxu0
      %2998 = vmatprep.mubr.bf16.mxu0 0
      %2999 = vmatmul.mubr.bf16.gmra.mrb[0].mxu0 %v2779
      %v3000 = vpop.f32.mrb[0].mxu0
      %v3001 = vadd.f32 %v2820, %v3000
      %v3002 = vpop.f32.mrb[0].mxu0
      %v3003 = vpop.f32.mrb[0].mxu0
      %v3004 = vadd.f32 %v2820, %v3003
      %v3005 = vpop.f32.mrb[0].mxu0
      %3006 = vmatprep.mubr.bf16.mxu0 0
      %3007 = vmatmul.mubr.bf16.gmra.mrb[0].mxu0 %v2780
      %v3008 = vpop.f32.mrb[0].mxu0
      %v3009 = vadd.f32 %v2820, %v3008
      %v3010 = vpop.f32.mrb[0].mxu0
      %v3011 = vpop.f32.mrb[0].mxu0
      %v3012 = vadd.f32 %v2820, %v3011
      %v3013 = vpop.f32.mrb[0].mxu0
      %3014 = vmatprep.mubr.bf16.mxu0 0
      %3015 = vmatmul.mubr.bf16.gmra.mrb[0].mxu0 %v2781
      %v3016 = vpop.f32.mrb[0].mxu0
      %v3017 = vadd.f32 %v2820, %v3016
      %v3018 = vpop.f32.mrb[0].mxu0
      %v3019 = vpop.f32.mrb[0].mxu0
      %v3020 = vadd.f32 %v2820, %v3019
      %v3021 = vpop.f32.mrb[0].mxu0
      %3022 = vmatprep.mubr.bf16.mxu0 0
      %3023 = vmatmul.mubr.bf16.gmra.mrb[0].mxu0 %v2782
      %v3024 = vpop.f32.mrb[0].mxu0
      %v3025 = vadd.f32 %v2820, %v3024
      %v3026 = vpop.f32.mrb[0].mxu0
      %v3027 = vpop.f32.mrb[0].mxu0
      %v3028 = vadd.f32 %v2820, %v3027
      %v3029 = vpop.f32.mrb[0].mxu0
      %3030 = vmatprep.mubr.bf16.mxu0 0
      %3031 = vmatmul.mubr.bf16.gmra.mrb[0].mxu0 %v2783
      %v3032 = vpop.f32.mrb[0].mxu0
      %v3033 = vadd.f32 %v2820, %v3032
      %v3034 = vpop.f32.mrb[0].mxu0
      %v3035 = vpop.f32.mrb[0].mxu0
      %v3036 = vadd.f32 %v2820, %v3035
      %v3037 = vpop.f32.mrb[0].mxu0
      %3038 = vmatprep.mubr.bf16.mxu0 0
      %3039 = vmatmul.mubr.bf16.gmra.mrb[0].mxu0 %v2784
      %v3040 = vpop.f32.mrb[0].mxu0
      %v3041 = vadd.f32 %v2820, %v3040
      %v3042 = vpop.f32.mrb[0].mxu0
      %v3043 = vpop.f32.mrb[0].mxu0
      %v3044 = vadd.f32 %v2820, %v3043
      %v3045 = vpop.f32.mrb[0].mxu0
      %3046 = vmatprep.mubr.bf16.mxu0 0
      %3047 = vmatmul.mubr.bf16.gmra.mrb[0].mxu0 %v2785
      %v3048 = vpop.f32.mrb[0].mxu0
      %v3049 = vadd.f32 %v2820, %v3048
      %v3050 = vpop.f32.mrb[0].mxu0
      %v3051 = vpop.f32.mrb[0].mxu0
      %v3052 = vadd.f32 %v2820, %v3051
      %v3053 = vpop.f32.mrb[0].mxu0
      %3054 = vmatprep.mubr.bf16.mxu0 0
      %3055 = vmatmul.mubr.bf16.gmra.mrb[0].mxu0 %v2786
      %v3056 = vpop.f32.mrb[0].mxu0
      %v3057 = vadd.f32 %v2820, %v3056
      %v3058 = vpop.f32.mrb[0].mxu0
      %v3059 = vpop.f32.mrb[0].mxu0
      %v3060 = vadd.f32 %v2820, %v3059
      %v3061 = vpop.f32.mrb[0].mxu0
      %3062 = vmatprep.mubr.bf16.mxu0 0
      %3063 = vmatmul.mubr.bf16.gmra.mrb[0].mxu0 %v2787
      %v3064 = vpop.f32.mrb[0].mxu0
      %v3065 = vadd.f32 %v2820, %v3064
      %v3066 = vpop.f32.mrb[0].mxu0
      %v3067 = vpop.f32.mrb[0].mxu0
      %v3068 = vadd.f32 %v2820, %v3067
      %v3069 = vpop.f32.mrb[0].mxu0
      %3070 = vmatprep.mubr.bf16.mxu0 0
      %3071 = vmatmul.mubr.bf16.gmra.mrb[0].mxu0 %v2788
      %v3072 = vpop.f32.mrb[0].mxu0
      %v3073 = vadd.f32 %v2820, %v3072
      %v3074 = vpop.f32.mrb[0].mxu0
      %v3075 = vpop.f32.mrb[0].mxu0
      %v3076 = vadd.f32 %v2820, %v3075
      %v3077 = vpop.f32.mrb[0].mxu0
      %3078 = vmatprep.mubr.bf16.mxu0 0
      %3079 = vmatmul.mubr.bf16.gmra.mrb[0].mxu0 %v2789
      %v3080 = vpop.f32.mrb[0].mxu0
      %v3081 = vadd.f32 %v2820, %v3080
      %v3082 = vpop.f32.mrb[0].mxu0
      %v3083 = vpop.f32.mrb[0].mxu0
      %v3084 = vadd.f32 %v2820, %v3083
      %v3085 = vpop.f32.mrb[0].mxu0
      %3086 = vmatprep.mubr.bf16.mxu0 0
      %3087 = vmatmul.mubr.bf16.gmra.mrb[0].mxu0 %v2790
      %v3088 = vpop.f32.mrb[0].mxu0
      %v3089 = vadd.f32 %v2820, %v3088
      %v3090 = vpop.f32.mrb[0].mxu0
      %v3091 = vpop.f32.mrb[0].mxu0
      %v3092 = vadd.f32 %v2820, %v3091
      %v3093 = vpop.f32.mrb[0].mxu0
      %3094 = vmatprep.mubr.bf16.mxu0 0
      %3095 = vmatmul.mubr.bf16.gmra.mrb[0].mxu0 %v2791
      %v3096 = vpop.f32.mrb[0].mxu0
      %v3097 = vadd.f32 %v2820, %v3096
      %v3098 = vpop.f32.mrb[0].mxu0
      %v3099 = vpop.f32.mrb[0].mxu0
      %v3100 = vadd.f32 %v2820, %v3099
      %v3101 = vpop.f32.mrb[0].mxu0
      %3102 = vmatprep.mubr.bf16.mxu0 0
      %3103 = vmatmul.mubr.bf16.gmra.mrb[0].mxu0 %v2792
      %v3104 = vpop.f32.mrb[0].mxu0
      %v3105 = vadd.f32 %v2820, %v3104
      %v3106 = vpop.f32.mrb[0].mxu0
      %v3107 = vpop.f32.mrb[0].mxu0
      %v3108 = vadd.f32 %v2820, %v3107
      %v3109 = vpop.f32.mrb[0].mxu0
      %3110 = vmatprep.mubr.bf16.mxu0 0
      %3111 = vmatmul.mubr.bf16.gmra.mrb[0].mxu0 %v2793
      %v3112 = vpop.f32.mrb[0].mxu0
      %v3113 = vadd.f32 %v2820, %v3112
      %v3114 = vpop.f32.mrb[0].mxu0
      %v3115 = vpop.f32.mrb[0].mxu0
      %v3116 = vadd.f32 %v2820, %v3115
      %v3117 = vpop.f32.mrb[0].mxu0
      %3118 = vmatprep.mubr.bf16.mxu0 0
      %3119 = vmatmul.mubr.bf16.gmra.mrb[0].mxu0 %v2794
      %v3120 = vpop.f32.mrb[0].mxu0
      %v3121 = vadd.f32 %v2820, %v3120
      %v3122 = vpop.f32.mrb[0].mxu0
      %v3123 = vpop.f32.mrb[0].mxu0
      %v3124 = vadd.f32 %v2820, %v3123
      %v3125 = vpop.f32.mrb[0].mxu0
      %3126 = vmatprep.mubr.bf16.mxu0 0
      %3127 = vmatmul.mubr.bf16.gmra.mrb[0].mxu0 %v2795
      %v3128 = vpop.f32.mrb[0].mxu0
      %v3129 = vadd.f32 %v2820, %v3128
      %v3130 = vpop.f32.mrb[0].mxu0
      %v3131 = vpop.f32.mrb[0].mxu0
      %v3132 = vadd.f32 %v2820, %v3131
      %v3133 = vpop.f32.mrb[0].mxu0
      %3134 = vmatprep.mubr.bf16.mxu0 0
      %3135 = vmatmul.mubr.bf16.gmra.mrb[0].mxu0 %v2796
      %v3136 = vpop.f32.mrb[0].mxu0
      %v3137 = vadd.f32 %v2820, %v3136
      %v3138 = vpop.f32.mrb[0].mxu0
      %v3139 = vpop.f32.mrb[0].mxu0
      %v3140 = vadd.f32 %v2820, %v3139
      %v3141 = vpop.f32.mrb[0].mxu0
      %3142 = vmatprep.mubr.bf16.mxu0 0
      %3143 = vmatmul.mubr.bf16.gmra.mrb[0].mxu0 %v2797
      %v3144 = vpop.f32.mrb[0].mxu0
      %v3145 = vadd.f32 %v2820, %v3144
      %v3146 = vpop.f32.mrb[0].mxu0
      %v3147 = vpop.f32.mrb[0].mxu0
      %v3148 = vadd.f32 %v2820, %v3147
      %v3149 = vpop.f32.mrb[0].mxu0
      %3150 = vmatprep.mubr.bf16.mxu0 0
      %3151 = vmatmul.mubr.bf16.gmra.mrb[0].mxu0 %v2798
      %v3152 = vpop.f32.mrb[0].mxu0
      %v3153 = vadd.f32 %v2820, %v3152
      %v3154 = vpop.f32.mrb[0].mxu0
      %v3155 = vpop.f32.mrb[0].mxu0
      %v3156 = vadd.f32 %v2820, %v3155
      %v3157 = vpop.f32.mrb[0].mxu0
      %3158 = vdwg.mxu0
      %3159 = vst [vmem:[%s280] sm:$0xff] %v2905
      %3160 = vst [vmem:[%s280 + $0x8] sm:$0xff] %v2908
      %3161 = vst [vmem:[%s280 + $0x10] sm:$0xff] %v2913
      %3162 = vst [vmem:[%s280 + $0x18] sm:$0xff] %v2916
      %3163 = vst [vmem:[%s280 + $0x20] sm:$0xff] %v2921
      %3164 = vst [vmem:[%s280 + $0x28] sm:$0xff] %v2924
      %3165 = vst [vmem:[%s280 + $0x30] sm:$0xff] %v2929
      %3166 = vst [vmem:[%s280 + $0x38] sm:$0xff] %v2932
      %3167 = vst [vmem:[%s280 + $0x40] sm:$0xff] %v2937
      %3168 = vst [vmem:[%s280 + $0x48] sm:$0xff] %v2940
      %3169 = vst [vmem:[%s280 + $0x50] sm:$0xff] %v2945
      %3170 = vst [vmem:[%s280 + $0x58] sm:$0xff] %v2948
      %3171 = vst [vmem:[%s280 + $0x60] sm:$0xff] %v2953
      %3172 = vst [vmem:[%s280 + $0x68] sm:$0xff] %v2956
      %3173 = vst [vmem:[%s280 + $0x70] sm:$0xff] %v2961
      %3174 = vst [vmem:[%s280 + $0x78] sm:$0xff] %v2964
      %3175 = vst [vmem:[%s280 + $0x80] sm:$0xff] %v2969
      %3176 = vst [vmem:[%s280 + $0x88] sm:$0xff] %v2972
      %3177 = vst [vmem:[%s280 + $0x90] sm:$0xff] %v2977
      %3178 = vst [vmem:[%s280 + $0x98] sm:$0xff] %v2980
      %3179 = vst [vmem:[%s280 + $0xa0] sm:$0xff] %v2985
      %3180 = vst [vmem:[%s280 + $0xa8] sm:$0xff] %v2988
      %3181 = vst [vmem:[%s280 + $0xb0] sm:$0xff] %v2993
      %3182 = vst [vmem:[%s280 + $0xb8] sm:$0xff] %v2996
      %3183 = vst [vmem:[%s280 + $0xc0] sm:$0xff] %v3001
      %3184 = vst [vmem:[%s280 + $0xc8] sm:$0xff] %v3004
      %3185 = vst [vmem:[%s280 + $0xd0] sm:$0xff] %v3009
      %3186 = vst [vmem:[%s280 + $0xd8] sm:$0xff] %v3012
      %3187 = vst [vmem:[%s280 + $0xe0] sm:$0xff] %v3017
      %3188 = vst [vmem:[%s280 + $0xe8] sm:$0xff] %v3020
      %3189 = vst [vmem:[%s280 + $0xf0] sm:$0xff] %v3025
      %3190 = vst [vmem:[%s280 + $0xf8] sm:$0xff] %v3028
      %3191 = vst [vmem:[%s280 + $0x100] sm:$0xff] %v3033
      %3192 = vst [vmem:[%s280 + $0x108] sm:$0xff] %v3036
      %3193 = vst [vmem:[%s280 + $0x110] sm:$0xff] %v3041
      %3194 = vst [vmem:[%s280 + $0x118] sm:$0xff] %v3044
      %3195 = vst [vmem:[%s280 + $0x120] sm:$0xff] %v3049
      %3196 = vst [vmem:[%s280 + $0x128] sm:$0xff] %v3052
      %3197 = vst [vmem:[%s280 + $0x130] sm:$0xff] %v3057
      %3198 = vst [vmem:[%s280 + $0x138] sm:$0xff] %v3060
      %3199 = vst [vmem:[%s280 + $0x140] sm:$0xff] %v3065
      %3200 = vst [vmem:[%s280 + $0x148] sm:$0xff] %v3068
      %3201 = vst [vmem:[%s280 + $0x150] sm:$0xff] %v3073
      %3202 = vst [vmem:[%s280 + $0x158] sm:$0xff] %v3076
      %3203 = vst [vmem:[%s280 + $0x160] sm:$0xff] %v3081
      %3204 = vst [vmem:[%s280 + $0x168] sm:$0xff] %v3084
      %3205 = vst [vmem:[%s280 + $0x170] sm:$0xff] %v3089
      %3206 = vst [vmem:[%s280 + $0x178] sm:$0xff] %v3092
      %3207 = vst [vmem:[%s280 + $0x180] sm:$0xff] %v3097
      %3208 = vst [vmem:[%s280 + $0x188] sm:$0xff] %v3100
      %3209 = vst [vmem:[%s280 + $0x190] sm:$0xff] %v3105
      %3210 = vst [vmem:[%s280 + $0x198] sm:$0xff] %v3108
      %3211 = vst [vmem:[%s280 + $0x1a0] sm:$0xff] %v3113
      %3212 = vst [vmem:[%s280 + $0x1a8] sm:$0xff] %v3116
      %3213 = vst [vmem:[%s280 + $0x1b0] sm:$0xff] %v3121
      %3214 = vst [vmem:[%s280 + $0x1b8] sm:$0xff] %v3124
      %3215 = vst [vmem:[%s280 + $0x1c0] sm:$0xff] %v3129
      %3216 = vst [vmem:[%s280 + $0x1c8] sm:$0xff] %v3132
      %3217 = vst [vmem:[%s280 + $0x1d0] sm:$0xff] %v3137
      %3218 = vst [vmem:[%s280 + $0x1d8] sm:$0xff] %v3140
      %3219 = vst [vmem:[%s280 + $0x1e0] sm:$0xff] %v3145
      %3220 = vst [vmem:[%s280 + $0x1e8] sm:$0xff] %v3148
      %3221 = vst [vmem:[%s280 + $0x1f0] sm:$0xff] %v3153
      %3222 = vst [vmem:[%s280 + $0x1f8] sm:$0xff] %v3156
      %s3223 = smul.u32 64, %s18
      %p3224 = scmp.lt.s32.totalorder %s3223, 127
      %s3225 = scalar_select %p3224, %s3223, 127
      %s3226 = smul.addr %s3225, 8
      %s3227 = scalar_lea.vmem %s7, %s3226
      // Predicated region
      $region49: #{gwave_pinn_forward.1} parent=47 // pred_check
        %p3228 = pneg %p188
      $region50: #{gwave_pinn_forward.1} parent=47 // pred_check_branch
        %3230 = sbr.rel (%p3228) target = $region52
      $region51: #{gwave_pinn_forward.1} parent=47 // pred_region
        %s3231 = smul.u32 64, %s18
      $region52: #{gwave_pinn_forward.1} parent=47 // pred_fallthru
        _
    $region48: #{gwave_pinn_forward.1} parent=5 // pred_fallthru
      _
    %p3232 = scmp.le.s32.totalorder 2, %s13
    // Predicated region
    $region53: #{gwave_pinn_forward.1} parent=5 // pred_check
      %p3233 = pneg %p3232
    $region54: #{gwave_pinn_forward.1} parent=5 // pred_check_branch
      %3235 = sbr.rel (%p3233) target = $region56
    $region55: #{gwave_pinn_forward.1} parent=5 // pred_region
      %s3236 = ssub.s32 %s13, 2
      // Predicated region
      $region57: #{gwave_pinn_forward.1} parent=55 // pred_check
        %p3237 = pneg %p194
      $region58: #{gwave_pinn_forward.1} parent=55 // pred_check_branch
        %3239 = sbr.rel (%p3237) target = $region60
      $region59: #{gwave_pinn_forward.1} parent=55 // pred_region
        %s3240 = smul.u32 64, %s19
        %p3241 = scmp.lt.s32.totalorder %s3240, 127
        %s3242 = scalar_select %p3241, %s3240, 127
        %s3243 = smul.addr %s3242, 8
        %s3244 = scalar_lea.vmem %s7, %s3243
      $region60: #{gwave_pinn_forward.1} parent=55 // pred_fallthru
        _
    $region56: #{gwave_pinn_forward.1} parent=5 // pred_fallthru
      _
  $region6: #{gwave_pinn_forward.1} parent=0 // loop_footer
    %s17 = sadd.s32 1, %s13
  $region7: #{gwave_pinn_forward.1} parent=0 // loop_footer_branch
    %12 = sbr.rel target = $region3
  $region8: #{gwave_pinn_forward.1} parent=0 // loop_exit
    _

</llo_original>
